<compile_context>
chip_gen: v7x
topology: tpu7x:2x2x1
jax: 0.10.0
libtpu: 0.0.40
codegen_flags: <defaults>
</compile_context>

<pallas_src>
import jax
import jax.numpy as jnp
from jax import lax
from jax.experimental import pallas as pl
from jax.experimental.pallas import tpu as pltpu


def _embedding_kernel(word_ref, cid_ref,
                      wfold_ref, ctab_ref, bconv_ref, wprojb_ref,
                      wh0_ref, bh0_ref, wh1_ref, bh1_ref,
                      out_ref):
    Dw, T = word_ref.shape              # feature-major word embeddings (Dw, tile)
    CT = cid_ref.shape[-1]              # C * tile (char-major flattening)
    C = CT // T
    KH, Vp = ctab_ref.shape
    H = wfold_ref.shape[0]
    K = KH // H
    Wout = C - (K - 1)
    f32, bf16 = jnp.float32, jnp.bfloat16

    # ---- fused char gather + CharacterConv (all slices tile-aligned) -------
    # one-hot built directly in 2D; column index = c*T + t (char-major) so the
    # conv taps and the window max below are whole-lane-tile selects.
    ids_row = cid_ref[0]                                           # (1, C*T) int32
    vocab_pos = lax.broadcasted_iota(jnp.int32, (Vp, CT), 0)
    onehot = (vocab_pos == ids_row).astype(bf16)                   # (Vp, C*T)
    # gather + Conv2d(64->H,(1,5)) contraction in one MXU matmul (feature-major)
    y = jnp.dot(ctab_ref[...], onehot, preferred_element_type=f32)  # (K*H, C*T)
    # NOTE: y could be cast to bf16 losslessly (exact row-select of a bf16
    # table) to halve this temporary if larger tiles are ever needed.

    # tap accumulate: sublane offsets k*H (mult of 8), lane offsets k*T (mult of 128)
    acc = y[0:H, 0:Wout * T]                                       # init from tap 0
    for k in range(1, K):
        acc = acc + y[k * H:(k + 1) * H, k * T:(k + Wout) * T]

    # window max over aligned (H, T) slabs; bias + ReLU deferred past the max
    # (bias is window-invariant, ReLU is monotone -> identical result)
    cmax = acc[:, 0:T]
    for w in range(1, Wout):
        cmax = jnp.maximum(cmax, acc[:, w * T:(w + 1) * T])
    c_act = jnp.maximum(cmax + bconv_ref[...], 0.0)                # (H, T) f32

    # ---- projection: word path folded (w_word @ w_proj_a) + char path ------
    x = (jnp.dot(wfold_ref[...], word_ref[...], preferred_element_type=f32)
         + jnp.dot(wprojb_ref[...], c_act.astype(bf16),
                   preferred_element_type=f32))                    # (H, T) f32

    # ---- 2-layer HighwayEncoder, transform|gate packed along sublanes ------
    for wh, bh in ((wh0_ref, bh0_ref), (wh1_ref, bh1_ref)):
        tg = jnp.dot(wh[...], x.astype(bf16),
                     preferred_element_type=f32) + bh[...]         # (2H, T)
        tr = jnp.maximum(tg[0:H, :], 0.0)
        g = jax.nn.sigmoid(tg[H:, :])
        x = g * tr + (1.0 - g) * x

    out_ref[...] = x.astype(out_ref.dtype)                         # lane-dense store


def embedding_forward(x1, x2, p, *, block_tokens=512):
    """x1: (B, S) word ids, x2: (B, S, C) char ids  ->  (B, S, H) float32.

    block_tokens=512 fits v7x's 64 MiB VMEM comfortably; v5e/v6e (128 MiB) can
    use 1024 for fewer grid steps.
    """
    B, S = x1.shape
    C = x2.shape[-1]
    Dw = p['word_vectors'].shape[1]
    vocab_c = p['char_vectors'].shape[0]
    K, _, H = p['w_conv'].shape
    N = B * S
    bf16, f32 = jnp.bfloat16, jnp.float32

    def rup(a, m):
        return (a + m - 1) // m * m

    # ---- token tile lives in the LANE axis -> multiple of 128 --------------
    tile = min(rup(block_tokens, 128), rup(N, 128))
    Npad = rup(N, tile)
    ntiles = Npad // tile   # keep >= 2 at real scale so both v7x TCs get work

    # ---- glue (XLA): word-table gather + one transpose to feature-major ----
    word_e = p['word_vectors'][x1.reshape(N)]                      # (N, Dw) f32
    word_eT = jnp.pad(word_e, ((0, Npad - N), (0, 0))).T.astype(bf16)  # (Dw, Npad)

    # char ids -> per-tile char-major rows: flat index = c*tile + t
    cids = jnp.pad(x2.reshape(N, C).astype(jnp.int32), ((0, Npad - N), (0, 0)))
    cids3 = (cids.reshape(ntiles, tile, C)
                 .transpose(0, 2, 1)
                 .reshape(ntiles, 1, C * tile))                    # (ntiles, 1, C*tile)

    # ---- fold the char table into the conv weights, feature-major ----------
    # ctabT[k*H + h, v] = sum_d char_vectors[v, d] * w_conv[k, d, h]
    Vp = rup(vocab_c, 128)
    ctabT = jnp.concatenate(
        [(p['char_vectors'] @ p['w_conv'][k]).T for k in range(K)], axis=0)
    ctabT = jnp.pad(ctabT, ((0, 0), (0, Vp - vocab_c))).astype(bf16)   # (K*H, Vp)

    # ---- fold w_word into the word half of the split projection (f32 math) -
    wfoldT = (p['w_word'] @ p['w_proj_a']).T.astype(bf16)          # (H, Dw)
    wprojbT = p['w_proj_b'].T.astype(bf16)                         # (H, H)
    b_conv = p['b_conv'].T.astype(f32)                             # (H, 1)
    wh0 = jnp.concatenate([p['wt0'].T, p['wg0'].T], axis=0).astype(bf16)  # (2H, H)
    bh0 = jnp.concatenate([p['bt0'], p['bg0']], axis=1).T.astype(f32)     # (2H, 1)
    wh1 = jnp.concatenate([p['wt1'].T, p['wg1'].T], axis=0).astype(bf16)
    bh1 = jnp.concatenate([p['bt1'], p['bg1']], axis=1).T.astype(f32)

    def full_spec(shape):
        nd = len(shape)
        return pl.BlockSpec(shape, lambda i, _n=nd: (0,) * _n)

    out = pl.pallas_call(
        _embedding_kernel,
        out_shape=jax.ShapeDtypeStruct((H, Npad), f32),
        grid_spec=pltpu.PrefetchScalarGridSpec(
            num_scalar_prefetch=0,
            grid=(ntiles,),
            in_specs=[
                pl.BlockSpec((Dw, tile), lambda i: (0, i)),        # word_eT (bf16)
                pl.BlockSpec((1, 1, C * tile), lambda i: (i, 0, 0)),  # char ids rows
                full_spec((H, Dw)),                                # folded word proj
                full_spec((K * H, Vp)),                            # fused char/conv tab
                full_spec((H, 1)),                                 # conv bias
                full_spec((H, H)),                                 # char half of proj
                full_spec((2 * H, H)), full_spec((2 * H, 1)),      # highway 0 (t|g)
                full_spec((2 * H, H)), full_spec((2 * H, 1)),      # highway 1 (t|g)
            ],
            out_specs=pl.BlockSpec((H, tile), lambda i: (0, i)),   # lane-dense out
        ),
        compiler_params=pltpu.CompilerParams(
            dimension_semantics=("parallel",),
            vmem_limit_bytes=48 * 1024 * 1024,   # headroom, still < v7x's 64 MiB
        ),
    )(word_eT, cids3, wfoldT, ctabT, b_conv, wprojbT, wh0, bh0, wh1, bh1)

    return out[:, :N].T.reshape(B, S, H)


def reference_forward(x1, x2, p):
    """Pure-JAX f32 reference (same math as the PyTorch module, eval mode)."""
    K = p['w_conv'].shape[0]
    C = x2.shape[-1]
    Wout = C - (K - 1)
    word_e = p['word_vectors'][x1]                       # (B,S,Dw)
    w_proj = word_e @ p['w_word']                        # (B,S,H)
    char_e = p['char_vectors'][x2]                       # (B,S,C,Ce)
    conv = jnp.zeros(char_e.shape[:2] + (Wout, p['w_word'].shape[1]), jnp.float32)
    for k in range(K):
        conv = conv + jnp.einsum('bscd,dh->bsch',
                                 char_e[:, :, k:k + Wout, :], p['w_conv'][k])
    conv = jnp.maximum(conv + p['b_conv'][0], 0.0)
    c_max = conv.max(axis=2)                             # (B,S,H)
    x = w_proj @ p['w_proj_a'] + c_max @ p['w_proj_b']
    for wt, bt, wg, bg in (('wt0', 'bt0', 'wg0', 'bg0'),
                           ('wt1', 'bt1', 'wg1', 'bg1')):
        g = jax.nn.sigmoid(x @ p[wg] + p[bg][0])
        t = jnp.maximum(x @ p[wt] + p[bt][0], 0.0)
        x = g * t + (1.0 - g) * x
    return x


if __name__ == "__main__":
    key = jax.random.PRNGKey(0)
    B, S, C = 2, 8, 16            # batch, seq, chars per token
    vocab_w, Dw = 100, 32         # word vocab / word-emb dim
    vocab_c, Ce = 50, 64          # char vocab / char-emb dim (conv in_channels=64)
    H = 32                        # hidden_size
    K = 5                         # conv kernel width

    ks = jax.random.split(key, 18)
    f32 = jnp.float32
    params = {
        'word_vectors': jax.random.normal(ks[0], (vocab_w, Dw), f32),
        'char_vectors': jax.random.normal(ks[1], (vocab_c, Ce), f32),
        'w_word':  jax.random.normal(ks[2], (Dw, H), f32) / jnp.sqrt(Dw),
        'w_conv':  jax.random.normal(ks[3], (K, Ce, H), f32) * jnp.sqrt(2.0 / (Ce * K)),
        'b_conv':  jax.random.normal(ks[4], (1, H), f32) * 0.01,
        'w_proj_a': jax.random.normal(ks[5], (H, H), f32) / jnp.sqrt(2 * H),
        'w_proj_b': jax.random.normal(ks[6], (H, H), f32) / jnp.sqrt(2 * H),
        'wt0': jax.random.normal(ks[7], (H, H), f32) * jnp.sqrt(2.0 / H),
        'bt0': jax.random.normal(ks[8], (1, H), f32) * 0.01,
        'wg0': jax.random.normal(ks[9], (H, H), f32) / jnp.sqrt(H),
        'bg0': jax.random.normal(ks[10], (1, H), f32) * 0.01,
        'wt1': jax.random.normal(ks[11], (H, H), f32) * jnp.sqrt(2.0 / H),
        'bt1': jax.random.normal(ks[12], (1, H), f32) * 0.01,
        'wg1': jax.random.normal(ks[13], (H, H), f32) / jnp.sqrt(H),
        'bg1': jax.random.normal(ks[14], (1, H), f32) * 0.01,
    }

    x1 = jax.random.randint(ks[15], (B, S), 0, vocab_w, dtype=jnp.int32)
    x2 = jax.random.randint(ks[16], (B, S, C), 0, vocab_c, dtype=jnp.int32)

    out = embedding_forward(x1, x2, params)
    out = jax.block_until_ready(out)

    ref = reference_forward(x1, x2, params)
    assert out.shape == (B, S, H), out.shape
    # bf16 matmul operands (f32 accumulation) vs. pure-f32 reference -> loose tol.
    assert jnp.allclose(out, ref, atol=1e-1, rtol=1e-1), "mismatch vs reference"
    print("KERNEL_OK")
</pallas_src>

<mosaic_0001>
module attributes {stable_mosaic.version = 11 : i64} {
  func.func @_embedding_kernel(%arg0: i32, %arg1: memref<32x128xbf16, #tpu.memory_space<vmem>>, %arg2: memref<1x1x2048xi32, #tpu.memory_space<vmem>>, %arg3: memref<32x32xbf16, #tpu.memory_space<vmem>>, %arg4: memref<160x128xbf16, #tpu.memory_space<vmem>>, %arg5: memref<32x1xf32, #tpu.memory_space<vmem>>, %arg6: memref<32x32xbf16, #tpu.memory_space<vmem>>, %arg7: memref<64x32xbf16, #tpu.memory_space<vmem>>, %arg8: memref<64x1xf32, #tpu.memory_space<vmem>>, %arg9: memref<64x32xbf16, #tpu.memory_space<vmem>>, %arg10: memref<64x1xf32, #tpu.memory_space<vmem>>, %arg11: memref<32x128xf32, #tpu.memory_space<vmem>>) attributes {dimension_semantics = [#tpu.dimension_semantics<parallel>], iteration_bounds = array<i64: 1>, scalar_prefetch = 0 : i64, scratch_operands = 0 : i64, tpu.core_type = #tpu.core_type<tc>, window_params = [{transform_indices = @transform_0, window_bounds = array<i64: 32, 128>}, {transform_indices = @transform_1, window_bounds = array<i64: 1, 1, 2048>}, {pipeline_mode = #tpu.pipeline_mode<synchronous>, transform_indices = @transform_2, window_bounds = array<i64: 32, 32>}, {pipeline_mode = #tpu.pipeline_mode<synchronous>, transform_indices = @transform_3, window_bounds = array<i64: 160, 128>}, {pipeline_mode = #tpu.pipeline_mode<synchronous>, transform_indices = @transform_4, window_bounds = array<i64: 32, 1>}, {pipeline_mode = #tpu.pipeline_mode<synchronous>, transform_indices = @transform_5, window_bounds = array<i64: 32, 32>}, {pipeline_mode = #tpu.pipeline_mode<synchronous>, transform_indices = @transform_6, window_bounds = array<i64: 64, 32>}, {pipeline_mode = #tpu.pipeline_mode<synchronous>, transform_indices = @transform_7, window_bounds = array<i64: 64, 1>}, {pipeline_mode = #tpu.pipeline_mode<synchronous>, transform_indices = @transform_8, window_bounds = array<i64: 64, 32>}, {pipeline_mode = #tpu.pipeline_mode<synchronous>, transform_indices = @transform_9, window_bounds = array<i64: 64, 1>}, {transform_indices = @transform_10, window_bounds = array<i64: 32, 128>}]} {
    %c0 = arith.constant 0 : index
    %c0_0 = arith.constant 0 : index
    %c0_1 = arith.constant 0 : index
    %0 = vector.load %arg2[%c0, %c0_0, %c0_1] : memref<1x1x2048xi32, #tpu.memory_space<vmem>>, vector<1x1x2048xi32>
    %1 = vector.shape_cast %0 : vector<1x1x2048xi32> to vector<1x2048xi32>
    %2 = tpu.iota {dimensions = array<i32: 0>} : vector<128x2048xi32>
    %3 = vector.broadcast %1 : vector<1x2048xi32> to vector<128x2048xi32>
    %4 = arith.cmpi eq, %2, %3 : vector<128x2048xi32>
    %5 = arith.extui %4 : vector<128x2048xi1> to vector<128x2048xi32>
    %6 = arith.sitofp %5 : vector<128x2048xi32> to vector<128x2048xf32>
    %7 = arith.truncf %6 : vector<128x2048xf32> to vector<128x2048xbf16>
    %c0_2 = arith.constant 0 : index
    %c0_3 = arith.constant 0 : index
    %8 = vector.load %arg4[%c0_2, %c0_3] : memref<160x128xbf16, #tpu.memory_space<vmem>>, vector<160x128xbf16>
    %cst = arith.constant dense<0.000000e+00> : vector<160x2048xf32>
    %9 = tpu.matmul %8, %7, %cst {dimension_numbers = #tpu.dot_dimension_numbers<[1], [0], [0], [1], [0, 0, 1, 1], [], []>} : vector<160x128xbf16>, vector<128x2048xbf16>, vector<160x2048xf32> -> vector<160x2048xf32>
    %10 = vector.extract_strided_slice %9 {offsets = [0, 0], sizes = [32, 1536], strides = [1, 1]} : vector<160x2048xf32> to vector<32x1536xf32>
    %11 = vector.extract_strided_slice %9 {offsets = [32, 128], sizes = [32, 1536], strides = [1, 1]} : vector<160x2048xf32> to vector<32x1536xf32>
    %12 = arith.addf %10, %11 : vector<32x1536xf32>
    %13 = vector.extract_strided_slice %9 {offsets = [64, 256], sizes = [32, 1536], strides = [1, 1]} : vector<160x2048xf32> to vector<32x1536xf32>
    %14 = arith.addf %12, %13 : vector<32x1536xf32>
    %15 = vector.extract_strided_slice %9 {offsets = [96, 384], sizes = [32, 1536], strides = [1, 1]} : vector<160x2048xf32> to vector<32x1536xf32>
    %16 = arith.addf %14, %15 : vector<32x1536xf32>
    %17 = vector.extract_strided_slice %9 {offsets = [128, 512], sizes = [32, 1536], strides = [1, 1]} : vector<160x2048xf32> to vector<32x1536xf32>
    %18 = arith.addf %16, %17 : vector<32x1536xf32>
    %19 = vector.extract_strided_slice %18 {offsets = [0, 0], sizes = [32, 128], strides = [1, 1]} : vector<32x1536xf32> to vector<32x128xf32>
    %20 = vector.extract_strided_slice %18 {offsets = [0, 128], sizes = [32, 128], strides = [1, 1]} : vector<32x1536xf32> to vector<32x128xf32>
    %21 = arith.maximumf %19, %20 : vector<32x128xf32>
    %22 = vector.extract_strided_slice %18 {offsets = [0, 256], sizes = [32, 128], strides = [1, 1]} : vector<32x1536xf32> to vector<32x128xf32>
    %23 = arith.maximumf %21, %22 : vector<32x128xf32>
    %24 = vector.extract_strided_slice %18 {offsets = [0, 384], sizes = [32, 128], strides = [1, 1]} : vector<32x1536xf32> to vector<32x128xf32>
    %25 = arith.maximumf %23, %24 : vector<32x128xf32>
    %26 = vector.extract_strided_slice %18 {offsets = [0, 512], sizes = [32, 128], strides = [1, 1]} : vector<32x1536xf32> to vector<32x128xf32>
    %27 = arith.maximumf %25, %26 : vector<32x128xf32>
    %28 = vector.extract_strided_slice %18 {offsets = [0, 640], sizes = [32, 128], strides = [1, 1]} : vector<32x1536xf32> to vector<32x128xf32>
    %29 = arith.maximumf %27, %28 : vector<32x128xf32>
    %30 = vector.extract_strided_slice %18 {offsets = [0, 768], sizes = [32, 128], strides = [1, 1]} : vector<32x1536xf32> to vector<32x128xf32>
    %31 = arith.maximumf %29, %30 : vector<32x128xf32>
    %32 = vector.extract_strided_slice %18 {offsets = [0, 896], sizes = [32, 128], strides = [1, 1]} : vector<32x1536xf32> to vector<32x128xf32>
    %33 = arith.maximumf %31, %32 : vector<32x128xf32>
    %34 = vector.extract_strided_slice %18 {offsets = [0, 1024], sizes = [32, 128], strides = [1, 1]} : vector<32x1536xf32> to vector<32x128xf32>
    %35 = arith.maximumf %33, %34 : vector<32x128xf32>
    %36 = vector.extract_strided_slice %18 {offsets = [0, 1152], sizes = [32, 128], strides = [1, 1]} : vector<32x1536xf32> to vector<32x128xf32>
    %37 = arith.maximumf %35, %36 : vector<32x128xf32>
    %38 = vector.extract_strided_slice %18 {offsets = [0, 1280], sizes = [32, 128], strides = [1, 1]} : vector<32x1536xf32> to vector<32x128xf32>
    %39 = arith.maximumf %37, %38 : vector<32x128xf32>
    %40 = vector.extract_strided_slice %18 {offsets = [0, 1408], sizes = [32, 128], strides = [1, 1]} : vector<32x1536xf32> to vector<32x128xf32>
    %41 = arith.maximumf %39, %40 : vector<32x128xf32>
    %c0_4 = arith.constant 0 : index
    %c0_5 = arith.constant 0 : index
    %42 = vector.load %arg5[%c0_4, %c0_5] : memref<32x1xf32, #tpu.memory_space<vmem>>, vector<32x1xf32>
    %43 = vector.broadcast %42 : vector<32x1xf32> to vector<32x128xf32>
    %44 = arith.addf %41, %43 : vector<32x128xf32>
    %cst_6 = arith.constant 0.000000e+00 : f32
    %45 = vector.broadcast %cst_6 : f32 to vector<32x128xf32>
    %46 = arith.maximumf %44, %45 : vector<32x128xf32>
    %c0_7 = arith.constant 0 : index
    %c0_8 = arith.constant 0 : index
    %47 = vector.load %arg3[%c0_7, %c0_8] : memref<32x32xbf16, #tpu.memory_space<vmem>>, vector<32x32xbf16>
    %c0_9 = arith.constant 0 : index
    %c0_10 = arith.constant 0 : index
    %48 = vector.load %arg1[%c0_9, %c0_10] : memref<32x128xbf16, #tpu.memory_space<vmem>>, vector<32x128xbf16>
    %cst_11 = arith.constant dense<0.000000e+00> : vector<32x128xf32>
    %49 = tpu.matmul %47, %48, %cst_11 {dimension_numbers = #tpu.dot_dimension_numbers<[1], [0], [0], [1], [0, 0, 1, 1], [], []>} : vector<32x32xbf16>, vector<32x128xbf16>, vector<32x128xf32> -> vector<32x128xf32>
    %c0_12 = arith.constant 0 : index
    %c0_13 = arith.constant 0 : index
    %50 = vector.load %arg6[%c0_12, %c0_13] : memref<32x32xbf16, #tpu.memory_space<vmem>>, vector<32x32xbf16>
    %51 = arith.truncf %46 : vector<32x128xf32> to vector<32x128xbf16>
    %cst_14 = arith.constant dense<0.000000e+00> : vector<32x128xf32>
    %52 = tpu.matmul %50, %51, %cst_14 {dimension_numbers = #tpu.dot_dimension_numbers<[1], [0], [0], [1], [0, 0, 1, 1], [], []>} : vector<32x32xbf16>, vector<32x128xbf16>, vector<32x128xf32> -> vector<32x128xf32>
    %53 = arith.addf %49, %52 : vector<32x128xf32>
    %c0_15 = arith.constant 0 : index
    %c0_16 = arith.constant 0 : index
    %54 = vector.load %arg7[%c0_15, %c0_16] : memref<64x32xbf16, #tpu.memory_space<vmem>>, vector<64x32xbf16>
    %55 = arith.truncf %53 : vector<32x128xf32> to vector<32x128xbf16>
    %cst_17 = arith.constant dense<0.000000e+00> : vector<64x128xf32>
    %56 = tpu.matmul %54, %55, %cst_17 {dimension_numbers = #tpu.dot_dimension_numbers<[1], [0], [0], [1], [0, 0, 1, 1], [], []>} : vector<64x32xbf16>, vector<32x128xbf16>, vector<64x128xf32> -> vector<64x128xf32>
    %c0_18 = arith.constant 0 : index
    %c0_19 = arith.constant 0 : index
    %57 = vector.load %arg8[%c0_18, %c0_19] : memref<64x1xf32, #tpu.memory_space<vmem>>, vector<64x1xf32>
    %58 = vector.broadcast %57 : vector<64x1xf32> to vector<64x128xf32>
    %59 = arith.addf %56, %58 : vector<64x128xf32>
    %60 = vector.extract_strided_slice %59 {offsets = [0, 0], sizes = [32, 128], strides = [1, 1]} : vector<64x128xf32> to vector<32x128xf32>
    %cst_20 = arith.constant 0.000000e+00 : f32
    %61 = vector.broadcast %cst_20 : f32 to vector<32x128xf32>
    %62 = arith.maximumf %60, %61 : vector<32x128xf32>
    %63 = vector.extract_strided_slice %59 {offsets = [32, 0], sizes = [32, 128], strides = [1, 1]} : vector<64x128xf32> to vector<32x128xf32>
    %64 = arith.negf %63 : vector<32x128xf32>
    %65 = math.exp %64 : vector<32x128xf32>
    %cst_21 = arith.constant 1.000000e+00 : f32
    %66 = vector.broadcast %cst_21 : f32 to vector<32x128xf32>
    %67 = arith.addf %66, %65 : vector<32x128xf32>
    %68 = arith.divf %66, %67 : vector<32x128xf32>
    %69 = arith.mulf %68, %62 : vector<32x128xf32>
    %cst_22 = arith.constant 1.000000e+00 : f32
    %70 = vector.broadcast %cst_22 : f32 to vector<32x128xf32>
    %71 = arith.subf %70, %68 : vector<32x128xf32>
    %72 = arith.mulf %71, %53 : vector<32x128xf32>
    %73 = arith.addf %69, %72 : vector<32x128xf32>
    %c0_23 = arith.constant 0 : index
    %c0_24 = arith.constant 0 : index
    %74 = vector.load %arg9[%c0_23, %c0_24] : memref<64x32xbf16, #tpu.memory_space<vmem>>, vector<64x32xbf16>
    %75 = arith.truncf %73 : vector<32x128xf32> to vector<32x128xbf16>
    %cst_25 = arith.constant dense<0.000000e+00> : vector<64x128xf32>
    %76 = tpu.matmul %74, %75, %cst_25 {dimension_numbers = #tpu.dot_dimension_numbers<[1], [0], [0], [1], [0, 0, 1, 1], [], []>} : vector<64x32xbf16>, vector<32x128xbf16>, vector<64x128xf32> -> vector<64x128xf32>
    %c0_26 = arith.constant 0 : index
    %c0_27 = arith.constant 0 : index
    %77 = vector.load %arg10[%c0_26, %c0_27] : memref<64x1xf32, #tpu.memory_space<vmem>>, vector<64x1xf32>
    %78 = vector.broadcast %77 : vector<64x1xf32> to vector<64x128xf32>
    %79 = arith.addf %76, %78 : vector<64x128xf32>
    %80 = vector.extract_strided_slice %79 {offsets = [0, 0], sizes = [32, 128], strides = [1, 1]} : vector<64x128xf32> to vector<32x128xf32>
    %cst_28 = arith.constant 0.000000e+00 : f32
    %81 = vector.broadcast %cst_28 : f32 to vector<32x128xf32>
    %82 = arith.maximumf %80, %81 : vector<32x128xf32>
    %83 = vector.extract_strided_slice %79 {offsets = [32, 0], sizes = [32, 128], strides = [1, 1]} : vector<64x128xf32> to vector<32x128xf32>
    %84 = arith.negf %83 : vector<32x128xf32>
    %85 = math.exp %84 : vector<32x128xf32>
    %cst_29 = arith.constant 1.000000e+00 : f32
    %86 = vector.broadcast %cst_29 : f32 to vector<32x128xf32>
    %87 = arith.addf %86, %85 : vector<32x128xf32>
    %88 = arith.divf %86, %87 : vector<32x128xf32>
    %89 = arith.mulf %88, %82 : vector<32x128xf32>
    %cst_30 = arith.constant 1.000000e+00 : f32
    %90 = vector.broadcast %cst_30 : f32 to vector<32x128xf32>
    %91 = arith.subf %90, %88 : vector<32x128xf32>
    %92 = arith.mulf %91, %73 : vector<32x128xf32>
    %93 = arith.addf %89, %92 : vector<32x128xf32>
    %c0_31 = arith.constant 0 : index
    %c0_32 = arith.constant 0 : index
    %94 = vector.load %arg11[%c0_31, %c0_32] : memref<32x128xf32, #tpu.memory_space<vmem>>, vector<32x128xf32>
    tpu.vector_store %arg11[%c0_31, %c0_32], %93 {strides = array<i32>} : memref<32x128xf32, #tpu.memory_space<vmem>>, vector<32x128xf32>,
    return
  }
  func.func @transform_0(%arg0: i32) -> (i32, i32) {
    %c0_i32 = arith.constant 0 : i32
    %c0_i32_0 = arith.constant 0 : i32
    return %c0_i32, %arg0 : i32, i32
  }
  func.func @transform_1(%arg0: i32) -> (i32, i32, i32) {
    %c0_i32 = arith.constant 0 : i32
    %c0_i32_0 = arith.constant 0 : i32
    %c0_i32_1 = arith.constant 0 : i32
    return %arg0, %c0_i32, %c0_i32_0 : i32, i32, i32
  }
  func.func @transform_2(%arg0: i32) -> (i32, i32) {
    %c0_i32 = arith.constant 0 : i32
    %c0_i32_0 = arith.constant 0 : i32
    %c0_i32_1 = arith.constant 0 : i32
    return %c0_i32, %c0_i32_0 : i32, i32
  }
  func.func @transform_3(%arg0: i32) -> (i32, i32) {
    %c0_i32 = arith.constant 0 : i32
    %c0_i32_0 = arith.constant 0 : i32
    %c0_i32_1 = arith.constant 0 : i32
    return %c0_i32, %c0_i32_0 : i32, i32
  }
  func.func @transform_4(%arg0: i32) -> (i32, i32) {
    %c0_i32 = arith.constant 0 : i32
    %c0_i32_0 = arith.constant 0 : i32
    %c0_i32_1 = arith.constant 0 : i32
    return %c0_i32, %c0_i32_0 : i32, i32
  }
  func.func @transform_5(%arg0: i32) -> (i32, i32) {
    %c0_i32 = arith.constant 0 : i32
    %c0_i32_0 = arith.constant 0 : i32
    %c0_i32_1 = arith.constant 0 : i32
    return %c0_i32, %c0_i32_0 : i32, i32
  }
  func.func @transform_6(%arg0: i32) -> (i32, i32) {
    %c0_i32 = arith.constant 0 : i32
    %c0_i32_0 = arith.constant 0 : i32
    %c0_i32_1 = arith.constant 0 : i32
    return %c0_i32, %c0_i32_0 : i32, i32
  }
  func.func @transform_7(%arg0: i32) -> (i32, i32) {
    %c0_i32 = arith.constant 0 : i32
    %c0_i32_0 = arith.constant 0 : i32
    %c0_i32_1 = arith.constant 0 : i32
    return %c0_i32, %c0_i32_0 : i32, i32
  }
  func.func @transform_8(%arg0: i32) -> (i32, i32) {
    %c0_i32 = arith.constant 0 : i32
    %c0_i32_0 = arith.constant 0 : i32
    %c0_i32_1 = arith.constant 0 : i32
    return %c0_i32, %c0_i32_0 : i32, i32
  }
  func.func @transform_9(%arg0: i32) -> (i32, i32) {
    %c0_i32 = arith.constant 0 : i32
    %c0_i32_0 = arith.constant 0 : i32
    %c0_i32_1 = arith.constant 0 : i32
    return %c0_i32, %c0_i32_0 : i32, i32
  }
  func.func @transform_10(%arg0: i32) -> (i32, i32) {
    %c0_i32 = arith.constant 0 : i32
    %c0_i32_0 = arith.constant 0 : i32
    return %c0_i32, %arg0 : i32, i32
  }
}

</mosaic_0001>

<llo_original>
// kernel: tpu_custom_call.1
$region0: #{tpu_custom_call.1}
  #allocation0 [shape = 'u32[]', space=smem, size = 0x4, offset = 0x4, fixed_abs, tag = 'smem constant byte address 0x4 - core index']
  #allocation1 [shape = 'u32[144,128]{1,0:T(1,128)}', space=vmem, size = 0x12000, scoped, tag = 'internal scratch']
  %s0 = inlined_call_operand.vmem [shape: bf16[32,128], index: 0, kind: input, shape index: {}]
  %s1 = inlined_call_operand.vmem [shape: s32[1,1,2048], index: 1, kind: input, shape index: {}]
  %s2 = inlined_call_operand.vmem [shape: bf16[32,32], index: 2, kind: input, shape index: {}]
  %s3 = inlined_call_operand.vmem [shape: bf16[160,128], index: 3, kind: input, shape index: {}]
  %s4 = inlined_call_operand.vmem [shape: f32[32,1], index: 4, kind: input, shape index: {}]
  %s5 = inlined_call_operand.vmem [shape: bf16[32,32], index: 5, kind: input, shape index: {}]
  %s6 = inlined_call_operand.vmem [shape: bf16[64,32], index: 6, kind: input, shape index: {}]
  %s7 = inlined_call_operand.vmem [shape: f32[64,1], index: 7, kind: input, shape index: {}]
  %s8 = inlined_call_operand.vmem [shape: bf16[64,32], index: 8, kind: input, shape index: {}]
  %s9 = inlined_call_operand.vmem [shape: f32[64,1], index: 9, kind: input, shape index: {}]
  %s10 = inlined_call_operand.hbm [shape: f32[32,128], index: 10, kind: output, shape index: {}]
  %s11 = sld [smem:[#allocation0]]
  $region50: #{tpu_custom_call.1} parent=0
    _
  %s13 = ssub.s32 1, %s11
  %s14 = scalar_select 0, %s13, %s11
  $region1: #{tpu_custom_call.1} parent=0
    #allocation2 [shape = 'u8[16384]{0}', space=vmem, size = 0x4000, scoped, tag = 'output window, operand 0, single buffered']
    #allocation3 [shape = 's32[1]{0}', space=sflag, size = 0x4, scoped, tag = 'scoped memory for tpu_custom_call.1']
    %15 = vsyncpa [#allocation3], 0
    // Predicated region
    $region2: #{tpu_custom_call.1} parent=1 // pred_check
      _
    $region3: #{tpu_custom_call.1} parent=1 // pred_check_branch
      %17 = sbr.rel (0) target = $region5
    $region4: #{tpu_custom_call.1} parent=1 // pred_region
      _
    $region5: #{tpu_custom_call.1} parent=1 // pred_fallthru
      _
    // Predicated region
    $region6: #{tpu_custom_call.1} parent=1 // pred_check
      _
    $region7: #{tpu_custom_call.1} parent=1 // pred_check_branch
      %19 = sbr.rel (0) target = $region9
    $region8: #{tpu_custom_call.1} parent=1 // pred_region
      _
    $region9: #{tpu_custom_call.1} parent=1 // pred_fallthru
      _
    // Predicated region
    $region10: #{tpu_custom_call.1} parent=1 // pred_check
      _
    $region11: #{tpu_custom_call.1} parent=1 // pred_check_branch
      %21 = sbr.rel (0) target = $region13
    $region12: #{tpu_custom_call.1} parent=1 // pred_region
      _
    $region13: #{tpu_custom_call.1} parent=1 // pred_fallthru
      _
    // Predicated region
    $region14: #{tpu_custom_call.1} parent=1 // pred_check
      _
    $region15: #{tpu_custom_call.1} parent=1 // pred_check_branch
      %23 = sbr.rel (0) target = $region17
    $region16: #{tpu_custom_call.1} parent=1 // pred_region
      _
    $region17: #{tpu_custom_call.1} parent=1 // pred_fallthru
      _
    // Predicated region
    $region18: #{tpu_custom_call.1} parent=1 // pred_check
      _
    $region19: #{tpu_custom_call.1} parent=1 // pred_check_branch
      %25 = sbr.rel (0) target = $region21
    $region20: #{tpu_custom_call.1} parent=1 // pred_region
      _
    $region21: #{tpu_custom_call.1} parent=1 // pred_fallthru
      _
    // Predicated region
    $region22: #{tpu_custom_call.1} parent=1 // pred_check
      _
    $region23: #{tpu_custom_call.1} parent=1 // pred_check_branch
      %27 = sbr.rel (0) target = $region25
    $region24: #{tpu_custom_call.1} parent=1 // pred_region
      _
    $region25: #{tpu_custom_call.1} parent=1 // pred_fallthru
      _
    // Predicated region
    $region26: #{tpu_custom_call.1} parent=1 // pred_check
      _
    $region27: #{tpu_custom_call.1} parent=1 // pred_check_branch
      %29 = sbr.rel (0) target = $region29
    $region28: #{tpu_custom_call.1} parent=1 // pred_region
      _
    $region29: #{tpu_custom_call.1} parent=1 // pred_fallthru
      _
    // Predicated region
    $region30: #{tpu_custom_call.1} parent=1 // pred_check
      _
    $region31: #{tpu_custom_call.1} parent=1 // pred_check_branch
      %31 = sbr.rel (0) target = $region33
    $region32: #{tpu_custom_call.1} parent=1 // pred_region
      _
    $region33: #{tpu_custom_call.1} parent=1 // pred_fallthru
      _
    // Predicated region
    $region34: #{tpu_custom_call.1} parent=1 // pred_check
      _
    $region35: #{tpu_custom_call.1} parent=1 // pred_check_branch
      %33 = sbr.rel (0) target = $region37
    $region36: #{tpu_custom_call.1} parent=1 // pred_region
      _
    $region37: #{tpu_custom_call.1} parent=1 // pred_fallthru
      _
    // Predicated region
    $region38: #{tpu_custom_call.1} parent=1 // pred_check
      _
    $region39: #{tpu_custom_call.1} parent=1 // pred_check_branch
      %35 = sbr.rel (0) target = $region41
    $region40: #{tpu_custom_call.1} parent=1 // pred_region
      _
    $region41: #{tpu_custom_call.1} parent=1 // pred_fallthru
      _
    %v37 = vld [vmem:[%s1] sm:$0xff]
    %v38 = vld [vmem:[%s1 + $0x8] sm:$0xff]
    %v39 = vlaneseq
    %v40 = vshrl.u32 %v39, 7
    %v41 = vadd.s32 %v40, 8
    %v42 = vadd.s32 %v40, 16
    %v43 = vadd.s32 %v40, 24
    %v44 = vadd.s32 %v40, 32
    %v45 = vadd.s32 %v40, 40
    %v46 = vadd.s32 %v40, 48
    %v47 = vadd.s32 %v40, 56
    %v48 = vadd.s32 %v40, 64
    %v49 = vadd.s32 %v40, 72
    %v50 = vadd.s32 %v40, 80
    %v51 = vadd.s32 %v40, 88
    %v52 = vadd.s32 %v40, 96
    %v53 = vadd.s32 %v40, 104
    %v54 = vadd.s32 %v40, 112
    %v55 = vadd.s32 %v40, 120
    %v56 = vlaneseq
    %v57 = vshrl.u32 %v56, 7
    %v58 = vsub.s32 0, %v57
    %v59 = vrot.slane %v37, %v58
    %v60 = vlaneseq
    %v61 = vshrl.u32 %v60, 7
    %v62 = vsub.s32 1, %v61
    %v63 = vrot.slane %v37, %v62
    %v64 = vlaneseq
    %v65 = vshrl.u32 %v64, 7
    %v66 = vsub.s32 2, %v65
    %v67 = vrot.slane %v37, %v66
    %v68 = vlaneseq
    %v69 = vshrl.u32 %v68, 7
    %v70 = vsub.s32 3, %v69
    %v71 = vrot.slane %v37, %v70
    %v72 = vlaneseq
    %v73 = vshrl.u32 %v72, 7
    %v74 = vsub.s32 4, %v73
    %v75 = vrot.slane %v37, %v74
    %v76 = vlaneseq
    %v77 = vshrl.u32 %v76, 7
    %v78 = vsub.s32 5, %v77
    %v79 = vrot.slane %v37, %v78
    %v80 = vlaneseq
    %v81 = vshrl.u32 %v80, 7
    %v82 = vsub.s32 6, %v81
    %v83 = vrot.slane %v37, %v82
    %v84 = vlaneseq
    %v85 = vshrl.u32 %v84, 7
    %v86 = vsub.s32 7, %v85
    %v87 = vrot.slane %v37, %v86
    %v88 = vlaneseq
    %v89 = vshrl.u32 %v88, 7
    %v90 = vsub.s32 0, %v89
    %v91 = vrot.slane %v38, %v90
    %v92 = vlaneseq
    %v93 = vshrl.u32 %v92, 7
    %v94 = vsub.s32 1, %v93
    %v95 = vrot.slane %v38, %v94
    %v96 = vlaneseq
    %v97 = vshrl.u32 %v96, 7
    %v98 = vsub.s32 2, %v97
    %v99 = vrot.slane %v38, %v98
    %v100 = vlaneseq
    %v101 = vshrl.u32 %v100, 7
    %v102 = vsub.s32 3, %v101
    %v103 = vrot.slane %v38, %v102
    %v104 = vlaneseq
    %v105 = vshrl.u32 %v104, 7
    %v106 = vsub.s32 4, %v105
    %v107 = vrot.slane %v38, %v106
    %v108 = vlaneseq
    %v109 = vshrl.u32 %v108, 7
    %v110 = vsub.s32 5, %v109
    %v111 = vrot.slane %v38, %v110
    %v112 = vlaneseq
    %v113 = vshrl.u32 %v112, 7
    %v114 = vsub.s32 6, %v113
    %v115 = vrot.slane %v38, %v114
    %v116 = vlaneseq
    %v117 = vshrl.u32 %v116, 7
    %v118 = vsub.s32 7, %v117
    %v119 = vrot.slane %v38, %v118
    %vm120 = vcmp.eq.s32.totalorder %v40, %v59
    %vm121 = vcmp.eq.s32.totalorder %v40, %v63
    %vm122 = vcmp.eq.s32.totalorder %v40, %v67
    %vm123 = vcmp.eq.s32.totalorder %v40, %v71
    %vm124 = vcmp.eq.s32.totalorder %v40, %v75
    %vm125 = vcmp.eq.s32.totalorder %v40, %v79
    %vm126 = vcmp.eq.s32.totalorder %v40, %v83
    %vm127 = vcmp.eq.s32.totalorder %v40, %v87
    %vm128 = vcmp.eq.s32.totalorder %v40, %v91
    %vm129 = vcmp.eq.s32.totalorder %v40, %v95
    %vm130 = vcmp.eq.s32.totalorder %v40, %v99
    %vm131 = vcmp.eq.s32.totalorder %v40, %v103
    %vm132 = vcmp.eq.s32.totalorder %v40, %v107
    %vm133 = vcmp.eq.s32.totalorder %v40, %v111
    %vm134 = vcmp.eq.s32.totalorder %v40, %v115
    %vm135 = vcmp.eq.s32.totalorder %v40, %v119
    %vm136 = vcmp.eq.s32.totalorder %v41, %v59
    %vm137 = vcmp.eq.s32.totalorder %v41, %v63
    %vm138 = vcmp.eq.s32.totalorder %v41, %v67
    %vm139 = vcmp.eq.s32.totalorder %v41, %v71
    %vm140 = vcmp.eq.s32.totalorder %v41, %v75
    %vm141 = vcmp.eq.s32.totalorder %v41, %v79
    %vm142 = vcmp.eq.s32.totalorder %v41, %v83
    %vm143 = vcmp.eq.s32.totalorder %v41, %v87
    %vm144 = vcmp.eq.s32.totalorder %v41, %v91
    %vm145 = vcmp.eq.s32.totalorder %v41, %v95
    %vm146 = vcmp.eq.s32.totalorder %v41, %v99
    %vm147 = vcmp.eq.s32.totalorder %v41, %v103
    %vm148 = vcmp.eq.s32.totalorder %v41, %v107
    %vm149 = vcmp.eq.s32.totalorder %v41, %v111
    %vm150 = vcmp.eq.s32.totalorder %v41, %v115
    %vm151 = vcmp.eq.s32.totalorder %v41, %v119
    %vm152 = vcmp.eq.s32.totalorder %v42, %v59
    %vm153 = vcmp.eq.s32.totalorder %v42, %v63
    %vm154 = vcmp.eq.s32.totalorder %v42, %v67
    %vm155 = vcmp.eq.s32.totalorder %v42, %v71
    %vm156 = vcmp.eq.s32.totalorder %v42, %v75
    %vm157 = vcmp.eq.s32.totalorder %v42, %v79
    %vm158 = vcmp.eq.s32.totalorder %v42, %v83
    %vm159 = vcmp.eq.s32.totalorder %v42, %v87
    %vm160 = vcmp.eq.s32.totalorder %v42, %v91
    %vm161 = vcmp.eq.s32.totalorder %v42, %v95
    %vm162 = vcmp.eq.s32.totalorder %v42, %v99
    %vm163 = vcmp.eq.s32.totalorder %v42, %v103
    %vm164 = vcmp.eq.s32.totalorder %v42, %v107
    %vm165 = vcmp.eq.s32.totalorder %v42, %v111
    %vm166 = vcmp.eq.s32.totalorder %v42, %v115
    %vm167 = vcmp.eq.s32.totalorder %v42, %v119
    %vm168 = vcmp.eq.s32.totalorder %v43, %v59
    %vm169 = vcmp.eq.s32.totalorder %v43, %v63
    %vm170 = vcmp.eq.s32.totalorder %v43, %v67
    %vm171 = vcmp.eq.s32.totalorder %v43, %v71
    %vm172 = vcmp.eq.s32.totalorder %v43, %v75
    %vm173 = vcmp.eq.s32.totalorder %v43, %v79
    %vm174 = vcmp.eq.s32.totalorder %v43, %v83
    %vm175 = vcmp.eq.s32.totalorder %v43, %v87
    %vm176 = vcmp.eq.s32.totalorder %v43, %v91
    %vm177 = vcmp.eq.s32.totalorder %v43, %v95
    %vm178 = vcmp.eq.s32.totalorder %v43, %v99
    %vm179 = vcmp.eq.s32.totalorder %v43, %v103
    %vm180 = vcmp.eq.s32.totalorder %v43, %v107
    %vm181 = vcmp.eq.s32.totalorder %v43, %v111
    %vm182 = vcmp.eq.s32.totalorder %v43, %v115
    %vm183 = vcmp.eq.s32.totalorder %v43, %v119
    %vm184 = vcmp.eq.s32.totalorder %v44, %v59
    %vm185 = vcmp.eq.s32.totalorder %v44, %v63
    %vm186 = vcmp.eq.s32.totalorder %v44, %v67
    %vm187 = vcmp.eq.s32.totalorder %v44, %v71
    %vm188 = vcmp.eq.s32.totalorder %v44, %v75
    %vm189 = vcmp.eq.s32.totalorder %v44, %v79
    %vm190 = vcmp.eq.s32.totalorder %v44, %v83
    %vm191 = vcmp.eq.s32.totalorder %v44, %v87
    %vm192 = vcmp.eq.s32.totalorder %v44, %v91
    %vm193 = vcmp.eq.s32.totalorder %v44, %v95
    %vm194 = vcmp.eq.s32.totalorder %v44, %v99
    %vm195 = vcmp.eq.s32.totalorder %v44, %v103
    %vm196 = vcmp.eq.s32.totalorder %v44, %v107
    %vm197 = vcmp.eq.s32.totalorder %v44, %v111
    %vm198 = vcmp.eq.s32.totalorder %v44, %v115
    %vm199 = vcmp.eq.s32.totalorder %v44, %v119
    %vm200 = vcmp.eq.s32.totalorder %v45, %v59
    %vm201 = vcmp.eq.s32.totalorder %v45, %v63
    %vm202 = vcmp.eq.s32.totalorder %v45, %v67
    %vm203 = vcmp.eq.s32.totalorder %v45, %v71
    %vm204 = vcmp.eq.s32.totalorder %v45, %v75
    %vm205 = vcmp.eq.s32.totalorder %v45, %v79
    %vm206 = vcmp.eq.s32.totalorder %v45, %v83
    %vm207 = vcmp.eq.s32.totalorder %v45, %v87
    %vm208 = vcmp.eq.s32.totalorder %v45, %v91
    %vm209 = vcmp.eq.s32.totalorder %v45, %v95
    %vm210 = vcmp.eq.s32.totalorder %v45, %v99
    %vm211 = vcmp.eq.s32.totalorder %v45, %v103
    %vm212 = vcmp.eq.s32.totalorder %v45, %v107
    %vm213 = vcmp.eq.s32.totalorder %v45, %v111
    %vm214 = vcmp.eq.s32.totalorder %v45, %v115
    %vm215 = vcmp.eq.s32.totalorder %v45, %v119
    %vm216 = vcmp.eq.s32.totalorder %v46, %v59
    %vm217 = vcmp.eq.s32.totalorder %v46, %v63
    %vm218 = vcmp.eq.s32.totalorder %v46, %v67
    %vm219 = vcmp.eq.s32.totalorder %v46, %v71
    %vm220 = vcmp.eq.s32.totalorder %v46, %v75
    %vm221 = vcmp.eq.s32.totalorder %v46, %v79
    %vm222 = vcmp.eq.s32.totalorder %v46, %v83
    %vm223 = vcmp.eq.s32.totalorder %v46, %v87
    %vm224 = vcmp.eq.s32.totalorder %v46, %v91
    %vm225 = vcmp.eq.s32.totalorder %v46, %v95
    %vm226 = vcmp.eq.s32.totalorder %v46, %v99
    %vm227 = vcmp.eq.s32.totalorder %v46, %v103
    %vm228 = vcmp.eq.s32.totalorder %v46, %v107
    %vm229 = vcmp.eq.s32.totalorder %v46, %v111
    %vm230 = vcmp.eq.s32.totalorder %v46, %v115
    %vm231 = vcmp.eq.s32.totalorder %v46, %v119
    %vm232 = vcmp.eq.s32.totalorder %v47, %v59
    %vm233 = vcmp.eq.s32.totalorder %v47, %v63
    %vm234 = vcmp.eq.s32.totalorder %v47, %v67
    %vm235 = vcmp.eq.s32.totalorder %v47, %v71
    %vm236 = vcmp.eq.s32.totalorder %v47, %v75
    %vm237 = vcmp.eq.s32.totalorder %v47, %v79
    %vm238 = vcmp.eq.s32.totalorder %v47, %v83
    %vm239 = vcmp.eq.s32.totalorder %v47, %v87
    %vm240 = vcmp.eq.s32.totalorder %v47, %v91
    %vm241 = vcmp.eq.s32.totalorder %v47, %v95
    %vm242 = vcmp.eq.s32.totalorder %v47, %v99
    %vm243 = vcmp.eq.s32.totalorder %v47, %v103
    %vm244 = vcmp.eq.s32.totalorder %v47, %v107
    %vm245 = vcmp.eq.s32.totalorder %v47, %v111
    %vm246 = vcmp.eq.s32.totalorder %v47, %v115
    %vm247 = vcmp.eq.s32.totalorder %v47, %v119
    %vm248 = vcmp.eq.s32.totalorder %v48, %v59
    %vm249 = vcmp.eq.s32.totalorder %v48, %v63
    %vm250 = vcmp.eq.s32.totalorder %v48, %v67
    %vm251 = vcmp.eq.s32.totalorder %v48, %v71
    %vm252 = vcmp.eq.s32.totalorder %v48, %v75
    %vm253 = vcmp.eq.s32.totalorder %v48, %v79
    %vm254 = vcmp.eq.s32.totalorder %v48, %v83
    %vm255 = vcmp.eq.s32.totalorder %v48, %v87
    %vm256 = vcmp.eq.s32.totalorder %v48, %v91
    %vm257 = vcmp.eq.s32.totalorder %v48, %v95
    %vm258 = vcmp.eq.s32.totalorder %v48, %v99
    %vm259 = vcmp.eq.s32.totalorder %v48, %v103
    %vm260 = vcmp.eq.s32.totalorder %v48, %v107
    %vm261 = vcmp.eq.s32.totalorder %v48, %v111
    %vm262 = vcmp.eq.s32.totalorder %v48, %v115
    %vm263 = vcmp.eq.s32.totalorder %v48, %v119
    %vm264 = vcmp.eq.s32.totalorder %v49, %v59
    %vm265 = vcmp.eq.s32.totalorder %v49, %v63
    %vm266 = vcmp.eq.s32.totalorder %v49, %v67
    %vm267 = vcmp.eq.s32.totalorder %v49, %v71
    %vm268 = vcmp.eq.s32.totalorder %v49, %v75
    %vm269 = vcmp.eq.s32.totalorder %v49, %v79
    %vm270 = vcmp.eq.s32.totalorder %v49, %v83
    %vm271 = vcmp.eq.s32.totalorder %v49, %v87
    %vm272 = vcmp.eq.s32.totalorder %v49, %v91
    %vm273 = vcmp.eq.s32.totalorder %v49, %v95
    %vm274 = vcmp.eq.s32.totalorder %v49, %v99
    %vm275 = vcmp.eq.s32.totalorder %v49, %v103
    %vm276 = vcmp.eq.s32.totalorder %v49, %v107
    %vm277 = vcmp.eq.s32.totalorder %v49, %v111
    %vm278 = vcmp.eq.s32.totalorder %v49, %v115
    %vm279 = vcmp.eq.s32.totalorder %v49, %v119
    %vm280 = vcmp.eq.s32.totalorder %v50, %v59
    %vm281 = vcmp.eq.s32.totalorder %v50, %v63
    %vm282 = vcmp.eq.s32.totalorder %v50, %v67
    %vm283 = vcmp.eq.s32.totalorder %v50, %v71
    %vm284 = vcmp.eq.s32.totalorder %v50, %v75
    %vm285 = vcmp.eq.s32.totalorder %v50, %v79
    %vm286 = vcmp.eq.s32.totalorder %v50, %v83
    %vm287 = vcmp.eq.s32.totalorder %v50, %v87
    %vm288 = vcmp.eq.s32.totalorder %v50, %v91
    %vm289 = vcmp.eq.s32.totalorder %v50, %v95
    %vm290 = vcmp.eq.s32.totalorder %v50, %v99
    %vm291 = vcmp.eq.s32.totalorder %v50, %v103
    %vm292 = vcmp.eq.s32.totalorder %v50, %v107
    %vm293 = vcmp.eq.s32.totalorder %v50, %v111
    %vm294 = vcmp.eq.s32.totalorder %v50, %v115
    %vm295 = vcmp.eq.s32.totalorder %v50, %v119
    %vm296 = vcmp.eq.s32.totalorder %v51, %v59
    %vm297 = vcmp.eq.s32.totalorder %v51, %v63
    %vm298 = vcmp.eq.s32.totalorder %v51, %v67
    %vm299 = vcmp.eq.s32.totalorder %v51, %v71
    %vm300 = vcmp.eq.s32.totalorder %v51, %v75
    %vm301 = vcmp.eq.s32.totalorder %v51, %v79
    %vm302 = vcmp.eq.s32.totalorder %v51, %v83
    %vm303 = vcmp.eq.s32.totalorder %v51, %v87
    %vm304 = vcmp.eq.s32.totalorder %v51, %v91
    %vm305 = vcmp.eq.s32.totalorder %v51, %v95
    %vm306 = vcmp.eq.s32.totalorder %v51, %v99
    %vm307 = vcmp.eq.s32.totalorder %v51, %v103
    %vm308 = vcmp.eq.s32.totalorder %v51, %v107
    %vm309 = vcmp.eq.s32.totalorder %v51, %v111
    %vm310 = vcmp.eq.s32.totalorder %v51, %v115
    %vm311 = vcmp.eq.s32.totalorder %v51, %v119
    %vm312 = vcmp.eq.s32.totalorder %v52, %v59
    %vm313 = vcmp.eq.s32.totalorder %v52, %v63
    %vm314 = vcmp.eq.s32.totalorder %v52, %v67
    %vm315 = vcmp.eq.s32.totalorder %v52, %v71
    %vm316 = vcmp.eq.s32.totalorder %v52, %v75
    %vm317 = vcmp.eq.s32.totalorder %v52, %v79
    %vm318 = vcmp.eq.s32.totalorder %v52, %v83
    %vm319 = vcmp.eq.s32.totalorder %v52, %v87
    %vm320 = vcmp.eq.s32.totalorder %v52, %v91
    %vm321 = vcmp.eq.s32.totalorder %v52, %v95
    %vm322 = vcmp.eq.s32.totalorder %v52, %v99
    %vm323 = vcmp.eq.s32.totalorder %v52, %v103
    %vm324 = vcmp.eq.s32.totalorder %v52, %v107
    %vm325 = vcmp.eq.s32.totalorder %v52, %v111
    %vm326 = vcmp.eq.s32.totalorder %v52, %v115
    %vm327 = vcmp.eq.s32.totalorder %v52, %v119
    %vm328 = vcmp.eq.s32.totalorder %v53, %v59
    %vm329 = vcmp.eq.s32.totalorder %v53, %v63
    %vm330 = vcmp.eq.s32.totalorder %v53, %v67
    %vm331 = vcmp.eq.s32.totalorder %v53, %v71
    %vm332 = vcmp.eq.s32.totalorder %v53, %v75
    %vm333 = vcmp.eq.s32.totalorder %v53, %v79
    %vm334 = vcmp.eq.s32.totalorder %v53, %v83
    %vm335 = vcmp.eq.s32.totalorder %v53, %v87
    %vm336 = vcmp.eq.s32.totalorder %v53, %v91
    %vm337 = vcmp.eq.s32.totalorder %v53, %v95
    %vm338 = vcmp.eq.s32.totalorder %v53, %v99
    %vm339 = vcmp.eq.s32.totalorder %v53, %v103
    %vm340 = vcmp.eq.s32.totalorder %v53, %v107
    %vm341 = vcmp.eq.s32.totalorder %v53, %v111
    %vm342 = vcmp.eq.s32.totalorder %v53, %v115
    %vm343 = vcmp.eq.s32.totalorder %v53, %v119
    %vm344 = vcmp.eq.s32.totalorder %v54, %v59
    %vm345 = vcmp.eq.s32.totalorder %v54, %v63
    %vm346 = vcmp.eq.s32.totalorder %v54, %v67
    %vm347 = vcmp.eq.s32.totalorder %v54, %v71
    %vm348 = vcmp.eq.s32.totalorder %v54, %v75
    %vm349 = vcmp.eq.s32.totalorder %v54, %v79
    %vm350 = vcmp.eq.s32.totalorder %v54, %v83
    %vm351 = vcmp.eq.s32.totalorder %v54, %v87
    %vm352 = vcmp.eq.s32.totalorder %v54, %v91
    %vm353 = vcmp.eq.s32.totalorder %v54, %v95
    %vm354 = vcmp.eq.s32.totalorder %v54, %v99
    %vm355 = vcmp.eq.s32.totalorder %v54, %v103
    %vm356 = vcmp.eq.s32.totalorder %v54, %v107
    %vm357 = vcmp.eq.s32.totalorder %v54, %v111
    %vm358 = vcmp.eq.s32.totalorder %v54, %v115
    %vm359 = vcmp.eq.s32.totalorder %v54, %v119
    %vm360 = vcmp.eq.s32.totalorder %v55, %v59
    %vm361 = vcmp.eq.s32.totalorder %v55, %v63
    %vm362 = vcmp.eq.s32.totalorder %v55, %v67
    %vm363 = vcmp.eq.s32.totalorder %v55, %v71
    %vm364 = vcmp.eq.s32.totalorder %v55, %v75
    %vm365 = vcmp.eq.s32.totalorder %v55, %v79
    %vm366 = vcmp.eq.s32.totalorder %v55, %v83
    %vm367 = vcmp.eq.s32.totalorder %v55, %v87
    %vm368 = vcmp.eq.s32.totalorder %v55, %v91
    %vm369 = vcmp.eq.s32.totalorder %v55, %v95
    %vm370 = vcmp.eq.s32.totalorder %v55, %v99
    %vm371 = vcmp.eq.s32.totalorder %v55, %v103
    %vm372 = vcmp.eq.s32.totalorder %v55, %v107
    %vm373 = vcmp.eq.s32.totalorder %v55, %v111
    %vm374 = vcmp.eq.s32.totalorder %v55, %v115
    %vm375 = vcmp.eq.s32.totalorder %v55, %v119
    %v376 = vsel %vm120, 1, 0
    %v377 = vsel %vm121, 1, 0
    %v378 = vsel %vm122, 1, 0
    %v379 = vsel %vm123, 1, 0
    %v380 = vsel %vm124, 1, 0
    %v381 = vsel %vm125, 1, 0
    %v382 = vsel %vm126, 1, 0
    %v383 = vsel %vm127, 1, 0
    %v384 = vsel %vm128, 1, 0
    %v385 = vsel %vm129, 1, 0
    %v386 = vsel %vm130, 1, 0
    %v387 = vsel %vm131, 1, 0
    %v388 = vsel %vm132, 1, 0
    %v389 = vsel %vm133, 1, 0
    %v390 = vsel %vm134, 1, 0
    %v391 = vsel %vm135, 1, 0
    %v392 = vsel %vm136, 1, 0
    %v393 = vsel %vm137, 1, 0
    %v394 = vsel %vm138, 1, 0
    %v395 = vsel %vm139, 1, 0
    %v396 = vsel %vm140, 1, 0
    %v397 = vsel %vm141, 1, 0
    %v398 = vsel %vm142, 1, 0
    %v399 = vsel %vm143, 1, 0
    %v400 = vsel %vm144, 1, 0
    %v401 = vsel %vm145, 1, 0
    %v402 = vsel %vm146, 1, 0
    %v403 = vsel %vm147, 1, 0
    %v404 = vsel %vm148, 1, 0
    %v405 = vsel %vm149, 1, 0
    %v406 = vsel %vm150, 1, 0
    %v407 = vsel %vm151, 1, 0
    %v408 = vsel %vm152, 1, 0
    %v409 = vsel %vm153, 1, 0
    %v410 = vsel %vm154, 1, 0
    %v411 = vsel %vm155, 1, 0
    %v412 = vsel %vm156, 1, 0
    %v413 = vsel %vm157, 1, 0
    %v414 = vsel %vm158, 1, 0
    %v415 = vsel %vm159, 1, 0
    %v416 = vsel %vm160, 1, 0
    %v417 = vsel %vm161, 1, 0
    %v418 = vsel %vm162, 1, 0
    %v419 = vsel %vm163, 1, 0
    %v420 = vsel %vm164, 1, 0
    %v421 = vsel %vm165, 1, 0
    %v422 = vsel %vm166, 1, 0
    %v423 = vsel %vm167, 1, 0
    %v424 = vsel %vm168, 1, 0
    %v425 = vsel %vm169, 1, 0
    %v426 = vsel %vm170, 1, 0
    %v427 = vsel %vm171, 1, 0
    %v428 = vsel %vm172, 1, 0
    %v429 = vsel %vm173, 1, 0
    %v430 = vsel %vm174, 1, 0
    %v431 = vsel %vm175, 1, 0
    %v432 = vsel %vm176, 1, 0
    %v433 = vsel %vm177, 1, 0
    %v434 = vsel %vm178, 1, 0
    %v435 = vsel %vm179, 1, 0
    %v436 = vsel %vm180, 1, 0
    %v437 = vsel %vm181, 1, 0
    %v438 = vsel %vm182, 1, 0
    %v439 = vsel %vm183, 1, 0
    %v440 = vsel %vm184, 1, 0
    %v441 = vsel %vm185, 1, 0
    %v442 = vsel %vm186, 1, 0
    %v443 = vsel %vm187, 1, 0
    %v444 = vsel %vm188, 1, 0
    %v445 = vsel %vm189, 1, 0
    %v446 = vsel %vm190, 1, 0
    %v447 = vsel %vm191, 1, 0
    %v448 = vsel %vm192, 1, 0
    %v449 = vsel %vm193, 1, 0
    %v450 = vsel %vm194, 1, 0
    %v451 = vsel %vm195, 1, 0
    %v452 = vsel %vm196, 1, 0
    %v453 = vsel %vm197, 1, 0
    %v454 = vsel %vm198, 1, 0
    %v455 = vsel %vm199, 1, 0
    %v456 = vsel %vm200, 1, 0
    %v457 = vsel %vm201, 1, 0
    %v458 = vsel %vm202, 1, 0
    %v459 = vsel %vm203, 1, 0
    %v460 = vsel %vm204, 1, 0
    %v461 = vsel %vm205, 1, 0
    %v462 = vsel %vm206, 1, 0
    %v463 = vsel %vm207, 1, 0
    %v464 = vsel %vm208, 1, 0
    %v465 = vsel %vm209, 1, 0
    %v466 = vsel %vm210, 1, 0
    %v467 = vsel %vm211, 1, 0
    %v468 = vsel %vm212, 1, 0
    %v469 = vsel %vm213, 1, 0
    %v470 = vsel %vm214, 1, 0
    %v471 = vsel %vm215, 1, 0
    %v472 = vsel %vm216, 1, 0
    %v473 = vsel %vm217, 1, 0
    %v474 = vsel %vm218, 1, 0
    %v475 = vsel %vm219, 1, 0
    %v476 = vsel %vm220, 1, 0
    %v477 = vsel %vm221, 1, 0
    %v478 = vsel %vm222, 1, 0
    %v479 = vsel %vm223, 1, 0
    %v480 = vsel %vm224, 1, 0
    %v481 = vsel %vm225, 1, 0
    %v482 = vsel %vm226, 1, 0
    %v483 = vsel %vm227, 1, 0
    %v484 = vsel %vm228, 1, 0
    %v485 = vsel %vm229, 1, 0
    %v486 = vsel %vm230, 1, 0
    %v487 = vsel %vm231, 1, 0
    %v488 = vsel %vm232, 1, 0
    %v489 = vsel %vm233, 1, 0
    %v490 = vsel %vm234, 1, 0
    %v491 = vsel %vm235, 1, 0
    %v492 = vsel %vm236, 1, 0
    %v493 = vsel %vm237, 1, 0
    %v494 = vsel %vm238, 1, 0
    %v495 = vsel %vm239, 1, 0
    %v496 = vsel %vm240, 1, 0
    %v497 = vsel %vm241, 1, 0
    %v498 = vsel %vm242, 1, 0
    %v499 = vsel %vm243, 1, 0
    %v500 = vsel %vm244, 1, 0
    %v501 = vsel %vm245, 1, 0
    %v502 = vsel %vm246, 1, 0
    %v503 = vsel %vm247, 1, 0
    %v504 = vsel %vm248, 1, 0
    %v505 = vsel %vm249, 1, 0
    %v506 = vsel %vm250, 1, 0
    %v507 = vsel %vm251, 1, 0
    %v508 = vsel %vm252, 1, 0
    %v509 = vsel %vm253, 1, 0
    %v510 = vsel %vm254, 1, 0
    %v511 = vsel %vm255, 1, 0
    %v512 = vsel %vm256, 1, 0
    %v513 = vsel %vm257, 1, 0
    %v514 = vsel %vm258, 1, 0
    %v515 = vsel %vm259, 1, 0
    %v516 = vsel %vm260, 1, 0
    %v517 = vsel %vm261, 1, 0
    %v518 = vsel %vm262, 1, 0
    %v519 = vsel %vm263, 1, 0
    %v520 = vsel %vm264, 1, 0
    %v521 = vsel %vm265, 1, 0
    %v522 = vsel %vm266, 1, 0
    %v523 = vsel %vm267, 1, 0
    %v524 = vsel %vm268, 1, 0
    %v525 = vsel %vm269, 1, 0
    %v526 = vsel %vm270, 1, 0
    %v527 = vsel %vm271, 1, 0
    %v528 = vsel %vm272, 1, 0
    %v529 = vsel %vm273, 1, 0
    %v530 = vsel %vm274, 1, 0
    %v531 = vsel %vm275, 1, 0
    %v532 = vsel %vm276, 1, 0
    %v533 = vsel %vm277, 1, 0
    %v534 = vsel %vm278, 1, 0
    %v535 = vsel %vm279, 1, 0
    %v536 = vsel %vm280, 1, 0
    %v537 = vsel %vm281, 1, 0
    %v538 = vsel %vm282, 1, 0
    %v539 = vsel %vm283, 1, 0
    %v540 = vsel %vm284, 1, 0
    %v541 = vsel %vm285, 1, 0
    %v542 = vsel %vm286, 1, 0
    %v543 = vsel %vm287, 1, 0
    %v544 = vsel %vm288, 1, 0
    %v545 = vsel %vm289, 1, 0
    %v546 = vsel %vm290, 1, 0
    %v547 = vsel %vm291, 1, 0
    %v548 = vsel %vm292, 1, 0
    %v549 = vsel %vm293, 1, 0
    %v550 = vsel %vm294, 1, 0
    %v551 = vsel %vm295, 1, 0
    %v552 = vsel %vm296, 1, 0
    %v553 = vsel %vm297, 1, 0
    %v554 = vsel %vm298, 1, 0
    %v555 = vsel %vm299, 1, 0
    %v556 = vsel %vm300, 1, 0
    %v557 = vsel %vm301, 1, 0
    %v558 = vsel %vm302, 1, 0
    %v559 = vsel %vm303, 1, 0
    %v560 = vsel %vm304, 1, 0
    %v561 = vsel %vm305, 1, 0
    %v562 = vsel %vm306, 1, 0
    %v563 = vsel %vm307, 1, 0
    %v564 = vsel %vm308, 1, 0
    %v565 = vsel %vm309, 1, 0
    %v566 = vsel %vm310, 1, 0
    %v567 = vsel %vm311, 1, 0
    %v568 = vsel %vm312, 1, 0
    %v569 = vsel %vm313, 1, 0
    %v570 = vsel %vm314, 1, 0
    %v571 = vsel %vm315, 1, 0
    %v572 = vsel %vm316, 1, 0
    %v573 = vsel %vm317, 1, 0
    %v574 = vsel %vm318, 1, 0
    %v575 = vsel %vm319, 1, 0
    %v576 = vsel %vm320, 1, 0
    %v577 = vsel %vm321, 1, 0
    %v578 = vsel %vm322, 1, 0
    %v579 = vsel %vm323, 1, 0
    %v580 = vsel %vm324, 1, 0
    %v581 = vsel %vm325, 1, 0
    %v582 = vsel %vm326, 1, 0
    %v583 = vsel %vm327, 1, 0
    %v584 = vsel %vm328, 1, 0
    %v585 = vsel %vm329, 1, 0
    %v586 = vsel %vm330, 1, 0
    %v587 = vsel %vm331, 1, 0
    %v588 = vsel %vm332, 1, 0
    %v589 = vsel %vm333, 1, 0
    %v590 = vsel %vm334, 1, 0
    %v591 = vsel %vm335, 1, 0
    %v592 = vsel %vm336, 1, 0
    %v593 = vsel %vm337, 1, 0
    %v594 = vsel %vm338, 1, 0
    %v595 = vsel %vm339, 1, 0
    %v596 = vsel %vm340, 1, 0
    %v597 = vsel %vm341, 1, 0
    %v598 = vsel %vm342, 1, 0
    %v599 = vsel %vm343, 1, 0
    %v600 = vsel %vm344, 1, 0
    %v601 = vsel %vm345, 1, 0
    %v602 = vsel %vm346, 1, 0
    %v603 = vsel %vm347, 1, 0
    %v604 = vsel %vm348, 1, 0
    %v605 = vsel %vm349, 1, 0
    %v606 = vsel %vm350, 1, 0
    %v607 = vsel %vm351, 1, 0
    %v608 = vsel %vm352, 1, 0
    %v609 = vsel %vm353, 1, 0
    %v610 = vsel %vm354, 1, 0
    %v611 = vsel %vm355, 1, 0
    %v612 = vsel %vm356, 1, 0
    %v613 = vsel %vm357, 1, 0
    %v614 = vsel %vm358, 1, 0
    %v615 = vsel %vm359, 1, 0
    %v616 = vsel %vm360, 1, 0
    %v617 = vsel %vm361, 1, 0
    %v618 = vsel %vm362, 1, 0
    %v619 = vsel %vm363, 1, 0
    %v620 = vsel %vm364, 1, 0
    %v621 = vsel %vm365, 1, 0
    %v622 = vsel %vm366, 1, 0
    %v623 = vsel %vm367, 1, 0
    %v624 = vsel %vm368, 1, 0
    %v625 = vsel %vm369, 1, 0
    %v626 = vsel %vm370, 1, 0
    %v627 = vsel %vm371, 1, 0
    %v628 = vsel %vm372, 1, 0
    %v629 = vsel %vm373, 1, 0
    %v630 = vsel %vm374, 1, 0
    %v631 = vsel %vm375, 1, 0
    %v632 = vcvt.s32.f32 %v376
    %v633 = vcvt.s32.f32 %v377
    %v634 = vcvt.s32.f32 %v378
    %v635 = vcvt.s32.f32 %v379
    %v636 = vcvt.s32.f32 %v380
    %v637 = vcvt.s32.f32 %v381
    %v638 = vcvt.s32.f32 %v382
    %v639 = vcvt.s32.f32 %v383
    %v640 = vcvt.s32.f32 %v384
    %v641 = vcvt.s32.f32 %v385
    %v642 = vcvt.s32.f32 %v386
    %v643 = vcvt.s32.f32 %v387
    %v644 = vcvt.s32.f32 %v388
    %v645 = vcvt.s32.f32 %v389
    %v646 = vcvt.s32.f32 %v390
    %v647 = vcvt.s32.f32 %v391
    %v648 = vcvt.s32.f32 %v392
    %v649 = vcvt.s32.f32 %v393
    %v650 = vcvt.s32.f32 %v394
    %v651 = vcvt.s32.f32 %v395
    %v652 = vcvt.s32.f32 %v396
    %v653 = vcvt.s32.f32 %v397
    %v654 = vcvt.s32.f32 %v398
    %v655 = vcvt.s32.f32 %v399
    %v656 = vcvt.s32.f32 %v400
    %v657 = vcvt.s32.f32 %v401
    %v658 = vcvt.s32.f32 %v402
    %v659 = vcvt.s32.f32 %v403
    %v660 = vcvt.s32.f32 %v404
    %v661 = vcvt.s32.f32 %v405
    %v662 = vcvt.s32.f32 %v406
    %v663 = vcvt.s32.f32 %v407
    %v664 = vcvt.s32.f32 %v408
    %v665 = vcvt.s32.f32 %v409
    %v666 = vcvt.s32.f32 %v410
    %v667 = vcvt.s32.f32 %v411
    %v668 = vcvt.s32.f32 %v412
    %v669 = vcvt.s32.f32 %v413
    %v670 = vcvt.s32.f32 %v414
    %v671 = vcvt.s32.f32 %v415
    %v672 = vcvt.s32.f32 %v416
    %v673 = vcvt.s32.f32 %v417
    %v674 = vcvt.s32.f32 %v418
    %v675 = vcvt.s32.f32 %v419
    %v676 = vcvt.s32.f32 %v420
    %v677 = vcvt.s32.f32 %v421
    %v678 = vcvt.s32.f32 %v422
    %v679 = vcvt.s32.f32 %v423
    %v680 = vcvt.s32.f32 %v424
    %v681 = vcvt.s32.f32 %v425
    %v682 = vcvt.s32.f32 %v426
    %v683 = vcvt.s32.f32 %v427
    %v684 = vcvt.s32.f32 %v428
    %v685 = vcvt.s32.f32 %v429
    %v686 = vcvt.s32.f32 %v430
    %v687 = vcvt.s32.f32 %v431
    %v688 = vcvt.s32.f32 %v432
    %v689 = vcvt.s32.f32 %v433
    %v690 = vcvt.s32.f32 %v434
    %v691 = vcvt.s32.f32 %v435
    %v692 = vcvt.s32.f32 %v436
    %v693 = vcvt.s32.f32 %v437
    %v694 = vcvt.s32.f32 %v438
    %v695 = vcvt.s32.f32 %v439
    %v696 = vcvt.s32.f32 %v440
    %v697 = vcvt.s32.f32 %v441
    %v698 = vcvt.s32.f32 %v442
    %v699 = vcvt.s32.f32 %v443
    %v700 = vcvt.s32.f32 %v444
    %v701 = vcvt.s32.f32 %v445
    %v702 = vcvt.s32.f32 %v446
    %v703 = vcvt.s32.f32 %v447
    %v704 = vcvt.s32.f32 %v448
    %v705 = vcvt.s32.f32 %v449
    %v706 = vcvt.s32.f32 %v450
    %v707 = vcvt.s32.f32 %v451
    %v708 = vcvt.s32.f32 %v452
    %v709 = vcvt.s32.f32 %v453
    %v710 = vcvt.s32.f32 %v454
    %v711 = vcvt.s32.f32 %v455
    %v712 = vcvt.s32.f32 %v456
    %v713 = vcvt.s32.f32 %v457
    %v714 = vcvt.s32.f32 %v458
    %v715 = vcvt.s32.f32 %v459
    %v716 = vcvt.s32.f32 %v460
    %v717 = vcvt.s32.f32 %v461
    %v718 = vcvt.s32.f32 %v462
    %v719 = vcvt.s32.f32 %v463
    %v720 = vcvt.s32.f32 %v464
    %v721 = vcvt.s32.f32 %v465
    %v722 = vcvt.s32.f32 %v466
    %v723 = vcvt.s32.f32 %v467
    %v724 = vcvt.s32.f32 %v468
    %v725 = vcvt.s32.f32 %v469
    %v726 = vcvt.s32.f32 %v470
    %v727 = vcvt.s32.f32 %v471
    %v728 = vcvt.s32.f32 %v472
    %v729 = vcvt.s32.f32 %v473
    %v730 = vcvt.s32.f32 %v474
    %v731 = vcvt.s32.f32 %v475
    %v732 = vcvt.s32.f32 %v476
    %v733 = vcvt.s32.f32 %v477
    %v734 = vcvt.s32.f32 %v478
    %v735 = vcvt.s32.f32 %v479
    %v736 = vcvt.s32.f32 %v480
    %v737 = vcvt.s32.f32 %v481
    %v738 = vcvt.s32.f32 %v482
    %v739 = vcvt.s32.f32 %v483
    %v740 = vcvt.s32.f32 %v484
    %v741 = vcvt.s32.f32 %v485
    %v742 = vcvt.s32.f32 %v486
    %v743 = vcvt.s32.f32 %v487
    %v744 = vcvt.s32.f32 %v488
    %v745 = vcvt.s32.f32 %v489
    %v746 = vcvt.s32.f32 %v490
    %v747 = vcvt.s32.f32 %v491
    %v748 = vcvt.s32.f32 %v492
    %v749 = vcvt.s32.f32 %v493
    %v750 = vcvt.s32.f32 %v494
    %v751 = vcvt.s32.f32 %v495
    %v752 = vcvt.s32.f32 %v496
    %v753 = vcvt.s32.f32 %v497
    %v754 = vcvt.s32.f32 %v498
    %v755 = vcvt.s32.f32 %v499
    %v756 = vcvt.s32.f32 %v500
    %v757 = vcvt.s32.f32 %v501
    %v758 = vcvt.s32.f32 %v502
    %v759 = vcvt.s32.f32 %v503
    %v760 = vcvt.s32.f32 %v504
    %v761 = vcvt.s32.f32 %v505
    %v762 = vcvt.s32.f32 %v506
    %v763 = vcvt.s32.f32 %v507
    %v764 = vcvt.s32.f32 %v508
    %v765 = vcvt.s32.f32 %v509
    %v766 = vcvt.s32.f32 %v510
    %v767 = vcvt.s32.f32 %v511
    %v768 = vcvt.s32.f32 %v512
    %v769 = vcvt.s32.f32 %v513
    %v770 = vcvt.s32.f32 %v514
    %v771 = vcvt.s32.f32 %v515
    %v772 = vcvt.s32.f32 %v516
    %v773 = vcvt.s32.f32 %v517
    %v774 = vcvt.s32.f32 %v518
    %v775 = vcvt.s32.f32 %v519
    %v776 = vcvt.s32.f32 %v520
    %v777 = vcvt.s32.f32 %v521
    %v778 = vcvt.s32.f32 %v522
    %v779 = vcvt.s32.f32 %v523
    %v780 = vcvt.s32.f32 %v524
    %v781 = vcvt.s32.f32 %v525
    %v782 = vcvt.s32.f32 %v526
    %v783 = vcvt.s32.f32 %v527
    %v784 = vcvt.s32.f32 %v528
    %v785 = vcvt.s32.f32 %v529
    %v786 = vcvt.s32.f32 %v530
    %v787 = vcvt.s32.f32 %v531
    %v788 = vcvt.s32.f32 %v532
    %v789 = vcvt.s32.f32 %v533
    %v790 = vcvt.s32.f32 %v534
    %v791 = vcvt.s32.f32 %v535
    %v792 = vcvt.s32.f32 %v536
    %v793 = vcvt.s32.f32 %v537
    %v794 = vcvt.s32.f32 %v538
    %v795 = vcvt.s32.f32 %v539
    %v796 = vcvt.s32.f32 %v540
    %v797 = vcvt.s32.f32 %v541
    %v798 = vcvt.s32.f32 %v542
    %v799 = vcvt.s32.f32 %v543
    %v800 = vcvt.s32.f32 %v544
    %v801 = vcvt.s32.f32 %v545
    %v802 = vcvt.s32.f32 %v546
    %v803 = vcvt.s32.f32 %v547
    %v804 = vcvt.s32.f32 %v548
    %v805 = vcvt.s32.f32 %v549
    %v806 = vcvt.s32.f32 %v550
    %v807 = vcvt.s32.f32 %v551
    %v808 = vcvt.s32.f32 %v552
    %v809 = vcvt.s32.f32 %v553
    %v810 = vcvt.s32.f32 %v554
    %v811 = vcvt.s32.f32 %v555
    %v812 = vcvt.s32.f32 %v556
    %v813 = vcvt.s32.f32 %v557
    %v814 = vcvt.s32.f32 %v558
    %v815 = vcvt.s32.f32 %v559
    %v816 = vcvt.s32.f32 %v560
    %v817 = vcvt.s32.f32 %v561
    %v818 = vcvt.s32.f32 %v562
    %v819 = vcvt.s32.f32 %v563
    %v820 = vcvt.s32.f32 %v564
    %v821 = vcvt.s32.f32 %v565
    %v822 = vcvt.s32.f32 %v566
    %v823 = vcvt.s32.f32 %v567
    %v824 = vcvt.s32.f32 %v568
    %v825 = vcvt.s32.f32 %v569
    %v826 = vcvt.s32.f32 %v570
    %v827 = vcvt.s32.f32 %v571
    %v828 = vcvt.s32.f32 %v572
    %v829 = vcvt.s32.f32 %v573
    %v830 = vcvt.s32.f32 %v574
    %v831 = vcvt.s32.f32 %v575
    %v832 = vcvt.s32.f32 %v576
    %v833 = vcvt.s32.f32 %v577
    %v834 = vcvt.s32.f32 %v578
    %v835 = vcvt.s32.f32 %v579
    %v836 = vcvt.s32.f32 %v580
    %v837 = vcvt.s32.f32 %v581
    %v838 = vcvt.s32.f32 %v582
    %v839 = vcvt.s32.f32 %v583
    %v840 = vcvt.s32.f32 %v584
    %v841 = vcvt.s32.f32 %v585
    %v842 = vcvt.s32.f32 %v586
    %v843 = vcvt.s32.f32 %v587
    %v844 = vcvt.s32.f32 %v588
    %v845 = vcvt.s32.f32 %v589
    %v846 = vcvt.s32.f32 %v590
    %v847 = vcvt.s32.f32 %v591
    %v848 = vcvt.s32.f32 %v592
    %v849 = vcvt.s32.f32 %v593
    %v850 = vcvt.s32.f32 %v594
    %v851 = vcvt.s32.f32 %v595
    %v852 = vcvt.s32.f32 %v596
    %v853 = vcvt.s32.f32 %v597
    %v854 = vcvt.s32.f32 %v598
    %v855 = vcvt.s32.f32 %v599
    %v856 = vcvt.s32.f32 %v600
    %v857 = vcvt.s32.f32 %v601
    %v858 = vcvt.s32.f32 %v602
    %v859 = vcvt.s32.f32 %v603
    %v860 = vcvt.s32.f32 %v604
    %v861 = vcvt.s32.f32 %v605
    %v862 = vcvt.s32.f32 %v606
    %v863 = vcvt.s32.f32 %v607
    %v864 = vcvt.s32.f32 %v608
    %v865 = vcvt.s32.f32 %v609
    %v866 = vcvt.s32.f32 %v610
    %v867 = vcvt.s32.f32 %v611
    %v868 = vcvt.s32.f32 %v612
    %v869 = vcvt.s32.f32 %v613
    %v870 = vcvt.s32.f32 %v614
    %v871 = vcvt.s32.f32 %v615
    %v872 = vcvt.s32.f32 %v616
    %v873 = vcvt.s32.f32 %v617
    %v874 = vcvt.s32.f32 %v618
    %v875 = vcvt.s32.f32 %v619
    %v876 = vcvt.s32.f32 %v620
    %v877 = vcvt.s32.f32 %v621
    %v878 = vcvt.s32.f32 %v622
    %v879 = vcvt.s32.f32 %v623
    %v880 = vcvt.s32.f32 %v624
    %v881 = vcvt.s32.f32 %v625
    %v882 = vcvt.s32.f32 %v626
    %v883 = vcvt.s32.f32 %v627
    %v884 = vcvt.s32.f32 %v628
    %v885 = vcvt.s32.f32 %v629
    %v886 = vcvt.s32.f32 %v630
    %v887 = vcvt.s32.f32 %v631
    %v888 = vpack.c.bf16 %v648, %v632
    %v889 = vpack.c.bf16 %v649, %v633
    %v890 = vpack.c.bf16 %v650, %v634
    %v891 = vpack.c.bf16 %v651, %v635
    %v892 = vpack.c.bf16 %v652, %v636
    %v893 = vpack.c.bf16 %v653, %v637
    %v894 = vpack.c.bf16 %v654, %v638
    %v895 = vpack.c.bf16 %v655, %v639
    %v896 = vpack.c.bf16 %v656, %v640
    %v897 = vpack.c.bf16 %v657, %v641
    %v898 = vpack.c.bf16 %v658, %v642
    %v899 = vpack.c.bf16 %v659, %v643
    %v900 = vpack.c.bf16 %v660, %v644
    %v901 = vpack.c.bf16 %v661, %v645
    %v902 = vpack.c.bf16 %v662, %v646
    %v903 = vpack.c.bf16 %v663, %v647
    %v904 = vpack.c.bf16 %v680, %v664
    %v905 = vpack.c.bf16 %v681, %v665
    %v906 = vpack.c.bf16 %v682, %v666
    %v907 = vpack.c.bf16 %v683, %v667
    %v908 = vpack.c.bf16 %v684, %v668
    %v909 = vpack.c.bf16 %v685, %v669
    %v910 = vpack.c.bf16 %v686, %v670
    %v911 = vpack.c.bf16 %v687, %v671
    %v912 = vpack.c.bf16 %v688, %v672
    %v913 = vpack.c.bf16 %v689, %v673
    %v914 = vpack.c.bf16 %v690, %v674
    %v915 = vpack.c.bf16 %v691, %v675
    %v916 = vpack.c.bf16 %v692, %v676
    %v917 = vpack.c.bf16 %v693, %v677
    %v918 = vpack.c.bf16 %v694, %v678
    %v919 = vpack.c.bf16 %v695, %v679
    %v920 = vpack.c.bf16 %v712, %v696
    %v921 = vpack.c.bf16 %v713, %v697
    %v922 = vpack.c.bf16 %v714, %v698
    %v923 = vpack.c.bf16 %v715, %v699
    %v924 = vpack.c.bf16 %v716, %v700
    %v925 = vpack.c.bf16 %v717, %v701
    %v926 = vpack.c.bf16 %v718, %v702
    %v927 = vpack.c.bf16 %v719, %v703
    %v928 = vpack.c.bf16 %v720, %v704
    %v929 = vpack.c.bf16 %v721, %v705
    %v930 = vpack.c.bf16 %v722, %v706
    %v931 = vpack.c.bf16 %v723, %v707
    %v932 = vpack.c.bf16 %v724, %v708
    %v933 = vpack.c.bf16 %v725, %v709
    %v934 = vpack.c.bf16 %v726, %v710
    %v935 = vpack.c.bf16 %v727, %v711
    %v936 = vpack.c.bf16 %v744, %v728
    %v937 = vpack.c.bf16 %v745, %v729
    %v938 = vpack.c.bf16 %v746, %v730
    %v939 = vpack.c.bf16 %v747, %v731
    %v940 = vpack.c.bf16 %v748, %v732
    %v941 = vpack.c.bf16 %v749, %v733
    %v942 = vpack.c.bf16 %v750, %v734
    %v943 = vpack.c.bf16 %v751, %v735
    %v944 = vpack.c.bf16 %v752, %v736
    %v945 = vpack.c.bf16 %v753, %v737
    %v946 = vpack.c.bf16 %v754, %v738
    %v947 = vpack.c.bf16 %v755, %v739
    %v948 = vpack.c.bf16 %v756, %v740
    %v949 = vpack.c.bf16 %v757, %v741
    %v950 = vpack.c.bf16 %v758, %v742
    %v951 = vpack.c.bf16 %v759, %v743
    %v952 = vpack.c.bf16 %v776, %v760
    %v953 = vpack.c.bf16 %v777, %v761
    %v954 = vpack.c.bf16 %v778, %v762
    %v955 = vpack.c.bf16 %v779, %v763
    %v956 = vpack.c.bf16 %v780, %v764
    %v957 = vpack.c.bf16 %v781, %v765
    %v958 = vpack.c.bf16 %v782, %v766
    %v959 = vpack.c.bf16 %v783, %v767
    %v960 = vpack.c.bf16 %v784, %v768
    %v961 = vpack.c.bf16 %v785, %v769
    %v962 = vpack.c.bf16 %v786, %v770
    %v963 = vpack.c.bf16 %v787, %v771
    %v964 = vpack.c.bf16 %v788, %v772
    %v965 = vpack.c.bf16 %v789, %v773
    %v966 = vpack.c.bf16 %v790, %v774
    %v967 = vpack.c.bf16 %v791, %v775
    %v968 = vpack.c.bf16 %v808, %v792
    %v969 = vpack.c.bf16 %v809, %v793
    %v970 = vpack.c.bf16 %v810, %v794
    %v971 = vpack.c.bf16 %v811, %v795
    %v972 = vpack.c.bf16 %v812, %v796
    %v973 = vpack.c.bf16 %v813, %v797
    %v974 = vpack.c.bf16 %v814, %v798
    %v975 = vpack.c.bf16 %v815, %v799
    %v976 = vpack.c.bf16 %v816, %v800
    %v977 = vpack.c.bf16 %v817, %v801
    %v978 = vpack.c.bf16 %v818, %v802
    %v979 = vpack.c.bf16 %v819, %v803
    %v980 = vpack.c.bf16 %v820, %v804
    %v981 = vpack.c.bf16 %v821, %v805
    %v982 = vpack.c.bf16 %v822, %v806
    %v983 = vpack.c.bf16 %v823, %v807
    %v984 = vpack.c.bf16 %v840, %v824
    %v985 = vpack.c.bf16 %v841, %v825
    %v986 = vpack.c.bf16 %v842, %v826
    %v987 = vpack.c.bf16 %v843, %v827
    %v988 = vpack.c.bf16 %v844, %v828
    %v989 = vpack.c.bf16 %v845, %v829
    %v990 = vpack.c.bf16 %v846, %v830
    %v991 = vpack.c.bf16 %v847, %v831
    %v992 = vpack.c.bf16 %v848, %v832
    %v993 = vpack.c.bf16 %v849, %v833
    %v994 = vpack.c.bf16 %v850, %v834
    %v995 = vpack.c.bf16 %v851, %v835
    %v996 = vpack.c.bf16 %v852, %v836
    %v997 = vpack.c.bf16 %v853, %v837
    %v998 = vpack.c.bf16 %v854, %v838
    %v999 = vpack.c.bf16 %v855, %v839
    %v1000 = vpack.c.bf16 %v872, %v856
    %v1001 = vpack.c.bf16 %v873, %v857
    %v1002 = vpack.c.bf16 %v874, %v858
    %v1003 = vpack.c.bf16 %v875, %v859
    %v1004 = vpack.c.bf16 %v876, %v860
    %v1005 = vpack.c.bf16 %v877, %v861
    %v1006 = vpack.c.bf16 %v878, %v862
    %v1007 = vpack.c.bf16 %v879, %v863
    %v1008 = vpack.c.bf16 %v880, %v864
    %v1009 = vpack.c.bf16 %v881, %v865
    %v1010 = vpack.c.bf16 %v882, %v866
    %v1011 = vpack.c.bf16 %v883, %v867
    %v1012 = vpack.c.bf16 %v884, %v868
    %v1013 = vpack.c.bf16 %v885, %v869
    %v1014 = vpack.c.bf16 %v886, %v870
    %v1015 = vpack.c.bf16 %v887, %v871
    %v1016 = vld [vmem:[%s3] sm:$0xf]
    %v1017 = vld [vmem:[%s3 + $0x4] sm:$0xf]
    %v1018 = vld [vmem:[%s3 + $0x8] sm:$0xf]
    %v1019 = vld [vmem:[%s3 + $0xc] sm:$0xf]
    %v1020 = vld [vmem:[%s3 + $0x10] sm:$0xf]
    %v1021 = vld [vmem:[%s3 + $0x14] sm:$0xf]
    %v1022 = vld [vmem:[%s3 + $0x18] sm:$0xf]
    %v1023 = vld [vmem:[%s3 + $0x1c] sm:$0xf]
    %v1024 = vld [vmem:[%s3 + $0x20] sm:$0xf]
    %v1025 = vld [vmem:[%s3 + $0x24] sm:$0xf]
    %v1026 = vld [vmem:[%s3 + $0x28] sm:$0xf]
    %v1027 = vld [vmem:[%s3 + $0x2c] sm:$0xf]
    %v1028 = vld [vmem:[%s3 + $0x30] sm:$0xf]
    %v1029 = vld [vmem:[%s3 + $0x34] sm:$0xf]
    %v1030 = vld [vmem:[%s3 + $0x38] sm:$0xf]
    %v1031 = vld [vmem:[%s3 + $0x3c] sm:$0xf]
    %v1032 = vld [vmem:[%s3 + $0x40] sm:$0xf]
    %v1033 = vld [vmem:[%s3 + $0x44] sm:$0xf]
    %v1034 = vld [vmem:[%s3 + $0x48] sm:$0xf]
    %v1035 = vld [vmem:[%s3 + $0x4c] sm:$0xf]
    %v1056 = vunpack.c.l.b16 %v1016
    %v1057 = vunpack.c.l.b16 %v1017
    %v1058 = vunpack.c.l.b16 %v1018
    %v1059 = vunpack.c.l.b16 %v1019
    %v1060 = vunpack.c.l.b16 %v1020
    %v1061 = vunpack.c.l.b16 %v1021
    %v1062 = vunpack.c.l.b16 %v1022
    %v1063 = vunpack.c.l.b16 %v1023
    %v1064 = vunpack.c.l.b16 %v1024
    %v1065 = vunpack.c.l.b16 %v1025
    %v1066 = vunpack.c.l.b16 %v1026
    %v1067 = vunpack.c.l.b16 %v1027
    %v1068 = vunpack.c.l.b16 %v1028
    %v1069 = vunpack.c.l.b16 %v1029
    %v1070 = vunpack.c.l.b16 %v1030
    %v1071 = vunpack.c.l.b16 %v1031
    %v1072 = vunpack.c.l.b16 %v1032
    %v1073 = vunpack.c.l.b16 %v1033
    %v1074 = vunpack.c.l.b16 %v1034
    %v1075 = vunpack.c.l.b16 %v1035
    %v1076 = vpack.c.b16 %v1057, %v1056
    %v1077 = vpack.c.b16 %v1059, %v1058
    %v1078 = vpack.c.b16 %v1061, %v1060
    %v1079 = vpack.c.b16 %v1063, %v1062
    %v1080 = vpack.c.b16 %v1065, %v1064
    %v1081 = vpack.c.b16 %v1067, %v1066
    %v1082 = vpack.c.b16 %v1069, %v1068
    %v1083 = vpack.c.b16 %v1071, %v1070
    %v1084 = vpack.c.b16 %v1073, %v1072
    %v1085 = vpack.c.b16 %v1075, %v1074
    %1096 = vmatprep.subr.bf16.mxu0 %v889
    %1097 = vmatpush1.bf16.msra.mxu0 %v888
    %1098 = vmatprep.subr.bf16.mxu0 %v905
    %1099 = vmatpush1.bf16.msra.mxu0 %v904
    %1100 = vmatprep.subr.bf16.mxu0 %v921
    %1101 = vmatpush1.bf16.msra.mxu0 %v920
    %1102 = vmatprep.subr.bf16.mxu0 %v937
    %1103 = vmatpush1.bf16.msra.mxu0 %v936
    %1104 = vmatprep.subr.bf16.mxu0 %v953
    %1105 = vmatpush1.bf16.msra.mxu0 %v952
    %1106 = vmatprep.subr.bf16.mxu0 %v969
    %1107 = vmatpush1.bf16.msra.mxu0 %v968
    %1108 = vmatprep.subr.bf16.mxu0 %v985
    %1109 = vmatpush1.bf16.msra.mxu0 %v984
    %1110 = vmatprep.subr.bf16.mxu0 %v1001
    %1111 = vmatpush1.bf16.msra.mxu0 %v1000
    %1112 = vmatprep.subr.bf16.mxu0 0
    %1113 = vmatpush1.bf16.msra.mxu0 0
    %1114 = vmatprep.subr.bf16.mxu0 0
    %1115 = vmatpush1.bf16.msra.mxu0 0
    %1116 = vmatprep.subr.bf16.mxu0 0
    %1117 = vmatpush1.bf16.msra.mxu0 0
    %1118 = vmatprep.subr.bf16.mxu0 0
    %1119 = vmatpush1.bf16.msra.mxu0 0
    %1120 = vmatprep.subr.bf16.mxu0 0
    %1121 = vmatpush1.bf16.msra.mxu0 0
    %1122 = vmatprep.subr.bf16.mxu0 0
    %1123 = vmatpush1.bf16.msra.mxu0 0
    %1124 = vmatprep.subr.bf16.mxu0 0
    %1125 = vmatpush1.bf16.msra.mxu0 0
    %1126 = vmatprep.subr.bf16.mxu0 0
    %1127 = vmatpush1.bf16.msra.mxu0 0
    %1128 = vmatprep.mubr.bf16.mxu0 0
    %1129 = vmatmul.mubr.bf16.gmra.mrb[0].mxu0 %v1076
    %v1130 = vpop.f32.mrb[0].mxu0
    %v1131 = vadd.f32 0.0, %v1130
    %v1132 = vpop.f32.mrb[0].mxu0
    %v1133 = vadd.f32 0.0, %v1132
    %v1134 = vpop.f32.mrb[0].mxu0
    %v1135 = vadd.f32 0.0, %v1134
    %v1136 = vpop.f32.mrb[0].mxu0
    %v1137 = vadd.f32 0.0, %v1136
    %1138 = vmatprep.mubr.bf16.mxu0 0
    %1139 = vmatmul.mubr.bf16.gmra.mrb[0].mxu0 %v1077
    %v1140 = vpop.f32.mrb[0].mxu0
    %v1141 = vadd.f32 0.0, %v1140
    %v1142 = vpop.f32.mrb[0].mxu0
    %v1143 = vadd.f32 0.0, %v1142
    %v1144 = vpop.f32.mrb[0].mxu0
    %v1145 = vadd.f32 0.0, %v1144
    %v1146 = vpop.f32.mrb[0].mxu0
    %v1147 = vadd.f32 0.0, %v1146
    %1148 = vmatprep.mubr.bf16.mxu0 0
    %1149 = vmatmul.mubr.bf16.gmra.mrb[0].mxu0 %v1078
    %v1150 = vpop.f32.mrb[0].mxu0
    %v1151 = vpop.f32.mrb[0].mxu0
    %v1152 = vadd.f32 0.0, %v1151
    %v1153 = vpop.f32.mrb[0].mxu0
    %v1154 = vpop.f32.mrb[0].mxu0
    %v1155 = vadd.f32 0.0, %v1154
    %1156 = vmatprep.mubr.bf16.mxu0 0
    %1157 = vmatmul.mubr.bf16.gmra.mrb[0].mxu0 %v1079
    %v1158 = vpop.f32.mrb[0].mxu0
    %v1159 = vpop.f32.mrb[0].mxu0
    %v1160 = vadd.f32 0.0, %v1159
    %v1161 = vpop.f32.mrb[0].mxu0
    %v1162 = vpop.f32.mrb[0].mxu0
    %v1163 = vadd.f32 0.0, %v1162
    %1164 = vmatprep.mubr.bf16.mxu0 0
    %1165 = vmatmul.mubr.bf16.gmra.mrb[0].mxu0 %v1080
    %v1166 = vpop.f32.mrb[0].mxu0
    %v1167 = vpop.f32.mrb[0].mxu0
    %v1168 = vpop.f32.mrb[0].mxu0
    %v1169 = vpop.f32.mrb[0].mxu0
    %1170 = vmatprep.mubr.bf16.mxu0 0
    %1171 = vmatmul.mubr.bf16.gmra.mrb[0].mxu0 %v1081
    %v1172 = vpop.f32.mrb[0].mxu0
    %v1173 = vpop.f32.mrb[0].mxu0
    %v1174 = vpop.f32.mrb[0].mxu0
    %v1175 = vpop.f32.mrb[0].mxu0
    %1176 = vmatprep.mubr.bf16.mxu0 0
    %1177 = vmatmul.mubr.bf16.gmra.mrb[0].mxu0 %v1082
    %v1178 = vpop.f32.mrb[0].mxu0
    %v1179 = vpop.f32.mrb[0].mxu0
    %v1180 = vpop.f32.mrb[0].mxu0
    %v1181 = vpop.f32.mrb[0].mxu0
    %1182 = vmatprep.mubr.bf16.mxu0 0
    %1183 = vmatmul.mubr.bf16.gmra.mrb[0].mxu0 %v1083
    %v1184 = vpop.f32.mrb[0].mxu0
    %v1185 = vpop.f32.mrb[0].mxu0
    %v1186 = vpop.f32.mrb[0].mxu0
    %v1187 = vpop.f32.mrb[0].mxu0
    %1188 = vmatprep.mubr.bf16.mxu0 0
    %1189 = vmatmul.mubr.bf16.gmra.mrb[0].mxu0 %v1084
    %v1190 = vpop.f32.mrb[0].mxu0
    %v1191 = vpop.f32.mrb[0].mxu0
    %v1192 = vpop.f32.mrb[0].mxu0
    %v1193 = vpop.f32.mrb[0].mxu0
    %1194 = vmatprep.mubr.bf16.mxu0 0
    %1195 = vmatmul.mubr.bf16.gmra.mrb[0].mxu0 %v1085
    %v1196 = vpop.f32.mrb[0].mxu0
    %v1197 = vpop.f32.mrb[0].mxu0
    %v1198 = vpop.f32.mrb[0].mxu0
    %v1199 = vpop.f32.mrb[0].mxu0
    %1200 = vdwg.mxu0
    %1201 = vmatprep.subr.bf16.mxu0 %v891
    %1202 = vmatpush1.bf16.msra.mxu0 %v890
    %1203 = vmatprep.subr.bf16.mxu0 %v907
    %1204 = vmatpush1.bf16.msra.mxu0 %v906
    %1205 = vmatprep.subr.bf16.mxu0 %v923
    %1206 = vmatpush1.bf16.msra.mxu0 %v922
    %1207 = vmatprep.subr.bf16.mxu0 %v939
    %1208 = vmatpush1.bf16.msra.mxu0 %v938
    %1209 = vmatprep.subr.bf16.mxu0 %v955
    %1210 = vmatpush1.bf16.msra.mxu0 %v954
    %1211 = vmatprep.subr.bf16.mxu0 %v971
    %1212 = vmatpush1.bf16.msra.mxu0 %v970
    %1213 = vmatprep.subr.bf16.mxu0 %v987
    %1214 = vmatpush1.bf16.msra.mxu0 %v986
    %1215 = vmatprep.subr.bf16.mxu0 %v1003
    %1216 = vmatpush1.bf16.msra.mxu0 %v1002
    %1217 = vmatprep.subr.bf16.mxu0 0
    %1218 = vmatpush1.bf16.msra.mxu0 0
    %1219 = vmatprep.subr.bf16.mxu0 0
    %1220 = vmatpush1.bf16.msra.mxu0 0
    %1221 = vmatprep.subr.bf16.mxu0 0
    %1222 = vmatpush1.bf16.msra.mxu0 0
    %1223 = vmatprep.subr.bf16.mxu0 0
    %1224 = vmatpush1.bf16.msra.mxu0 0
    %1225 = vmatprep.subr.bf16.mxu0 0
    %1226 = vmatpush1.bf16.msra.mxu0 0
    %1227 = vmatprep.subr.bf16.mxu0 0
    %1228 = vmatpush1.bf16.msra.mxu0 0
    %1229 = vmatprep.subr.bf16.mxu0 0
    %1230 = vmatpush1.bf16.msra.mxu0 0
    %1231 = vmatprep.subr.bf16.mxu0 0
    %1232 = vmatpush1.bf16.msra.mxu0 0
    %1233 = vmatprep.mubr.bf16.mxu0 0
    %1234 = vmatmul.mubr.bf16.gmra.mrb[0].mxu0 %v1076
    %v1235 = vpop.f32.mrb[0].mxu0
    %v1236 = vadd.f32 0.0, %v1235
    %v1237 = vpop.f32.mrb[0].mxu0
    %v1238 = vadd.f32 0.0, %v1237
    %v1239 = vpop.f32.mrb[0].mxu0
    %v1240 = vadd.f32 0.0, %v1239
    %v1241 = vpop.f32.mrb[0].mxu0
    %v1242 = vadd.f32 0.0, %v1241
    %1243 = vmatprep.mubr.bf16.mxu0 0
    %1244 = vmatmul.mubr.bf16.gmra.mrb[0].mxu0 %v1077
    %v1245 = vpop.f32.mrb[0].mxu0
    %v1246 = vadd.f32 0.0, %v1245
    %v1247 = vpop.f32.mrb[0].mxu0
    %v1248 = vadd.f32 0.0, %v1247
    %v1249 = vpop.f32.mrb[0].mxu0
    %v1250 = vadd.f32 0.0, %v1249
    %v1251 = vpop.f32.mrb[0].mxu0
    %v1252 = vadd.f32 0.0, %v1251
    %1253 = vmatprep.mubr.bf16.mxu0 0
    %1254 = vmatmul.mubr.bf16.gmra.mrb[0].mxu0 %v1078
    %v1255 = vpop.f32.mrb[0].mxu0
    %v1256 = vadd.f32 0.0, %v1255
    %v1257 = vpop.f32.mrb[0].mxu0
    %v1258 = vadd.f32 0.0, %v1257
    %v1259 = vpop.f32.mrb[0].mxu0
    %v1260 = vadd.f32 0.0, %v1259
    %v1261 = vpop.f32.mrb[0].mxu0
    %v1262 = vadd.f32 0.0, %v1261
    %1263 = vmatprep.mubr.bf16.mxu0 0
    %1264 = vmatmul.mubr.bf16.gmra.mrb[0].mxu0 %v1079
    %v1265 = vpop.f32.mrb[0].mxu0
    %v1266 = vadd.f32 0.0, %v1265
    %v1267 = vpop.f32.mrb[0].mxu0
    %v1268 = vadd.f32 0.0, %v1267
    %v1269 = vpop.f32.mrb[0].mxu0
    %v1270 = vadd.f32 0.0, %v1269
    %v1271 = vpop.f32.mrb[0].mxu0
    %v1272 = vadd.f32 0.0, %v1271
    %1273 = vmatprep.mubr.bf16.mxu0 0
    %1274 = vmatmul.mubr.bf16.gmra.mrb[0].mxu0 %v1080
    %v1275 = vpop.f32.mrb[0].mxu0
    %v1276 = vadd.f32 0.0, %v1275
    %v1277 = vpop.f32.mrb[0].mxu0
    %v1278 = vadd.f32 0.0, %v1277
    %v1279 = vpop.f32.mrb[0].mxu0
    %v1280 = vadd.f32 0.0, %v1279
    %v1281 = vpop.f32.mrb[0].mxu0
    %v1282 = vadd.f32 0.0, %v1281
    %1283 = vmatprep.mubr.bf16.mxu0 0
    %1284 = vmatmul.mubr.bf16.gmra.mrb[0].mxu0 %v1081
    %v1285 = vpop.f32.mrb[0].mxu0
    %v1286 = vadd.f32 0.0, %v1285
    %v1287 = vpop.f32.mrb[0].mxu0
    %v1288 = vadd.f32 0.0, %v1287
    %v1289 = vpop.f32.mrb[0].mxu0
    %v1290 = vadd.f32 0.0, %v1289
    %v1291 = vpop.f32.mrb[0].mxu0
    %v1292 = vadd.f32 0.0, %v1291
    %1293 = vmatprep.mubr.bf16.mxu0 0
    %1294 = vmatmul.mubr.bf16.gmra.mrb[0].mxu0 %v1082
    %v1295 = vpop.f32.mrb[0].mxu0
    %v1296 = vpop.f32.mrb[0].mxu0
    %v1297 = vadd.f32 0.0, %v1296
    %v1298 = vpop.f32.mrb[0].mxu0
    %v1299 = vpop.f32.mrb[0].mxu0
    %v1300 = vadd.f32 0.0, %v1299
    %1301 = vmatprep.mubr.bf16.mxu0 0
    %1302 = vmatmul.mubr.bf16.gmra.mrb[0].mxu0 %v1083
    %v1303 = vpop.f32.mrb[0].mxu0
    %v1304 = vpop.f32.mrb[0].mxu0
    %v1305 = vadd.f32 0.0, %v1304
    %v1306 = vpop.f32.mrb[0].mxu0
    %v1307 = vpop.f32.mrb[0].mxu0
    %v1308 = vadd.f32 0.0, %v1307
    %1309 = vmatprep.mubr.bf16.mxu0 0
    %1310 = vmatmul.mubr.bf16.gmra.mrb[0].mxu0 %v1084
    %v1311 = vpop.f32.mrb[0].mxu0
    %v1312 = vpop.f32.mrb[0].mxu0
    %v1313 = vpop.f32.mrb[0].mxu0
    %v1314 = vpop.f32.mrb[0].mxu0
    %1315 = vmatprep.mubr.bf16.mxu0 0
    %1316 = vmatmul.mubr.bf16.gmra.mrb[0].mxu0 %v1085
    %v1317 = vpop.f32.mrb[0].mxu0
    %v1318 = vpop.f32.mrb[0].mxu0
    %v1319 = vpop.f32.mrb[0].mxu0
    %v1320 = vpop.f32.mrb[0].mxu0
    %1321 = vdwg.mxu0
    %1322 = vmatprep.subr.bf16.mxu0 %v893
    %1323 = vmatpush1.bf16.msra.mxu0 %v892
    %1324 = vmatprep.subr.bf16.mxu0 %v909
    %1325 = vmatpush1.bf16.msra.mxu0 %v908
    %1326 = vmatprep.subr.bf16.mxu0 %v925
    %1327 = vmatpush1.bf16.msra.mxu0 %v924
    %1328 = vmatprep.subr.bf16.mxu0 %v941
    %1329 = vmatpush1.bf16.msra.mxu0 %v940
    %1330 = vmatprep.subr.bf16.mxu0 %v957
    %1331 = vmatpush1.bf16.msra.mxu0 %v956
    %1332 = vmatprep.subr.bf16.mxu0 %v973
    %1333 = vmatpush1.bf16.msra.mxu0 %v972
    %1334 = vmatprep.subr.bf16.mxu0 %v989
    %1335 = vmatpush1.bf16.msra.mxu0 %v988
    %1336 = vmatprep.subr.bf16.mxu0 %v1005
    %1337 = vmatpush1.bf16.msra.mxu0 %v1004
    %1338 = vmatprep.subr.bf16.mxu0 0
    %1339 = vmatpush1.bf16.msra.mxu0 0
    %1340 = vmatprep.subr.bf16.mxu0 0
    %1341 = vmatpush1.bf16.msra.mxu0 0
    %1342 = vmatprep.subr.bf16.mxu0 0
    %1343 = vmatpush1.bf16.msra.mxu0 0
    %1344 = vmatprep.subr.bf16.mxu0 0
    %1345 = vmatpush1.bf16.msra.mxu0 0
    %1346 = vmatprep.subr.bf16.mxu0 0
    %1347 = vmatpush1.bf16.msra.mxu0 0
    %1348 = vmatprep.subr.bf16.mxu0 0
    %1349 = vmatpush1.bf16.msra.mxu0 0
    %1350 = vmatprep.subr.bf16.mxu0 0
    %1351 = vmatpush1.bf16.msra.mxu0 0
    %1352 = vmatprep.subr.bf16.mxu0 0
    %1353 = vmatpush1.bf16.msra.mxu0 0
    %1354 = vmatprep.mubr.bf16.mxu0 0
    %1355 = vmatmul.mubr.bf16.gmra.mrb[0].mxu0 %v1076
    %v1356 = vpop.f32.mrb[0].mxu0
    %v1357 = vadd.f32 0.0, %v1356
    %v1358 = vpop.f32.mrb[0].mxu0
    %v1359 = vadd.f32 0.0, %v1358
    %v1360 = vpop.f32.mrb[0].mxu0
    %v1361 = vadd.f32 0.0, %v1360
    %v1362 = vpop.f32.mrb[0].mxu0
    %v1363 = vadd.f32 0.0, %v1362
    %1364 = vmatprep.mubr.bf16.mxu0 0
    %1365 = vmatmul.mubr.bf16.gmra.mrb[0].mxu0 %v1077
    %v1366 = vpop.f32.mrb[0].mxu0
    %v1367 = vadd.f32 0.0, %v1366
    %v1368 = vpop.f32.mrb[0].mxu0
    %v1369 = vadd.f32 0.0, %v1368
    %v1370 = vpop.f32.mrb[0].mxu0
    %v1371 = vadd.f32 0.0, %v1370
    %v1372 = vpop.f32.mrb[0].mxu0
    %v1373 = vadd.f32 0.0, %v1372
    %1374 = vmatprep.mubr.bf16.mxu0 0
    %1375 = vmatmul.mubr.bf16.gmra.mrb[0].mxu0 %v1078
    %v1376 = vpop.f32.mrb[0].mxu0
    %v1377 = vadd.f32 0.0, %v1376
    %v1378 = vpop.f32.mrb[0].mxu0
    %v1379 = vadd.f32 0.0, %v1378
    %v1380 = vpop.f32.mrb[0].mxu0
    %v1381 = vadd.f32 0.0, %v1380
    %v1382 = vpop.f32.mrb[0].mxu0
    %v1383 = vadd.f32 0.0, %v1382
    %1384 = vmatprep.mubr.bf16.mxu0 0
    %1385 = vmatmul.mubr.bf16.gmra.mrb[0].mxu0 %v1079
    %v1386 = vpop.f32.mrb[0].mxu0
    %v1387 = vadd.f32 0.0, %v1386
    %v1388 = vpop.f32.mrb[0].mxu0
    %v1389 = vadd.f32 0.0, %v1388
    %v1390 = vpop.f32.mrb[0].mxu0
    %v1391 = vadd.f32 0.0, %v1390
    %v1392 = vpop.f32.mrb[0].mxu0
    %v1393 = vadd.f32 0.0, %v1392
    %1394 = vmatprep.mubr.bf16.mxu0 0
    %1395 = vmatmul.mubr.bf16.gmra.mrb[0].mxu0 %v1080
    %v1396 = vpop.f32.mrb[0].mxu0
    %v1397 = vadd.f32 0.0, %v1396
    %v1398 = vpop.f32.mrb[0].mxu0
    %v1399 = vadd.f32 0.0, %v1398
    %v1400 = vpop.f32.mrb[0].mxu0
    %v1401 = vadd.f32 0.0, %v1400
    %v1402 = vpop.f32.mrb[0].mxu0
    %v1403 = vadd.f32 0.0, %v1402
    %1404 = vmatprep.mubr.bf16.mxu0 0
    %1405 = vmatmul.mubr.bf16.gmra.mrb[0].mxu0 %v1081
    %v1406 = vpop.f32.mrb[0].mxu0
    %v1407 = vadd.f32 0.0, %v1406
    %v1408 = vpop.f32.mrb[0].mxu0
    %v1409 = vadd.f32 0.0, %v1408
    %v1410 = vpop.f32.mrb[0].mxu0
    %v1411 = vadd.f32 0.0, %v1410
    %v1412 = vpop.f32.mrb[0].mxu0
    %v1413 = vadd.f32 0.0, %v1412
    %1414 = vmatprep.mubr.bf16.mxu0 0
    %1415 = vmatmul.mubr.bf16.gmra.mrb[0].mxu0 %v1082
    %v1416 = vpop.f32.mrb[0].mxu0
    %v1417 = vadd.f32 0.0, %v1416
    %v1418 = vpop.f32.mrb[0].mxu0
    %v1419 = vadd.f32 0.0, %v1418
    %v1420 = vpop.f32.mrb[0].mxu0
    %v1421 = vadd.f32 0.0, %v1420
    %v1422 = vpop.f32.mrb[0].mxu0
    %v1423 = vadd.f32 0.0, %v1422
    %1424 = vmatprep.mubr.bf16.mxu0 0
    %1425 = vmatmul.mubr.bf16.gmra.mrb[0].mxu0 %v1083
    %v1426 = vpop.f32.mrb[0].mxu0
    %v1427 = vadd.f32 0.0, %v1426
    %v1428 = vpop.f32.mrb[0].mxu0
    %v1429 = vadd.f32 0.0, %v1428
    %v1430 = vpop.f32.mrb[0].mxu0
    %v1431 = vadd.f32 0.0, %v1430
    %v1432 = vpop.f32.mrb[0].mxu0
    %v1433 = vadd.f32 0.0, %v1432
    %1434 = vmatprep.mubr.bf16.mxu0 0
    %1435 = vmatmul.mubr.bf16.gmra.mrb[0].mxu0 %v1084
    %v1436 = vpop.f32.mrb[0].mxu0
    %v1437 = vadd.f32 0.0, %v1436
    %v1438 = vpop.f32.mrb[0].mxu0
    %v1439 = vadd.f32 0.0, %v1438
    %v1440 = vpop.f32.mrb[0].mxu0
    %v1441 = vadd.f32 0.0, %v1440
    %v1442 = vpop.f32.mrb[0].mxu0
    %v1443 = vadd.f32 0.0, %v1442
    %1444 = vmatprep.mubr.bf16.mxu0 0
    %1445 = vmatmul.mubr.bf16.gmra.mrb[0].mxu0 %v1085
    %v1446 = vpop.f32.mrb[0].mxu0
    %v1447 = vadd.f32 0.0, %v1446
    %v1448 = vpop.f32.mrb[0].mxu0
    %v1449 = vadd.f32 0.0, %v1448
    %v1450 = vpop.f32.mrb[0].mxu0
    %v1451 = vadd.f32 0.0, %v1450
    %v1452 = vpop.f32.mrb[0].mxu0
    %v1453 = vadd.f32 0.0, %v1452
    %1454 = vdwg.mxu0
    %1455 = vmatprep.subr.bf16.mxu0 %v895
    %1456 = vmatpush1.bf16.msra.mxu0 %v894
    %1457 = vmatprep.subr.bf16.mxu0 %v911
    %1458 = vmatpush1.bf16.msra.mxu0 %v910
    %1459 = vmatprep.subr.bf16.mxu0 %v927
    %1460 = vmatpush1.bf16.msra.mxu0 %v926
    %1461 = vmatprep.subr.bf16.mxu0 %v943
    %1462 = vmatpush1.bf16.msra.mxu0 %v942
    %1463 = vmatprep.subr.bf16.mxu0 %v959
    %1464 = vmatpush1.bf16.msra.mxu0 %v958
    %1465 = vmatprep.subr.bf16.mxu0 %v975
    %1466 = vmatpush1.bf16.msra.mxu0 %v974
    %1467 = vmatprep.subr.bf16.mxu0 %v991
    %1468 = vmatpush1.bf16.msra.mxu0 %v990
    %1469 = vmatprep.subr.bf16.mxu0 %v1007
    %1470 = vmatpush1.bf16.msra.mxu0 %v1006
    %1471 = vmatprep.subr.bf16.mxu0 0
    %1472 = vmatpush1.bf16.msra.mxu0 0
    %1473 = vmatprep.subr.bf16.mxu0 0
    %1474 = vmatpush1.bf16.msra.mxu0 0
    %1475 = vmatprep.subr.bf16.mxu0 0
    %1476 = vmatpush1.bf16.msra.mxu0 0
    %1477 = vmatprep.subr.bf16.mxu0 0
    %1478 = vmatpush1.bf16.msra.mxu0 0
    %1479 = vmatprep.subr.bf16.mxu0 0
    %1480 = vmatpush1.bf16.msra.mxu0 0
    %1481 = vmatprep.subr.bf16.mxu0 0
    %1482 = vmatpush1.bf16.msra.mxu0 0
    %1483 = vmatprep.subr.bf16.mxu0 0
    %1484 = vmatpush1.bf16.msra.mxu0 0
    %1485 = vmatprep.subr.bf16.mxu0 0
    %1486 = vmatpush1.bf16.msra.mxu0 0
    %1487 = vmatprep.mubr.bf16.mxu0 0
    %1488 = vmatmul.mubr.bf16.gmra.mrb[0].mxu0 %v1076
    %v1489 = vpop.f32.mrb[0].mxu0
    %v1490 = vadd.f32 0.0, %v1489
    %v1491 = vpop.f32.mrb[0].mxu0
    %v1492 = vadd.f32 0.0, %v1491
    %v1493 = vpop.f32.mrb[0].mxu0
    %v1494 = vadd.f32 0.0, %v1493
    %v1495 = vpop.f32.mrb[0].mxu0
    %v1496 = vadd.f32 0.0, %v1495
    %1497 = vmatprep.mubr.bf16.mxu0 0
    %1498 = vmatmul.mubr.bf16.gmra.mrb[0].mxu0 %v1077
    %v1499 = vpop.f32.mrb[0].mxu0
    %v1500 = vadd.f32 0.0, %v1499
    %v1501 = vpop.f32.mrb[0].mxu0
    %v1502 = vadd.f32 0.0, %v1501
    %v1503 = vpop.f32.mrb[0].mxu0
    %v1504 = vadd.f32 0.0, %v1503
    %v1505 = vpop.f32.mrb[0].mxu0
    %v1506 = vadd.f32 0.0, %v1505
    %1507 = vmatprep.mubr.bf16.mxu0 0
    %1508 = vmatmul.mubr.bf16.gmra.mrb[0].mxu0 %v1078
    %v1509 = vpop.f32.mrb[0].mxu0
    %v1510 = vadd.f32 0.0, %v1509
    %v1511 = vpop.f32.mrb[0].mxu0
    %v1512 = vadd.f32 0.0, %v1511
    %v1513 = vpop.f32.mrb[0].mxu0
    %v1514 = vadd.f32 0.0, %v1513
    %v1515 = vpop.f32.mrb[0].mxu0
    %v1516 = vadd.f32 0.0, %v1515
    %1517 = vmatprep.mubr.bf16.mxu0 0
    %1518 = vmatmul.mubr.bf16.gmra.mrb[0].mxu0 %v1079
    %v1519 = vpop.f32.mrb[0].mxu0
    %v1520 = vadd.f32 0.0, %v1519
    %v1521 = vpop.f32.mrb[0].mxu0
    %v1522 = vadd.f32 0.0, %v1521
    %v1523 = vpop.f32.mrb[0].mxu0
    %v1524 = vadd.f32 0.0, %v1523
    %v1525 = vpop.f32.mrb[0].mxu0
    %v1526 = vadd.f32 0.0, %v1525
    %1527 = vmatprep.mubr.bf16.mxu0 0
    %1528 = vmatmul.mubr.bf16.gmra.mrb[0].mxu0 %v1080
    %v1529 = vpop.f32.mrb[0].mxu0
    %v1530 = vadd.f32 0.0, %v1529
    %v1531 = vpop.f32.mrb[0].mxu0
    %v1532 = vadd.f32 0.0, %v1531
    %v1533 = vpop.f32.mrb[0].mxu0
    %v1534 = vadd.f32 0.0, %v1533
    %v1535 = vpop.f32.mrb[0].mxu0
    %v1536 = vadd.f32 0.0, %v1535
    %1537 = vmatprep.mubr.bf16.mxu0 0
    %1538 = vmatmul.mubr.bf16.gmra.mrb[0].mxu0 %v1081
    %v1539 = vpop.f32.mrb[0].mxu0
    %v1540 = vadd.f32 0.0, %v1539
    %v1541 = vpop.f32.mrb[0].mxu0
    %v1542 = vadd.f32 0.0, %v1541
    %v1543 = vpop.f32.mrb[0].mxu0
    %v1544 = vadd.f32 0.0, %v1543
    %v1545 = vpop.f32.mrb[0].mxu0
    %v1546 = vadd.f32 0.0, %v1545
    %1547 = vmatprep.mubr.bf16.mxu0 0
    %1548 = vmatmul.mubr.bf16.gmra.mrb[0].mxu0 %v1082
    %v1549 = vpop.f32.mrb[0].mxu0
    %v1550 = vadd.f32 0.0, %v1549
    %v1551 = vpop.f32.mrb[0].mxu0
    %v1552 = vadd.f32 0.0, %v1551
    %v1553 = vpop.f32.mrb[0].mxu0
    %v1554 = vadd.f32 0.0, %v1553
    %v1555 = vpop.f32.mrb[0].mxu0
    %v1556 = vadd.f32 0.0, %v1555
    %1557 = vmatprep.mubr.bf16.mxu0 0
    %1558 = vmatmul.mubr.bf16.gmra.mrb[0].mxu0 %v1083
    %v1559 = vpop.f32.mrb[0].mxu0
    %v1560 = vadd.f32 0.0, %v1559
    %v1561 = vpop.f32.mrb[0].mxu0
    %v1562 = vadd.f32 0.0, %v1561
    %v1563 = vpop.f32.mrb[0].mxu0
    %v1564 = vadd.f32 0.0, %v1563
    %v1565 = vpop.f32.mrb[0].mxu0
    %v1566 = vadd.f32 0.0, %v1565
    %1567 = vmatprep.mubr.bf16.mxu0 0
    %1568 = vmatmul.mubr.bf16.gmra.mrb[0].mxu0 %v1084
    %v1569 = vpop.f32.mrb[0].mxu0
    %v1570 = vadd.f32 0.0, %v1569
    %v1571 = vpop.f32.mrb[0].mxu0
    %v1572 = vadd.f32 0.0, %v1571
    %v1573 = vpop.f32.mrb[0].mxu0
    %v1574 = vadd.f32 0.0, %v1573
    %v1575 = vpop.f32.mrb[0].mxu0
    %v1576 = vadd.f32 0.0, %v1575
    %1577 = vmatprep.mubr.bf16.mxu0 0
    %1578 = vmatmul.mubr.bf16.gmra.mrb[0].mxu0 %v1085
    %v1579 = vpop.f32.mrb[0].mxu0
    %v1580 = vadd.f32 0.0, %v1579
    %v1581 = vpop.f32.mrb[0].mxu0
    %v1582 = vadd.f32 0.0, %v1581
    %v1583 = vpop.f32.mrb[0].mxu0
    %v1584 = vadd.f32 0.0, %v1583
    %v1585 = vpop.f32.mrb[0].mxu0
    %v1586 = vadd.f32 0.0, %v1585
    %1587 = vdwg.mxu0
    %1588 = vmatprep.subr.bf16.mxu0 %v897
    %1589 = vmatpush1.bf16.msra.mxu0 %v896
    %1590 = vmatprep.subr.bf16.mxu0 %v913
    %1591 = vmatpush1.bf16.msra.mxu0 %v912
    %1592 = vmatprep.subr.bf16.mxu0 %v929
    %1593 = vmatpush1.bf16.msra.mxu0 %v928
    %1594 = vmatprep.subr.bf16.mxu0 %v945
    %1595 = vmatpush1.bf16.msra.mxu0 %v944
    %1596 = vmatprep.subr.bf16.mxu0 %v961
    %1597 = vmatpush1.bf16.msra.mxu0 %v960
    %1598 = vmatprep.subr.bf16.mxu0 %v977
    %1599 = vmatpush1.bf16.msra.mxu0 %v976
    %1600 = vmatprep.subr.bf16.mxu0 %v993
    %1601 = vmatpush1.bf16.msra.mxu0 %v992
    %1602 = vmatprep.subr.bf16.mxu0 %v1009
    %1603 = vmatpush1.bf16.msra.mxu0 %v1008
    %1604 = vmatprep.subr.bf16.mxu0 0
    %1605 = vmatpush1.bf16.msra.mxu0 0
    %1606 = vmatprep.subr.bf16.mxu0 0
    %1607 = vmatpush1.bf16.msra.mxu0 0
    %1608 = vmatprep.subr.bf16.mxu0 0
    %1609 = vmatpush1.bf16.msra.mxu0 0
    %1610 = vmatprep.subr.bf16.mxu0 0
    %1611 = vmatpush1.bf16.msra.mxu0 0
    %1612 = vmatprep.subr.bf16.mxu0 0
    %1613 = vmatpush1.bf16.msra.mxu0 0
    %1614 = vmatprep.subr.bf16.mxu0 0
    %1615 = vmatpush1.bf16.msra.mxu0 0
    %1616 = vmatprep.subr.bf16.mxu0 0
    %1617 = vmatpush1.bf16.msra.mxu0 0
    %1618 = vmatprep.subr.bf16.mxu0 0
    %1619 = vmatpush1.bf16.msra.mxu0 0
    %1620 = vmatprep.mubr.bf16.mxu0 0
    %1621 = vmatmul.mubr.bf16.gmra.mrb[0].mxu0 %v1076
    %v1622 = vpop.f32.mrb[0].mxu0
    %v1623 = vadd.f32 0.0, %v1622
    %v1624 = vpop.f32.mrb[0].mxu0
    %v1625 = vadd.f32 0.0, %v1624
    %v1626 = vpop.f32.mrb[0].mxu0
    %v1627 = vadd.f32 0.0, %v1626
    %v1628 = vpop.f32.mrb[0].mxu0
    %v1629 = vadd.f32 0.0, %v1628
    %1630 = vmatprep.mubr.bf16.mxu0 0
    %1631 = vmatmul.mubr.bf16.gmra.mrb[0].mxu0 %v1077
    %v1632 = vpop.f32.mrb[0].mxu0
    %v1633 = vadd.f32 0.0, %v1632
    %v1634 = vpop.f32.mrb[0].mxu0
    %v1635 = vadd.f32 0.0, %v1634
    %v1636 = vpop.f32.mrb[0].mxu0
    %v1637 = vadd.f32 0.0, %v1636
    %v1638 = vpop.f32.mrb[0].mxu0
    %v1639 = vadd.f32 0.0, %v1638
    %1640 = vmatprep.mubr.bf16.mxu0 0
    %1641 = vmatmul.mubr.bf16.gmra.mrb[0].mxu0 %v1078
    %v1642 = vpop.f32.mrb[0].mxu0
    %v1643 = vadd.f32 0.0, %v1642
    %v1644 = vpop.f32.mrb[0].mxu0
    %v1645 = vadd.f32 0.0, %v1644
    %v1646 = vpop.f32.mrb[0].mxu0
    %v1647 = vadd.f32 0.0, %v1646
    %v1648 = vpop.f32.mrb[0].mxu0
    %v1649 = vadd.f32 0.0, %v1648
    %1650 = vmatprep.mubr.bf16.mxu0 0
    %1651 = vmatmul.mubr.bf16.gmra.mrb[0].mxu0 %v1079
    %v1652 = vpop.f32.mrb[0].mxu0
    %v1653 = vadd.f32 0.0, %v1652
    %v1654 = vpop.f32.mrb[0].mxu0
    %v1655 = vadd.f32 0.0, %v1654
    %v1656 = vpop.f32.mrb[0].mxu0
    %v1657 = vadd.f32 0.0, %v1656
    %v1658 = vpop.f32.mrb[0].mxu0
    %v1659 = vadd.f32 0.0, %v1658
    %1660 = vmatprep.mubr.bf16.mxu0 0
    %1661 = vmatmul.mubr.bf16.gmra.mrb[0].mxu0 %v1080
    %v1662 = vpop.f32.mrb[0].mxu0
    %v1663 = vadd.f32 0.0, %v1662
    %v1664 = vpop.f32.mrb[0].mxu0
    %v1665 = vadd.f32 0.0, %v1664
    %v1666 = vpop.f32.mrb[0].mxu0
    %v1667 = vadd.f32 0.0, %v1666
    %v1668 = vpop.f32.mrb[0].mxu0
    %v1669 = vadd.f32 0.0, %v1668
    %1670 = vmatprep.mubr.bf16.mxu0 0
    %1671 = vmatmul.mubr.bf16.gmra.mrb[0].mxu0 %v1081
    %v1672 = vpop.f32.mrb[0].mxu0
    %v1673 = vadd.f32 0.0, %v1672
    %v1674 = vpop.f32.mrb[0].mxu0
    %v1675 = vadd.f32 0.0, %v1674
    %v1676 = vpop.f32.mrb[0].mxu0
    %v1677 = vadd.f32 0.0, %v1676
    %v1678 = vpop.f32.mrb[0].mxu0
    %v1679 = vadd.f32 0.0, %v1678
    %1680 = vmatprep.mubr.bf16.mxu0 0
    %1681 = vmatmul.mubr.bf16.gmra.mrb[0].mxu0 %v1082
    %v1682 = vpop.f32.mrb[0].mxu0
    %v1683 = vadd.f32 0.0, %v1682
    %v1684 = vpop.f32.mrb[0].mxu0
    %v1685 = vadd.f32 0.0, %v1684
    %v1686 = vpop.f32.mrb[0].mxu0
    %v1687 = vadd.f32 0.0, %v1686
    %v1688 = vpop.f32.mrb[0].mxu0
    %v1689 = vadd.f32 0.0, %v1688
    %1690 = vmatprep.mubr.bf16.mxu0 0
    %1691 = vmatmul.mubr.bf16.gmra.mrb[0].mxu0 %v1083
    %v1692 = vpop.f32.mrb[0].mxu0
    %v1693 = vadd.f32 0.0, %v1692
    %v1694 = vpop.f32.mrb[0].mxu0
    %v1695 = vadd.f32 0.0, %v1694
    %v1696 = vpop.f32.mrb[0].mxu0
    %v1697 = vadd.f32 0.0, %v1696
    %v1698 = vpop.f32.mrb[0].mxu0
    %v1699 = vadd.f32 0.0, %v1698
    %1700 = vmatprep.mubr.bf16.mxu0 0
    %1701 = vmatmul.mubr.bf16.gmra.mrb[0].mxu0 %v1084
    %v1702 = vpop.f32.mrb[0].mxu0
    %v1703 = vadd.f32 0.0, %v1702
    %v1704 = vpop.f32.mrb[0].mxu0
    %v1705 = vadd.f32 0.0, %v1704
    %v1706 = vpop.f32.mrb[0].mxu0
    %v1707 = vadd.f32 0.0, %v1706
    %v1708 = vpop.f32.mrb[0].mxu0
    %v1709 = vadd.f32 0.0, %v1708
    %1710 = vmatprep.mubr.bf16.mxu0 0
    %1711 = vmatmul.mubr.bf16.gmra.mrb[0].mxu0 %v1085
    %v1712 = vpop.f32.mrb[0].mxu0
    %v1713 = vadd.f32 0.0, %v1712
    %v1714 = vpop.f32.mrb[0].mxu0
    %v1715 = vadd.f32 0.0, %v1714
    %v1716 = vpop.f32.mrb[0].mxu0
    %v1717 = vadd.f32 0.0, %v1716
    %v1718 = vpop.f32.mrb[0].mxu0
    %v1719 = vadd.f32 0.0, %v1718
    %1720 = vdwg.mxu0
    %1721 = vmatprep.subr.bf16.mxu0 %v899
    %1722 = vmatpush1.bf16.msra.mxu0 %v898
    %1723 = vmatprep.subr.bf16.mxu0 %v915
    %1724 = vmatpush1.bf16.msra.mxu0 %v914
    %1725 = vmatprep.subr.bf16.mxu0 %v931
    %1726 = vmatpush1.bf16.msra.mxu0 %v930
    %1727 = vmatprep.subr.bf16.mxu0 %v947
    %1728 = vmatpush1.bf16.msra.mxu0 %v946
    %1729 = vmatprep.subr.bf16.mxu0 %v963
    %1730 = vmatpush1.bf16.msra.mxu0 %v962
    %1731 = vmatprep.subr.bf16.mxu0 %v979
    %1732 = vmatpush1.bf16.msra.mxu0 %v978
    %1733 = vmatprep.subr.bf16.mxu0 %v995
    %1734 = vmatpush1.bf16.msra.mxu0 %v994
    %1735 = vmatprep.subr.bf16.mxu0 %v1011
    %1736 = vmatpush1.bf16.msra.mxu0 %v1010
    %1737 = vmatprep.subr.bf16.mxu0 0
    %1738 = vmatpush1.bf16.msra.mxu0 0
    %1739 = vmatprep.subr.bf16.mxu0 0
    %1740 = vmatpush1.bf16.msra.mxu0 0
    %1741 = vmatprep.subr.bf16.mxu0 0
    %1742 = vmatpush1.bf16.msra.mxu0 0
    %1743 = vmatprep.subr.bf16.mxu0 0
    %1744 = vmatpush1.bf16.msra.mxu0 0
    %1745 = vmatprep.subr.bf16.mxu0 0
    %1746 = vmatpush1.bf16.msra.mxu0 0
    %1747 = vmatprep.subr.bf16.mxu0 0
    %1748 = vmatpush1.bf16.msra.mxu0 0
    %1749 = vmatprep.subr.bf16.mxu0 0
    %1750 = vmatpush1.bf16.msra.mxu0 0
    %1751 = vmatprep.subr.bf16.mxu0 0
    %1752 = vmatpush1.bf16.msra.mxu0 0
    %1753 = vmatprep.mubr.bf16.mxu0 0
    %1754 = vmatmul.mubr.bf16.gmra.mrb[0].mxu0 %v1076
    %v1755 = vpop.f32.mrb[0].mxu0
    %v1756 = vadd.f32 0.0, %v1755
    %v1757 = vpop.f32.mrb[0].mxu0
    %v1758 = vadd.f32 0.0, %v1757
    %v1759 = vpop.f32.mrb[0].mxu0
    %v1760 = vadd.f32 0.0, %v1759
    %v1761 = vpop.f32.mrb[0].mxu0
    %v1762 = vadd.f32 0.0, %v1761
    %1763 = vmatprep.mubr.bf16.mxu0 0
    %1764 = vmatmul.mubr.bf16.gmra.mrb[0].mxu0 %v1077
    %v1765 = vpop.f32.mrb[0].mxu0
    %v1766 = vadd.f32 0.0, %v1765
    %v1767 = vpop.f32.mrb[0].mxu0
    %v1768 = vadd.f32 0.0, %v1767
    %v1769 = vpop.f32.mrb[0].mxu0
    %v1770 = vadd.f32 0.0, %v1769
    %v1771 = vpop.f32.mrb[0].mxu0
    %v1772 = vadd.f32 0.0, %v1771
    %1773 = vmatprep.mubr.bf16.mxu0 0
    %1774 = vmatmul.mubr.bf16.gmra.mrb[0].mxu0 %v1078
    %v1775 = vpop.f32.mrb[0].mxu0
    %v1776 = vadd.f32 0.0, %v1775
    %v1777 = vpop.f32.mrb[0].mxu0
    %v1778 = vadd.f32 0.0, %v1777
    %v1779 = vpop.f32.mrb[0].mxu0
    %v1780 = vadd.f32 0.0, %v1779
    %v1781 = vpop.f32.mrb[0].mxu0
    %v1782 = vadd.f32 0.0, %v1781
    %1783 = vmatprep.mubr.bf16.mxu0 0
    %1784 = vmatmul.mubr.bf16.gmra.mrb[0].mxu0 %v1079
    %v1785 = vpop.f32.mrb[0].mxu0
    %v1786 = vadd.f32 0.0, %v1785
    %v1787 = vpop.f32.mrb[0].mxu0
    %v1788 = vadd.f32 0.0, %v1787
    %v1789 = vpop.f32.mrb[0].mxu0
    %v1790 = vadd.f32 0.0, %v1789
    %v1791 = vpop.f32.mrb[0].mxu0
    %v1792 = vadd.f32 0.0, %v1791
    %1793 = vmatprep.mubr.bf16.mxu0 0
    %1794 = vmatmul.mubr.bf16.gmra.mrb[0].mxu0 %v1080
    %v1795 = vpop.f32.mrb[0].mxu0
    %v1796 = vadd.f32 0.0, %v1795
    %v1797 = vpop.f32.mrb[0].mxu0
    %v1798 = vadd.f32 0.0, %v1797
    %v1799 = vpop.f32.mrb[0].mxu0
    %v1800 = vadd.f32 0.0, %v1799
    %v1801 = vpop.f32.mrb[0].mxu0
    %v1802 = vadd.f32 0.0, %v1801
    %1803 = vmatprep.mubr.bf16.mxu0 0
    %1804 = vmatmul.mubr.bf16.gmra.mrb[0].mxu0 %v1081
    %v1805 = vpop.f32.mrb[0].mxu0
    %v1806 = vadd.f32 0.0, %v1805
    %v1807 = vpop.f32.mrb[0].mxu0
    %v1808 = vadd.f32 0.0, %v1807
    %v1809 = vpop.f32.mrb[0].mxu0
    %v1810 = vadd.f32 0.0, %v1809
    %v1811 = vpop.f32.mrb[0].mxu0
    %v1812 = vadd.f32 0.0, %v1811
    %1813 = vmatprep.mubr.bf16.mxu0 0
    %1814 = vmatmul.mubr.bf16.gmra.mrb[0].mxu0 %v1082
    %v1815 = vpop.f32.mrb[0].mxu0
    %v1816 = vadd.f32 0.0, %v1815
    %v1817 = vpop.f32.mrb[0].mxu0
    %v1818 = vadd.f32 0.0, %v1817
    %v1819 = vpop.f32.mrb[0].mxu0
    %v1820 = vadd.f32 0.0, %v1819
    %v1821 = vpop.f32.mrb[0].mxu0
    %v1822 = vadd.f32 0.0, %v1821
    %1823 = vmatprep.mubr.bf16.mxu0 0
    %1824 = vmatmul.mubr.bf16.gmra.mrb[0].mxu0 %v1083
    %v1825 = vpop.f32.mrb[0].mxu0
    %v1826 = vadd.f32 0.0, %v1825
    %v1827 = vpop.f32.mrb[0].mxu0
    %v1828 = vadd.f32 0.0, %v1827
    %v1829 = vpop.f32.mrb[0].mxu0
    %v1830 = vadd.f32 0.0, %v1829
    %v1831 = vpop.f32.mrb[0].mxu0
    %v1832 = vadd.f32 0.0, %v1831
    %1833 = vmatprep.mubr.bf16.mxu0 0
    %1834 = vmatmul.mubr.bf16.gmra.mrb[0].mxu0 %v1084
    %v1835 = vpop.f32.mrb[0].mxu0
    %v1836 = vadd.f32 0.0, %v1835
    %v1837 = vpop.f32.mrb[0].mxu0
    %v1838 = vadd.f32 0.0, %v1837
    %v1839 = vpop.f32.mrb[0].mxu0
    %v1840 = vadd.f32 0.0, %v1839
    %v1841 = vpop.f32.mrb[0].mxu0
    %v1842 = vadd.f32 0.0, %v1841
    %1843 = vmatprep.mubr.bf16.mxu0 0
    %1844 = vmatmul.mubr.bf16.gmra.mrb[0].mxu0 %v1085
    %v1845 = vpop.f32.mrb[0].mxu0
    %v1846 = vadd.f32 0.0, %v1845
    %v1847 = vpop.f32.mrb[0].mxu0
    %v1848 = vadd.f32 0.0, %v1847
    %v1849 = vpop.f32.mrb[0].mxu0
    %v1850 = vadd.f32 0.0, %v1849
    %v1851 = vpop.f32.mrb[0].mxu0
    %v1852 = vadd.f32 0.0, %v1851
    %1853 = vdwg.mxu0
    %1854 = vmatprep.subr.bf16.mxu0 %v901
    %1855 = vmatpush1.bf16.msra.mxu0 %v900
    %1856 = vmatprep.subr.bf16.mxu0 %v917
    %1857 = vmatpush1.bf16.msra.mxu0 %v916
    %1858 = vmatprep.subr.bf16.mxu0 %v933
    %1859 = vmatpush1.bf16.msra.mxu0 %v932
    %1860 = vmatprep.subr.bf16.mxu0 %v949
    %1861 = vmatpush1.bf16.msra.mxu0 %v948
    %1862 = vmatprep.subr.bf16.mxu0 %v965
    %1863 = vmatpush1.bf16.msra.mxu0 %v964
    %1864 = vmatprep.subr.bf16.mxu0 %v981
    %1865 = vmatpush1.bf16.msra.mxu0 %v980
    %1866 = vmatprep.subr.bf16.mxu0 %v997
    %1867 = vmatpush1.bf16.msra.mxu0 %v996
    %1868 = vmatprep.subr.bf16.mxu0 %v1013
    %1869 = vmatpush1.bf16.msra.mxu0 %v1012
    %1870 = vmatprep.subr.bf16.mxu0 0
    %1871 = vmatpush1.bf16.msra.mxu0 0
    %1872 = vmatprep.subr.bf16.mxu0 0
    %1873 = vmatpush1.bf16.msra.mxu0 0
    %1874 = vmatprep.subr.bf16.mxu0 0
    %1875 = vmatpush1.bf16.msra.mxu0 0
    %1876 = vmatprep.subr.bf16.mxu0 0
    %1877 = vmatpush1.bf16.msra.mxu0 0
    %1878 = vmatprep.subr.bf16.mxu0 0
    %1879 = vmatpush1.bf16.msra.mxu0 0
    %1880 = vmatprep.subr.bf16.mxu0 0
    %1881 = vmatpush1.bf16.msra.mxu0 0
    %1882 = vmatprep.subr.bf16.mxu0 0
    %1883 = vmatpush1.bf16.msra.mxu0 0
    %1884 = vmatprep.subr.bf16.mxu0 0
    %1885 = vmatpush1.bf16.msra.mxu0 0
    %1886 = vmatprep.mubr.bf16.mxu0 0
    %1887 = vmatmul.mubr.bf16.gmra.mrb[0].mxu0 %v1076
    %v1888 = vpop.f32.mrb[0].mxu0
    %v1889 = vpop.f32.mrb[0].mxu0
    %v1890 = vpop.f32.mrb[0].mxu0
    %v1891 = vpop.f32.mrb[0].mxu0
    %1892 = vmatprep.mubr.bf16.mxu0 0
    %1893 = vmatmul.mubr.bf16.gmra.mrb[0].mxu0 %v1077
    %v1894 = vpop.f32.mrb[0].mxu0
    %v1895 = vpop.f32.mrb[0].mxu0
    %v1896 = vpop.f32.mrb[0].mxu0
    %v1897 = vpop.f32.mrb[0].mxu0
    %1898 = vmatprep.mubr.bf16.mxu0 0
    %1899 = vmatmul.mubr.bf16.gmra.mrb[0].mxu0 %v1078
    %v1900 = vpop.f32.mrb[0].mxu0
    %v1901 = vadd.f32 0.0, %v1900
    %v1902 = vpop.f32.mrb[0].mxu0
    %v1903 = vpop.f32.mrb[0].mxu0
    %v1904 = vadd.f32 0.0, %v1903
    %v1905 = vpop.f32.mrb[0].mxu0
    %1906 = vmatprep.mubr.bf16.mxu0 0
    %1907 = vmatmul.mubr.bf16.gmra.mrb[0].mxu0 %v1079
    %v1908 = vpop.f32.mrb[0].mxu0
    %v1909 = vadd.f32 0.0, %v1908
    %v1910 = vpop.f32.mrb[0].mxu0
    %v1911 = vpop.f32.mrb[0].mxu0
    %v1912 = vadd.f32 0.0, %v1911
    %v1913 = vpop.f32.mrb[0].mxu0
    %1914 = vmatprep.mubr.bf16.mxu0 0
    %1915 = vmatmul.mubr.bf16.gmra.mrb[0].mxu0 %v1080
    %v1916 = vpop.f32.mrb[0].mxu0
    %v1917 = vadd.f32 0.0, %v1916
    %v1918 = vpop.f32.mrb[0].mxu0
    %v1919 = vadd.f32 0.0, %v1918
    %v1920 = vpop.f32.mrb[0].mxu0
    %v1921 = vadd.f32 0.0, %v1920
    %v1922 = vpop.f32.mrb[0].mxu0
    %v1923 = vadd.f32 0.0, %v1922
    %1924 = vmatprep.mubr.bf16.mxu0 0
    %1925 = vmatmul.mubr.bf16.gmra.mrb[0].mxu0 %v1081
    %v1926 = vpop.f32.mrb[0].mxu0
    %v1927 = vadd.f32 0.0, %v1926
    %v1928 = vpop.f32.mrb[0].mxu0
    %v1929 = vadd.f32 0.0, %v1928
    %v1930 = vpop.f32.mrb[0].mxu0
    %v1931 = vadd.f32 0.0, %v1930
    %v1932 = vpop.f32.mrb[0].mxu0
    %v1933 = vadd.f32 0.0, %v1932
    %1934 = vmatprep.mubr.bf16.mxu0 0
    %1935 = vmatmul.mubr.bf16.gmra.mrb[0].mxu0 %v1082
    %v1936 = vpop.f32.mrb[0].mxu0
    %v1937 = vadd.f32 0.0, %v1936
    %v1938 = vpop.f32.mrb[0].mxu0
    %v1939 = vadd.f32 0.0, %v1938
    %v1940 = vpop.f32.mrb[0].mxu0
    %v1941 = vadd.f32 0.0, %v1940
    %v1942 = vpop.f32.mrb[0].mxu0
    %v1943 = vadd.f32 0.0, %v1942
    %1944 = vmatprep.mubr.bf16.mxu0 0
    %1945 = vmatmul.mubr.bf16.gmra.mrb[0].mxu0 %v1083
    %v1946 = vpop.f32.mrb[0].mxu0
    %v1947 = vadd.f32 0.0, %v1946
    %v1948 = vpop.f32.mrb[0].mxu0
    %v1949 = vadd.f32 0.0, %v1948
    %v1950 = vpop.f32.mrb[0].mxu0
    %v1951 = vadd.f32 0.0, %v1950
    %v1952 = vpop.f32.mrb[0].mxu0
    %v1953 = vadd.f32 0.0, %v1952
    %1954 = vmatprep.mubr.bf16.mxu0 0
    %1955 = vmatmul.mubr.bf16.gmra.mrb[0].mxu0 %v1084
    %v1956 = vpop.f32.mrb[0].mxu0
    %v1957 = vadd.f32 0.0, %v1956
    %v1958 = vpop.f32.mrb[0].mxu0
    %v1959 = vadd.f32 0.0, %v1958
    %v1960 = vpop.f32.mrb[0].mxu0
    %v1961 = vadd.f32 0.0, %v1960
    %v1962 = vpop.f32.mrb[0].mxu0
    %v1963 = vadd.f32 0.0, %v1962
    %1964 = vmatprep.mubr.bf16.mxu0 0
    %1965 = vmatmul.mubr.bf16.gmra.mrb[0].mxu0 %v1085
    %v1966 = vpop.f32.mrb[0].mxu0
    %v1967 = vadd.f32 0.0, %v1966
    %v1968 = vpop.f32.mrb[0].mxu0
    %v1969 = vadd.f32 0.0, %v1968
    %v1970 = vpop.f32.mrb[0].mxu0
    %v1971 = vadd.f32 0.0, %v1970
    %v1972 = vpop.f32.mrb[0].mxu0
    %v1973 = vadd.f32 0.0, %v1972
    %1974 = vdwg.mxu0
    %1975 = vmatprep.subr.bf16.mxu0 %v903
    %1976 = vmatpush1.bf16.msra.mxu0 %v902
    %1977 = vmatprep.subr.bf16.mxu0 %v919
    %1978 = vmatpush1.bf16.msra.mxu0 %v918
    %1979 = vmatprep.subr.bf16.mxu0 %v935
    %1980 = vmatpush1.bf16.msra.mxu0 %v934
    %1981 = vmatprep.subr.bf16.mxu0 %v951
    %1982 = vmatpush1.bf16.msra.mxu0 %v950
    %1983 = vmatprep.subr.bf16.mxu0 %v967
    %1984 = vmatpush1.bf16.msra.mxu0 %v966
    %1985 = vmatprep.subr.bf16.mxu0 %v983
    %1986 = vmatpush1.bf16.msra.mxu0 %v982
    %1987 = vmatprep.subr.bf16.mxu0 %v999
    %1988 = vmatpush1.bf16.msra.mxu0 %v998
    %1989 = vmatprep.subr.bf16.mxu0 %v1015
    %1990 = vmatpush1.bf16.msra.mxu0 %v1014
    %1991 = vmatprep.subr.bf16.mxu0 0
    %1992 = vmatpush1.bf16.msra.mxu0 0
    %1993 = vmatprep.subr.bf16.mxu0 0
    %1994 = vmatpush1.bf16.msra.mxu0 0
    %1995 = vmatprep.subr.bf16.mxu0 0
    %1996 = vmatpush1.bf16.msra.mxu0 0
    %1997 = vmatprep.subr.bf16.mxu0 0
    %1998 = vmatpush1.bf16.msra.mxu0 0
    %1999 = vmatprep.subr.bf16.mxu0 0
    %2000 = vmatpush1.bf16.msra.mxu0 0
    %2001 = vmatprep.subr.bf16.mxu0 0
    %2002 = vmatpush1.bf16.msra.mxu0 0
    %2003 = vmatprep.subr.bf16.mxu0 0
    %2004 = vmatpush1.bf16.msra.mxu0 0
    %2005 = vmatprep.subr.bf16.mxu0 0
    %2006 = vmatpush1.bf16.msra.mxu0 0
    %2007 = vmatprep.mubr.bf16.mxu0 0
    %2008 = vmatmul.mubr.bf16.gmra.mrb[0].mxu0 %v1076
    %v2009 = vpop.f32.mrb[0].mxu0
    %v2010 = vpop.f32.mrb[0].mxu0
    %v2011 = vpop.f32.mrb[0].mxu0
    %v2012 = vpop.f32.mrb[0].mxu0
    %2013 = vmatprep.mubr.bf16.mxu0 0
    %2014 = vmatmul.mubr.bf16.gmra.mrb[0].mxu0 %v1077
    %v2015 = vpop.f32.mrb[0].mxu0
    %v2016 = vpop.f32.mrb[0].mxu0
    %v2017 = vpop.f32.mrb[0].mxu0
    %v2018 = vpop.f32.mrb[0].mxu0
    %2019 = vmatprep.mubr.bf16.mxu0 0
    %2020 = vmatmul.mubr.bf16.gmra.mrb[0].mxu0 %v1078
    %v2021 = vpop.f32.mrb[0].mxu0
    %v2022 = vpop.f32.mrb[0].mxu0
    %v2023 = vpop.f32.mrb[0].mxu0
    %v2024 = vpop.f32.mrb[0].mxu0
    %2025 = vmatprep.mubr.bf16.mxu0 0
    %2026 = vmatmul.mubr.bf16.gmra.mrb[0].mxu0 %v1079
    %v2027 = vpop.f32.mrb[0].mxu0
    %v2028 = vpop.f32.mrb[0].mxu0
    %v2029 = vpop.f32.mrb[0].mxu0
    %v2030 = vpop.f32.mrb[0].mxu0
    %2031 = vmatprep.mubr.bf16.mxu0 0
    %2032 = vmatmul.mubr.bf16.gmra.mrb[0].mxu0 %v1080
    %v2033 = vpop.f32.mrb[0].mxu0
    %v2034 = vpop.f32.mrb[0].mxu0
    %v2035 = vpop.f32.mrb[0].mxu0
    %v2036 = vpop.f32.mrb[0].mxu0
    %2037 = vmatprep.mubr.bf16.mxu0 0
    %2038 = vmatmul.mubr.bf16.gmra.mrb[0].mxu0 %v1081
    %v2039 = vpop.f32.mrb[0].mxu0
    %v2040 = vpop.f32.mrb[0].mxu0
    %v2041 = vpop.f32.mrb[0].mxu0
    %v2042 = vpop.f32.mrb[0].mxu0
    %2043 = vmatprep.mubr.bf16.mxu0 0
    %2044 = vmatmul.mubr.bf16.gmra.mrb[0].mxu0 %v1082
    %v2045 = vpop.f32.mrb[0].mxu0
    %v2046 = vadd.f32 0.0, %v2045
    %v2047 = vpop.f32.mrb[0].mxu0
    %v2048 = vpop.f32.mrb[0].mxu0
    %v2049 = vadd.f32 0.0, %v2048
    %v2050 = vpop.f32.mrb[0].mxu0
    %2051 = vmatprep.mubr.bf16.mxu0 0
    %2052 = vmatmul.mubr.bf16.gmra.mrb[0].mxu0 %v1083
    %v2053 = vpop.f32.mrb[0].mxu0
    %v2054 = vadd.f32 0.0, %v2053
    %v2055 = vpop.f32.mrb[0].mxu0
    %v2056 = vpop.f32.mrb[0].mxu0
    %v2057 = vadd.f32 0.0, %v2056
    %v2058 = vpop.f32.mrb[0].mxu0
    %2059 = vmatprep.mubr.bf16.mxu0 0
    %2060 = vmatmul.mubr.bf16.gmra.mrb[0].mxu0 %v1084
    %v2061 = vpop.f32.mrb[0].mxu0
    %v2062 = vadd.f32 0.0, %v2061
    %v2063 = vpop.f32.mrb[0].mxu0
    %v2064 = vadd.f32 0.0, %v2063
    %v2065 = vpop.f32.mrb[0].mxu0
    %v2066 = vadd.f32 0.0, %v2065
    %v2067 = vpop.f32.mrb[0].mxu0
    %v2068 = vadd.f32 0.0, %v2067
    %2069 = vmatprep.mubr.bf16.mxu0 0
    %2070 = vmatmul.mubr.bf16.gmra.mrb[0].mxu0 %v1085
    %v2071 = vpop.f32.mrb[0].mxu0
    %v2072 = vadd.f32 0.0, %v2071
    %v2073 = vpop.f32.mrb[0].mxu0
    %v2074 = vadd.f32 0.0, %v2073
    %v2075 = vpop.f32.mrb[0].mxu0
    %v2076 = vadd.f32 0.0, %v2075
    %v2077 = vpop.f32.mrb[0].mxu0
    %v2078 = vadd.f32 0.0, %v2077
    %2079 = vdwg.mxu0
    %v2080 = vadd.f32 %v1131, %v1152
    %v2081 = vadd.f32 %v1133, %v1256
    %v2082 = vadd.f32 %v1236, %v1258
    %v2083 = vadd.f32 %v1238, %v1377
    %v2084 = vadd.f32 %v1357, %v1379
    %v2085 = vadd.f32 %v1359, %v1510
    %v2086 = vadd.f32 %v1490, %v1512
    %v2087 = vadd.f32 %v1492, %v1643
    %v2088 = vadd.f32 %v1623, %v1645
    %v2089 = vadd.f32 %v1625, %v1776
    %v2090 = vadd.f32 %v1756, %v1778
    %v2091 = vadd.f32 %v1758, %v1901
    %v2092 = vadd.f32 %v1135, %v1155
    %v2093 = vadd.f32 %v1137, %v1260
    %v2094 = vadd.f32 %v1240, %v1262
    %v2095 = vadd.f32 %v1242, %v1381
    %v2096 = vadd.f32 %v1361, %v1383
    %v2097 = vadd.f32 %v1363, %v1514
    %v2098 = vadd.f32 %v1494, %v1516
    %v2099 = vadd.f32 %v1496, %v1647
    %v2100 = vadd.f32 %v1627, %v1649
    %v2101 = vadd.f32 %v1629, %v1780
    %v2102 = vadd.f32 %v1760, %v1782
    %v2103 = vadd.f32 %v1762, %v1904
    %v2104 = vadd.f32 %v1141, %v1160
    %v2105 = vadd.f32 %v1143, %v1266
    %v2106 = vadd.f32 %v1246, %v1268
    %v2107 = vadd.f32 %v1248, %v1387
    %v2108 = vadd.f32 %v1367, %v1389
    %v2109 = vadd.f32 %v1369, %v1520
    %v2110 = vadd.f32 %v1500, %v1522
    %v2111 = vadd.f32 %v1502, %v1653
    %v2112 = vadd.f32 %v1633, %v1655
    %v2113 = vadd.f32 %v1635, %v1786
    %v2114 = vadd.f32 %v1766, %v1788
    %v2115 = vadd.f32 %v1768, %v1909
    %v2116 = vadd.f32 %v1145, %v1163
    %v2117 = vadd.f32 %v1147, %v1270
    %v2118 = vadd.f32 %v1250, %v1272
    %v2119 = vadd.f32 %v1252, %v1391
    %v2120 = vadd.f32 %v1371, %v1393
    %v2121 = vadd.f32 %v1373, %v1524
    %v2122 = vadd.f32 %v1504, %v1526
    %v2123 = vadd.f32 %v1506, %v1657
    %v2124 = vadd.f32 %v1637, %v1659
    %v2125 = vadd.f32 %v1639, %v1790
    %v2126 = vadd.f32 %v1770, %v1792
    %v2127 = vadd.f32 %v1772, %v1912
    %v2128 = vadd.f32 %v2080, %v1276
    %v2129 = vadd.f32 %v2081, %v1278
    %v2130 = vadd.f32 %v2082, %v1397
    %v2131 = vadd.f32 %v2083, %v1399
    %v2132 = vadd.f32 %v2084, %v1530
    %v2133 = vadd.f32 %v2085, %v1532
    %v2134 = vadd.f32 %v2086, %v1663
    %v2135 = vadd.f32 %v2087, %v1665
    %v2136 = vadd.f32 %v2088, %v1796
    %v2137 = vadd.f32 %v2089, %v1798
    %v2138 = vadd.f32 %v2090, %v1917
    %v2139 = vadd.f32 %v2091, %v1919
    %v2140 = vadd.f32 %v2092, %v1280
    %v2141 = vadd.f32 %v2093, %v1282
    %v2142 = vadd.f32 %v2094, %v1401
    %v2143 = vadd.f32 %v2095, %v1403
    %v2144 = vadd.f32 %v2096, %v1534
    %v2145 = vadd.f32 %v2097, %v1536
    %v2146 = vadd.f32 %v2098, %v1667
    %v2147 = vadd.f32 %v2099, %v1669
    %v2148 = vadd.f32 %v2100, %v1800
    %v2149 = vadd.f32 %v2101, %v1802
    %v2150 = vadd.f32 %v2102, %v1921
    %v2151 = vadd.f32 %v2103, %v1923
    %v2152 = vadd.f32 %v2104, %v1286
    %v2153 = vadd.f32 %v2105, %v1288
    %v2154 = vadd.f32 %v2106, %v1407
    %v2155 = vadd.f32 %v2107, %v1409
    %v2156 = vadd.f32 %v2108, %v1540
    %v2157 = vadd.f32 %v2109, %v1542
    %v2158 = vadd.f32 %v2110, %v1673
    %v2159 = vadd.f32 %v2111, %v1675
    %v2160 = vadd.f32 %v2112, %v1806
    %v2161 = vadd.f32 %v2113, %v1808
    %v2162 = vadd.f32 %v2114, %v1927
    %v2163 = vadd.f32 %v2115, %v1929
    %v2164 = vadd.f32 %v2116, %v1290
    %v2165 = vadd.f32 %v2117, %v1292
    %v2166 = vadd.f32 %v2118, %v1411
    %v2167 = vadd.f32 %v2119, %v1413
    %v2168 = vadd.f32 %v2120, %v1544
    %v2169 = vadd.f32 %v2121, %v1546
    %v2170 = vadd.f32 %v2122, %v1677
    %v2171 = vadd.f32 %v2123, %v1679
    %v2172 = vadd.f32 %v2124, %v1810
    %v2173 = vadd.f32 %v2125, %v1812
    %v2174 = vadd.f32 %v2126, %v1931
    %v2175 = vadd.f32 %v2127, %v1933
    %v2176 = vadd.f32 %v2128, %v1297
    %v2177 = vadd.f32 %v2129, %v1417
    %v2178 = vadd.f32 %v2130, %v1419
    %v2179 = vadd.f32 %v2131, %v1550
    %v2180 = vadd.f32 %v2132, %v1552
    %v2181 = vadd.f32 %v2133, %v1683
    %v2182 = vadd.f32 %v2134, %v1685
    %v2183 = vadd.f32 %v2135, %v1816
    %v2184 = vadd.f32 %v2136, %v1818
    %v2185 = vadd.f32 %v2137, %v1937
    %v2186 = vadd.f32 %v2138, %v1939
    %v2187 = vadd.f32 %v2139, %v2046
    %v2188 = vadd.f32 %v2140, %v1300
    %v2189 = vadd.f32 %v2141, %v1421
    %v2190 = vadd.f32 %v2142, %v1423
    %v2191 = vadd.f32 %v2143, %v1554
    %v2192 = vadd.f32 %v2144, %v1556
    %v2193 = vadd.f32 %v2145, %v1687
    %v2194 = vadd.f32 %v2146, %v1689
    %v2195 = vadd.f32 %v2147, %v1820
    %v2196 = vadd.f32 %v2148, %v1822
    %v2197 = vadd.f32 %v2149, %v1941
    %v2198 = vadd.f32 %v2150, %v1943
    %v2199 = vadd.f32 %v2151, %v2049
    %v2200 = vadd.f32 %v2152, %v1305
    %v2201 = vadd.f32 %v2153, %v1427
    %v2202 = vadd.f32 %v2154, %v1429
    %v2203 = vadd.f32 %v2155, %v1560
    %v2204 = vadd.f32 %v2156, %v1562
    %v2205 = vadd.f32 %v2157, %v1693
    %v2206 = vadd.f32 %v2158, %v1695
    %v2207 = vadd.f32 %v2159, %v1826
    %v2208 = vadd.f32 %v2160, %v1828
    %v2209 = vadd.f32 %v2161, %v1947
    %v2210 = vadd.f32 %v2162, %v1949
    %v2211 = vadd.f32 %v2163, %v2054
    %v2212 = vadd.f32 %v2164, %v1308
    %v2213 = vadd.f32 %v2165, %v1431
    %v2214 = vadd.f32 %v2166, %v1433
    %v2215 = vadd.f32 %v2167, %v1564
    %v2216 = vadd.f32 %v2168, %v1566
    %v2217 = vadd.f32 %v2169, %v1697
    %v2218 = vadd.f32 %v2170, %v1699
    %v2219 = vadd.f32 %v2171, %v1830
    %v2220 = vadd.f32 %v2172, %v1832
    %v2221 = vadd.f32 %v2173, %v1951
    %v2222 = vadd.f32 %v2174, %v1953
    %v2223 = vadd.f32 %v2175, %v2057
    %v2224 = vadd.f32 %v2176, %v1437
    %v2225 = vadd.f32 %v2177, %v1439
    %v2226 = vadd.f32 %v2178, %v1570
    %v2227 = vadd.f32 %v2179, %v1572
    %v2228 = vadd.f32 %v2180, %v1703
    %v2229 = vadd.f32 %v2181, %v1705
    %v2230 = vadd.f32 %v2182, %v1836
    %v2231 = vadd.f32 %v2183, %v1838
    %v2232 = vadd.f32 %v2184, %v1957
    %v2233 = vadd.f32 %v2185, %v1959
    %v2234 = vadd.f32 %v2186, %v2062
    %v2235 = vadd.f32 %v2187, %v2064
    %v2236 = vadd.f32 %v2188, %v1441
    %v2237 = vadd.f32 %v2189, %v1443
    %v2238 = vadd.f32 %v2190, %v1574
    %v2239 = vadd.f32 %v2191, %v1576
    %v2240 = vadd.f32 %v2192, %v1707
    %v2241 = vadd.f32 %v2193, %v1709
    %v2242 = vadd.f32 %v2194, %v1840
    %v2243 = vadd.f32 %v2195, %v1842
    %v2244 = vadd.f32 %v2196, %v1961
    %v2245 = vadd.f32 %v2197, %v1963
    %v2246 = vadd.f32 %v2198, %v2066
    %v2247 = vadd.f32 %v2199, %v2068
    %v2248 = vadd.f32 %v2200, %v1447
    %v2249 = vadd.f32 %v2201, %v1449
    %v2250 = vadd.f32 %v2202, %v1580
    %v2251 = vadd.f32 %v2203, %v1582
    %v2252 = vadd.f32 %v2204, %v1713
    %v2253 = vadd.f32 %v2205, %v1715
    %v2254 = vadd.f32 %v2206, %v1846
    %v2255 = vadd.f32 %v2207, %v1848
    %v2256 = vadd.f32 %v2208, %v1967
    %v2257 = vadd.f32 %v2209, %v1969
    %v2258 = vadd.f32 %v2210, %v2072
    %v2259 = vadd.f32 %v2211, %v2074
    %v2260 = vadd.f32 %v2212, %v1451
    %v2261 = vadd.f32 %v2213, %v1453
    %v2262 = vadd.f32 %v2214, %v1584
    %v2263 = vadd.f32 %v2215, %v1586
    %v2264 = vadd.f32 %v2216, %v1717
    %v2265 = vadd.f32 %v2217, %v1719
    %v2266 = vadd.f32 %v2218, %v1850
    %v2267 = vadd.f32 %v2219, %v1852
    %v2268 = vadd.f32 %v2220, %v1971
    %v2269 = vadd.f32 %v2221, %v1973
    %v2270 = vadd.f32 %v2222, %v2076
    %v2271 = vadd.f32 %v2223, %v2078
    %v2272 = vmax.f32 %v2224, %v2225
    %v2273 = vmax.f32 %v2236, %v2237
    %v2274 = vmax.f32 %v2248, %v2249
    %v2275 = vmax.f32 %v2260, %v2261
    %v2276 = vmax.f32 %v2272, %v2226
    %v2277 = vmax.f32 %v2273, %v2238
    %v2278 = vmax.f32 %v2274, %v2250
    %v2279 = vmax.f32 %v2275, %v2262
    %v2280 = vmax.f32 %v2276, %v2227
    %v2281 = vmax.f32 %v2277, %v2239
    %v2282 = vmax.f32 %v2278, %v2251
    %v2283 = vmax.f32 %v2279, %v2263
    %v2284 = vmax.f32 %v2280, %v2228
    %v2285 = vmax.f32 %v2281, %v2240
    %v2286 = vmax.f32 %v2282, %v2252
    %v2287 = vmax.f32 %v2283, %v2264
    %v2288 = vmax.f32 %v2284, %v2229
    %v2289 = vmax.f32 %v2285, %v2241
    %v2290 = vmax.f32 %v2286, %v2253
    %v2291 = vmax.f32 %v2287, %v2265
    %v2292 = vmax.f32 %v2288, %v2230
    %v2293 = vmax.f32 %v2289, %v2242
    %v2294 = vmax.f32 %v2290, %v2254
    %v2295 = vmax.f32 %v2291, %v2266
    %v2296 = vmax.f32 %v2292, %v2231
    %v2297 = vmax.f32 %v2293, %v2243
    %v2298 = vmax.f32 %v2294, %v2255
    %v2299 = vmax.f32 %v2295, %v2267
    %v2300 = vmax.f32 %v2296, %v2232
    %v2301 = vmax.f32 %v2297, %v2244
    %v2302 = vmax.f32 %v2298, %v2256
    %v2303 = vmax.f32 %v2299, %v2268
    %v2304 = vmax.f32 %v2300, %v2233
    %v2305 = vmax.f32 %v2301, %v2245
    %v2306 = vmax.f32 %v2302, %v2257
    %v2307 = vmax.f32 %v2303, %v2269
    %v2308 = vmax.f32 %v2304, %v2234
    %v2309 = vmax.f32 %v2305, %v2246
    %v2310 = vmax.f32 %v2306, %v2258
    %v2311 = vmax.f32 %v2307, %v2270
    %v2312 = vmax.f32 %v2308, %v2235
    %v2313 = vmax.f32 %v2309, %v2247
    %v2314 = vmax.f32 %v2310, %v2259
    %v2315 = vmax.f32 %v2311, %v2271
    %v2316 = vld [vmem:[%s4] sm:$0xff]
    %v2317 = vld [vmem:[%s4 + $0x8] sm:$0xff]
    %v2318 = vld [vmem:[%s4 + $0x10] sm:$0xff]
    %v2319 = vld [vmem:[%s4 + $0x18] sm:$0xff]
    %2321 = vset.pattern.permute.xlu0 0
    %2322 = vperm.xlu0 %2321, %v2316
    %v2323 = vpop.permute.xlu0 %2322
    %2326 = vset.pattern.permute.xlu0 0
    %2327 = vperm.xlu0 %2326, %v2317
    %v2328 = vpop.permute.xlu0 %2327
    %2331 = vset.pattern.permute.xlu0 0
    %2332 = vperm.xlu0 %2331, %v2318
    %v2333 = vpop.permute.xlu0 %2332
    %2336 = vset.pattern.permute.xlu0 0
    %2337 = vperm.xlu0 %2336, %v2319
    %v2338 = vpop.permute.xlu0 %2337
    %v2340 = vadd.f32 %v2312, %v2323
    %v2341 = vadd.f32 %v2313, %v2328
    %v2342 = vadd.f32 %v2314, %v2333
    %v2343 = vadd.f32 %v2315, %v2338
    %v2344 = vmax.f32 %v2340, 0.0
    %v2345 = vmax.f32 %v2341, 0.0
    %v2346 = vmax.f32 %v2342, 0.0
    %v2347 = vmax.f32 %v2343, 0.0
    %v2348 = vld [vmem:[%s2] sm:$0xf]
    %v2349 = vld [vmem:[%s2 + $0x4] sm:$0xf]
    %v2350 = vld [vmem:[%s2 + $0x8] sm:$0xf]
    %v2351 = vld [vmem:[%s2 + $0xc] sm:$0xf]
    %v2352 = vld [vmem:[%s0] sm:$0xf]
    %v2353 = vld [vmem:[%s0 + $0x4] sm:$0xf]
    %v2354 = vld [vmem:[%s0 + $0x8] sm:$0xf]
    %v2355 = vld [vmem:[%s0 + $0xc] sm:$0xf]
    %v2356 = vld [vmem:[%s5] sm:$0xf]
    %v2357 = vld [vmem:[%s5 + $0x4] sm:$0xf]
    %v2358 = vld [vmem:[%s5 + $0x8] sm:$0xf]
    %v2359 = vld [vmem:[%s5 + $0xc] sm:$0xf]
    %v2360 = vpack.c.bf16 %v2345, %v2344
    %v2361 = vpack.c.bf16 %v2347, %v2346
    %v2366 = vunpack.c.l.b16 %v2356
    %v2367 = vunpack.c.l.b16 %v2357
    %v2368 = vunpack.c.l.b16 %v2358
    %v2369 = vunpack.c.l.b16 %v2359
    %v2370 = vpack.c.b16 %v2367, %v2366
    %v2371 = vpack.c.b16 %v2369, %v2368
    %vm2372 = vcmask 261120
    %v2374 = vsel %vm2372, %v2370, 0
    %v2377 = vsel %vm2372, %v2371, 0
    %2379 = vmatprep.subr.bf16.mxu0 0
    %2380 = vmatpush1.bf16.msra.mxu0 %v2360
    %2381 = vmatprep.subr.bf16.mxu0 0
    %2382 = vmatpush1.bf16.msra.mxu0 %v2361
    %2383 = vmatprep.subr.bf16.mxu0 0
    %2384 = vmatpush1.bf16.msra.mxu0 0
    %2385 = vmatprep.subr.bf16.mxu0 0
    %2386 = vmatpush1.bf16.msra.mxu0 0
    %2387 = vmatprep.subr.bf16.mxu0 0
    %2388 = vmatpush1.bf16.msra.mxu0 0
    %2389 = vmatprep.subr.bf16.mxu0 0
    %2390 = vmatpush1.bf16.msra.mxu0 0
    %2391 = vmatprep.subr.bf16.mxu0 0
    %2392 = vmatpush1.bf16.msra.mxu0 0
    %2393 = vmatprep.subr.bf16.mxu0 0
    %2394 = vmatpush1.bf16.msra.mxu0 0
    %2395 = vmatprep.subr.bf16.mxu0 0
    %2396 = vmatpush1.bf16.msra.mxu0 0
    %2397 = vmatprep.subr.bf16.mxu0 0
    %2398 = vmatpush1.bf16.msra.mxu0 0
    %2399 = vmatprep.subr.bf16.mxu0 0
    %2400 = vmatpush1.bf16.msra.mxu0 0
    %2401 = vmatprep.subr.bf16.mxu0 0
    %2402 = vmatpush1.bf16.msra.mxu0 0
    %2403 = vmatprep.subr.bf16.mxu0 0
    %2404 = vmatpush1.bf16.msra.mxu0 0
    %2405 = vmatprep.subr.bf16.mxu0 0
    %2406 = vmatpush1.bf16.msra.mxu0 0
    %2407 = vmatprep.subr.bf16.mxu0 0
    %2408 = vmatpush1.bf16.msra.mxu0 0
    %2409 = vmatprep.subr.bf16.mxu0 0
    %2410 = vmatpush1.bf16.msra.mxu0 0
    %2411 = vmatprep.mubr.bf16.mxu0 0
    %2412 = vmatmul.mubr.bf16.gmra.mrb[0].mxu0 %v2374
    %v2413 = vpop.f32.mrb[0].mxu0
    %v2414 = vadd.f32 0.0, %v2413
    %v2415 = vpop.f32.mrb[0].mxu0
    %v2416 = vpop.f32.mrb[0].mxu0
    %v2417 = vadd.f32 0.0, %v2416
    %v2418 = vpop.f32.mrb[0].mxu0
    %2419 = vmatprep.mubr.bf16.mxu0 0
    %2420 = vmatmul.mubr.bf16.gmra.mrb[0].mxu0 %v2377
    %v2421 = vpop.f32.mrb[0].mxu0
    %v2422 = vadd.f32 0.0, %v2421
    %v2423 = vpop.f32.mrb[0].mxu0
    %v2424 = vpop.f32.mrb[0].mxu0
    %v2425 = vadd.f32 0.0, %v2424
    %v2426 = vpop.f32.mrb[0].mxu0
    %2427 = vdwg.mxu0
    %v2432 = vunpack.c.l.b16 %v2348
    %v2433 = vunpack.c.l.b16 %v2349
    %v2434 = vunpack.c.l.b16 %v2350
    %v2435 = vunpack.c.l.b16 %v2351
    %v2436 = vpack.c.b16 %v2433, %v2432
    %v2437 = vpack.c.b16 %v2435, %v2434
    %v2442 = vunpack.c.l.b16 %v2352
    %v2443 = vunpack.c.l.b16 %v2353
    %v2444 = vunpack.c.l.b16 %v2354
    %v2445 = vunpack.c.l.b16 %v2355
    %v2446 = vpack.c.b16 %v2443, %v2442
    %v2447 = vpack.c.b16 %v2445, %v2444
    %v2451 = vsel %vm2372, %v2436, 0
    %v2454 = vsel %vm2372, %v2437, 0
    %2456 = vmatprep.subr.bf16.mxu0 0
    %2457 = vmatpush1.bf16.msra.mxu0 %v2446
    %2458 = vmatprep.subr.bf16.mxu0 0
    %2459 = vmatpush1.bf16.msra.mxu0 %v2447
    %2460 = vmatprep.subr.bf16.mxu0 0
    %2461 = vmatpush1.bf16.msra.mxu0 0
    %2462 = vmatprep.subr.bf16.mxu0 0
    %2463 = vmatpush1.bf16.msra.mxu0 0
    %2464 = vmatprep.subr.bf16.mxu0 0
    %2465 = vmatpush1.bf16.msra.mxu0 0
    %2466 = vmatprep.subr.bf16.mxu0 0
    %2467 = vmatpush1.bf16.msra.mxu0 0
    %2468 = vmatprep.subr.bf16.mxu0 0
    %2469 = vmatpush1.bf16.msra.mxu0 0
    %2470 = vmatprep.subr.bf16.mxu0 0
    %2471 = vmatpush1.bf16.msra.mxu0 0
    %2472 = vmatprep.subr.bf16.mxu0 0
    %2473 = vmatpush1.bf16.msra.mxu0 0
    %2474 = vmatprep.subr.bf16.mxu0 0
    %2475 = vmatpush1.bf16.msra.mxu0 0
    %2476 = vmatprep.subr.bf16.mxu0 0
    %2477 = vmatpush1.bf16.msra.mxu0 0
    %2478 = vmatprep.subr.bf16.mxu0 0
    %2479 = vmatpush1.bf16.msra.mxu0 0
    %2480 = vmatprep.subr.bf16.mxu0 0
    %2481 = vmatpush1.bf16.msra.mxu0 0
    %2482 = vmatprep.subr.bf16.mxu0 0
    %2483 = vmatpush1.bf16.msra.mxu0 0
    %2484 = vmatprep.subr.bf16.mxu0 0
    %2485 = vmatpush1.bf16.msra.mxu0 0
    %2486 = vmatprep.subr.bf16.mxu0 0
    %2487 = vmatpush1.bf16.msra.mxu0 0
    %2488 = vmatprep.mubr.bf16.mxu0 0
    %2489 = vmatmul.mubr.bf16.gmra.mrb[0].mxu0 %v2451
    %v2490 = vpop.f32.mrb[0].mxu0
    %v2491 = vadd.f32 %v2414, %v2490
    %v2492 = vpop.f32.mrb[0].mxu0
    %v2493 = vpop.f32.mrb[0].mxu0
    %v2494 = vadd.f32 %v2417, %v2493
    %v2495 = vpop.f32.mrb[0].mxu0
    %2496 = vmatprep.mubr.bf16.mxu0 0
    %2497 = vmatmul.mubr.bf16.gmra.mrb[0].mxu0 %v2454
    %v2498 = vpop.f32.mrb[0].mxu0
    %v2499 = vadd.f32 %v2422, %v2498
    %v2500 = vpop.f32.mrb[0].mxu0
    %v2501 = vpop.f32.mrb[0].mxu0
    %v2502 = vadd.f32 %v2425, %v2501
    %v2503 = vpop.f32.mrb[0].mxu0
    %2504 = vdwg.mxu0
    %v2505 = vld [vmem:[%s6] sm:$0xf]
    %v2506 = vld [vmem:[%s6 + $0x4] sm:$0xf]
    %v2507 = vld [vmem:[%s6 + $0x8] sm:$0xf]
    %v2508 = vld [vmem:[%s6 + $0xc] sm:$0xf]
    %v2509 = vld [vmem:[%s6 + $0x10] sm:$0xf]
    %v2510 = vld [vmem:[%s6 + $0x14] sm:$0xf]
    %v2511 = vld [vmem:[%s6 + $0x18] sm:$0xf]
    %v2512 = vld [vmem:[%s6 + $0x1c] sm:$0xf]
    %v2513 = vpack.c.bf16 %v2494, %v2491
    %v2514 = vpack.c.bf16 %v2502, %v2499
    %v2515 = vld [vmem:[%s7] sm:$0xff]
    %v2516 = vld [vmem:[%s7 + $0x8] sm:$0xff]
    %v2517 = vld [vmem:[%s7 + $0x10] sm:$0xff]
    %v2518 = vld [vmem:[%s7 + $0x18] sm:$0xff]
    %v2519 = vld [vmem:[%s7 + $0x20] sm:$0xff]
    %v2520 = vld [vmem:[%s7 + $0x28] sm:$0xff]
    %v2521 = vld [vmem:[%s7 + $0x30] sm:$0xff]
    %v2522 = vld [vmem:[%s7 + $0x38] sm:$0xff]
    %2524 = vset.pattern.permute.xlu0 0
    %2525 = vperm.xlu0 %2524, %v2515
    %v2526 = vpop.permute.xlu0 %2525
    %2529 = vset.pattern.permute.xlu0 0
    %2530 = vperm.xlu0 %2529, %v2516
    %v2531 = vpop.permute.xlu0 %2530
    %2534 = vset.pattern.permute.xlu0 0
    %2535 = vperm.xlu0 %2534, %v2517
    %v2536 = vpop.permute.xlu0 %2535
    %2539 = vset.pattern.permute.xlu0 0
    %2540 = vperm.xlu0 %2539, %v2518
    %v2541 = vpop.permute.xlu0 %2540
    %2544 = vset.pattern.permute.xlu0 0
    %2545 = vperm.xlu0 %2544, %v2519
    %v2546 = vpop.permute.xlu0 %2545
    %2549 = vset.pattern.permute.xlu0 0
    %2550 = vperm.xlu0 %2549, %v2520
    %v2551 = vpop.permute.xlu0 %2550
    %2554 = vset.pattern.permute.xlu0 0
    %2555 = vperm.xlu0 %2554, %v2521
    %v2556 = vpop.permute.xlu0 %2555
    %2559 = vset.pattern.permute.xlu0 0
    %2560 = vperm.xlu0 %2559, %v2522
    %v2561 = vpop.permute.xlu0 %2560
    %v2571 = vunpack.c.l.b16 %v2505
    %v2572 = vunpack.c.l.b16 %v2506
    %v2573 = vunpack.c.l.b16 %v2507
    %v2574 = vunpack.c.l.b16 %v2508
    %v2575 = vunpack.c.l.b16 %v2509
    %v2576 = vunpack.c.l.b16 %v2510
    %v2577 = vunpack.c.l.b16 %v2511
    %v2578 = vunpack.c.l.b16 %v2512
    %v2579 = vpack.c.b16 %v2572, %v2571
    %v2580 = vpack.c.b16 %v2574, %v2573
    %v2581 = vpack.c.b16 %v2576, %v2575
    %v2582 = vpack.c.b16 %v2578, %v2577
    %v2584 = vsel %vm2372, %v2579, 0
    %v2587 = vsel %vm2372, %v2580, 0
    %v2590 = vsel %vm2372, %v2581, 0
    %v2593 = vsel %vm2372, %v2582, 0
    %2595 = vmatprep.subr.bf16.mxu0 0
    %2596 = vmatpush1.bf16.msra.mxu0 %v2513
    %2597 = vmatprep.subr.bf16.mxu0 0
    %2598 = vmatpush1.bf16.msra.mxu0 %v2514
    %2599 = vmatprep.subr.bf16.mxu0 0
    %2600 = vmatpush1.bf16.msra.mxu0 0
    %2601 = vmatprep.subr.bf16.mxu0 0
    %2602 = vmatpush1.bf16.msra.mxu0 0
    %2603 = vmatprep.subr.bf16.mxu0 0
    %2604 = vmatpush1.bf16.msra.mxu0 0
    %2605 = vmatprep.subr.bf16.mxu0 0
    %2606 = vmatpush1.bf16.msra.mxu0 0
    %2607 = vmatprep.subr.bf16.mxu0 0
    %2608 = vmatpush1.bf16.msra.mxu0 0
    %2609 = vmatprep.subr.bf16.mxu0 0
    %2610 = vmatpush1.bf16.msra.mxu0 0
    %2611 = vmatprep.subr.bf16.mxu0 0
    %2612 = vmatpush1.bf16.msra.mxu0 0
    %2613 = vmatprep.subr.bf16.mxu0 0
    %2614 = vmatpush1.bf16.msra.mxu0 0
    %2615 = vmatprep.subr.bf16.mxu0 0
    %2616 = vmatpush1.bf16.msra.mxu0 0
    %2617 = vmatprep.subr.bf16.mxu0 0
    %2618 = vmatpush1.bf16.msra.mxu0 0
    %2619 = vmatprep.subr.bf16.mxu0 0
    %2620 = vmatpush1.bf16.msra.mxu0 0
    %2621 = vmatprep.subr.bf16.mxu0 0
    %2622 = vmatpush1.bf16.msra.mxu0 0
    %2623 = vmatprep.subr.bf16.mxu0 0
    %2624 = vmatpush1.bf16.msra.mxu0 0
    %2625 = vmatprep.subr.bf16.mxu0 0
    %2626 = vmatpush1.bf16.msra.mxu0 0
    %2627 = vmatprep.mubr.bf16.mxu0 0
    %2628 = vmatmul.mubr.bf16.gmra.mrb[0].mxu0 %v2584
    %v2629 = vpop.f32.mrb[0].mxu0
    %v2630 = vadd.f32 %v2526, %v2629
    %v2631 = vpop.f32.mrb[0].mxu0
    %v2632 = vpop.f32.mrb[0].mxu0
    %v2633 = vadd.f32 %v2531, %v2632
    %v2634 = vpop.f32.mrb[0].mxu0
    %2635 = vmatprep.mubr.bf16.mxu0 0
    %2636 = vmatmul.mubr.bf16.gmra.mrb[0].mxu0 %v2587
    %v2637 = vpop.f32.mrb[0].mxu0
    %v2638 = vadd.f32 %v2536, %v2637
    %v2639 = vpop.f32.mrb[0].mxu0
    %v2640 = vpop.f32.mrb[0].mxu0
    %v2641 = vadd.f32 %v2541, %v2640
    %v2642 = vpop.f32.mrb[0].mxu0
    %2643 = vmatprep.mubr.bf16.mxu0 0
    %2644 = vmatmul.mubr.bf16.gmra.mrb[0].mxu0 %v2590
    %v2645 = vpop.f32.mrb[0].mxu0
    %v2646 = vadd.f32 %v2546, %v2645
    %v2647 = vpop.f32.mrb[0].mxu0
    %v2648 = vpop.f32.mrb[0].mxu0
    %v2649 = vadd.f32 %v2551, %v2648
    %v2650 = vpop.f32.mrb[0].mxu0
    %2651 = vmatprep.mubr.bf16.mxu0 0
    %2652 = vmatmul.mubr.bf16.gmra.mrb[0].mxu0 %v2593
    %v2653 = vpop.f32.mrb[0].mxu0
    %v2654 = vadd.f32 %v2556, %v2653
    %v2655 = vpop.f32.mrb[0].mxu0
    %v2656 = vpop.f32.mrb[0].mxu0
    %v2657 = vadd.f32 %v2561, %v2656
    %v2658 = vpop.f32.mrb[0].mxu0
    %2659 = vdwg.mxu0
    %v2660 = vmax.f32 %v2630, 0.0
    %v2661 = vmax.f32 %v2633, 0.0
    %v2662 = vmax.f32 %v2638, 0.0
    %v2663 = vmax.f32 %v2641, 0.0
    %v2664 = vxor.u32 %v2646, 2147483648
    %v2665 = vxor.u32 %v2649, 2147483648
    %v2666 = vxor.u32 %v2654, 2147483648
    %v2667 = vxor.u32 %v2657, 2147483648
    %v2668 = vmul.f32 %v2664, 1.442695
    %v2669 = vpow.pop %v2668
    %v2670 = vmul.f32 %v2665, 1.442695
    %v2671 = vpow.pop %v2670
    %v2672 = vmul.f32 %v2666, 1.442695
    %v2673 = vpow.pop %v2672
    %v2674 = vmul.f32 %v2667, 1.442695
    %v2675 = vpow.pop %v2674
    %v2676 = vadd.f32 %v2669, 1.0
    %v2677 = vadd.f32 %v2671, 1.0
    %v2678 = vadd.f32 %v2673, 1.0
    %v2679 = vadd.f32 %v2675, 1.0
    %v2680 = vrcp.pop %v2676
    %v2681 = vmul.f32 1.0, %v2680
    %v2682 = vrcp.pop %v2677
    %v2683 = vmul.f32 1.0, %v2682
    %v2684 = vrcp.pop %v2678
    %v2685 = vmul.f32 1.0, %v2684
    %v2686 = vrcp.pop %v2679
    %v2687 = vmul.f32 1.0, %v2686
    %v2688 = vmul.f32 %v2681, %v2660
    %v2689 = vmul.f32 %v2683, %v2661
    %v2690 = vmul.f32 %v2685, %v2662
    %v2691 = vmul.f32 %v2687, %v2663
    %v2692 = vsub.f32 1.0, %v2681
    %v2693 = vsub.f32 1.0, %v2683
    %v2694 = vsub.f32 1.0, %v2685
    %v2695 = vsub.f32 1.0, %v2687
    %v2696 = vmul.f32 %v2692, %v2491
    %v2697 = vmul.f32 %v2693, %v2494
    %v2698 = vmul.f32 %v2694, %v2499
    %v2699 = vmul.f32 %v2695, %v2502
    %v2700 = vadd.f32 %v2688, %v2696
    %v2701 = vadd.f32 %v2689, %v2697
    %v2702 = vadd.f32 %v2690, %v2698
    %v2703 = vadd.f32 %v2691, %v2699
    %v2704 = vld [vmem:[%s8] sm:$0xf]
    %v2705 = vld [vmem:[%s8 + $0x4] sm:$0xf]
    %v2706 = vld [vmem:[%s8 + $0x8] sm:$0xf]
    %v2707 = vld [vmem:[%s8 + $0xc] sm:$0xf]
    %v2708 = vld [vmem:[%s8 + $0x10] sm:$0xf]
    %v2709 = vld [vmem:[%s8 + $0x14] sm:$0xf]
    %v2710 = vld [vmem:[%s8 + $0x18] sm:$0xf]
    %v2711 = vld [vmem:[%s8 + $0x1c] sm:$0xf]
    %v2712 = vpack.c.bf16 %v2701, %v2700
    %v2713 = vpack.c.bf16 %v2703, %v2702
    %v2714 = vld [vmem:[%s9] sm:$0xff]
    %v2715 = vld [vmem:[%s9 + $0x8] sm:$0xff]
    %v2716 = vld [vmem:[%s9 + $0x10] sm:$0xff]
    %v2717 = vld [vmem:[%s9 + $0x18] sm:$0xff]
    %v2718 = vld [vmem:[%s9 + $0x20] sm:$0xff]
    %v2719 = vld [vmem:[%s9 + $0x28] sm:$0xff]
    %v2720 = vld [vmem:[%s9 + $0x30] sm:$0xff]
    %v2721 = vld [vmem:[%s9 + $0x38] sm:$0xff]
    %2723 = vset.pattern.permute.xlu0 0
    %2724 = vperm.xlu0 %2723, %v2714
    %v2725 = vpop.permute.xlu0 %2724
    %2728 = vset.pattern.permute.xlu0 0
    %2729 = vperm.xlu0 %2728, %v2715
    %v2730 = vpop.permute.xlu0 %2729
    %2733 = vset.pattern.permute.xlu0 0
    %2734 = vperm.xlu0 %2733, %v2716
    %v2735 = vpop.permute.xlu0 %2734
    %2738 = vset.pattern.permute.xlu0 0
    %2739 = vperm.xlu0 %2738, %v2717
    %v2740 = vpop.permute.xlu0 %2739
    %2743 = vset.pattern.permute.xlu0 0
    %2744 = vperm.xlu0 %2743, %v2718
    %v2745 = vpop.permute.xlu0 %2744
    %2748 = vset.pattern.permute.xlu0 0
    %2749 = vperm.xlu0 %2748, %v2719
    %v2750 = vpop.permute.xlu0 %2749
    %2753 = vset.pattern.permute.xlu0 0
    %2754 = vperm.xlu0 %2753, %v2720
    %v2755 = vpop.permute.xlu0 %2754
    %2758 = vset.pattern.permute.xlu0 0
    %2759 = vperm.xlu0 %2758, %v2721
    %v2760 = vpop.permute.xlu0 %2759
    %v2770 = vunpack.c.l.b16 %v2704
    %v2771 = vunpack.c.l.b16 %v2705
    %v2772 = vunpack.c.l.b16 %v2706
    %v2773 = vunpack.c.l.b16 %v2707
    %v2774 = vunpack.c.l.b16 %v2708
    %v2775 = vunpack.c.l.b16 %v2709
    %v2776 = vunpack.c.l.b16 %v2710
    %v2777 = vunpack.c.l.b16 %v2711
    %v2778 = vpack.c.b16 %v2771, %v2770
    %v2779 = vpack.c.b16 %v2773, %v2772
    %v2780 = vpack.c.b16 %v2775, %v2774
    %v2781 = vpack.c.b16 %v2777, %v2776
    %v2783 = vsel %vm2372, %v2778, 0
    %v2786 = vsel %vm2372, %v2779, 0
    %v2789 = vsel %vm2372, %v2780, 0
    %v2792 = vsel %vm2372, %v2781, 0
    %2794 = vmatprep.subr.bf16.mxu0 0
    %2795 = vmatpush1.bf16.msra.mxu0 %v2712
    %2796 = vmatprep.subr.bf16.mxu0 0
    %2797 = vmatpush1.bf16.msra.mxu0 %v2713
    %2798 = vmatprep.subr.bf16.mxu0 0
    %2799 = vmatpush1.bf16.msra.mxu0 0
    %2800 = vmatprep.subr.bf16.mxu0 0
    %2801 = vmatpush1.bf16.msra.mxu0 0
    %2802 = vmatprep.subr.bf16.mxu0 0
    %2803 = vmatpush1.bf16.msra.mxu0 0
    %2804 = vmatprep.subr.bf16.mxu0 0
    %2805 = vmatpush1.bf16.msra.mxu0 0
    %2806 = vmatprep.subr.bf16.mxu0 0
    %2807 = vmatpush1.bf16.msra.mxu0 0
    %2808 = vmatprep.subr.bf16.mxu0 0
    %2809 = vmatpush1.bf16.msra.mxu0 0
    %2810 = vmatprep.subr.bf16.mxu0 0
    %2811 = vmatpush1.bf16.msra.mxu0 0
    %2812 = vmatprep.subr.bf16.mxu0 0
    %2813 = vmatpush1.bf16.msra.mxu0 0
    %2814 = vmatprep.subr.bf16.mxu0 0
    %2815 = vmatpush1.bf16.msra.mxu0 0
    %2816 = vmatprep.subr.bf16.mxu0 0
    %2817 = vmatpush1.bf16.msra.mxu0 0
    %2818 = vmatprep.subr.bf16.mxu0 0
    %2819 = vmatpush1.bf16.msra.mxu0 0
    %2820 = vmatprep.subr.bf16.mxu0 0
    %2821 = vmatpush1.bf16.msra.mxu0 0
    %2822 = vmatprep.subr.bf16.mxu0 0
    %2823 = vmatpush1.bf16.msra.mxu0 0
    %2824 = vmatprep.subr.bf16.mxu0 0
    %2825 = vmatpush1.bf16.msra.mxu0 0
    %2826 = vmatprep.mubr.bf16.mxu0 0
    %2827 = vmatmul.mubr.bf16.gmra.mrb[0].mxu0 %v2783
    %v2828 = vpop.f32.mrb[0].mxu0
    %v2829 = vadd.f32 %v2725, %v2828
    %v2830 = vpop.f32.mrb[0].mxu0
    %v2831 = vpop.f32.mrb[0].mxu0
    %v2832 = vadd.f32 %v2730, %v2831
    %v2833 = vpop.f32.mrb[0].mxu0
    %2834 = vmatprep.mubr.bf16.mxu0 0
    %2835 = vmatmul.mubr.bf16.gmra.mrb[0].mxu0 %v2786
    %v2836 = vpop.f32.mrb[0].mxu0
    %v2837 = vadd.f32 %v2735, %v2836
    %v2838 = vpop.f32.mrb[0].mxu0
    %v2839 = vpop.f32.mrb[0].mxu0
    %v2840 = vadd.f32 %v2740, %v2839
    %v2841 = vpop.f32.mrb[0].mxu0
    %2842 = vmatprep.mubr.bf16.mxu0 0
    %2843 = vmatmul.mubr.bf16.gmra.mrb[0].mxu0 %v2789
    %v2844 = vpop.f32.mrb[0].mxu0
    %v2845 = vadd.f32 %v2745, %v2844
    %v2846 = vpop.f32.mrb[0].mxu0
    %v2847 = vpop.f32.mrb[0].mxu0
    %v2848 = vadd.f32 %v2750, %v2847
    %v2849 = vpop.f32.mrb[0].mxu0
    %2850 = vmatprep.mubr.bf16.mxu0 0
    %2851 = vmatmul.mubr.bf16.gmra.mrb[0].mxu0 %v2792
    %v2852 = vpop.f32.mrb[0].mxu0
    %v2853 = vadd.f32 %v2755, %v2852
    %v2854 = vpop.f32.mrb[0].mxu0
    %v2855 = vpop.f32.mrb[0].mxu0
    %v2856 = vadd.f32 %v2760, %v2855
    %v2857 = vpop.f32.mrb[0].mxu0
    %2858 = vdwg.mxu0
    %v2859 = vmax.f32 %v2829, 0.0
    %v2860 = vmax.f32 %v2832, 0.0
    %v2861 = vmax.f32 %v2837, 0.0
    %v2862 = vmax.f32 %v2840, 0.0
    %v2863 = vxor.u32 %v2845, 2147483648
    %v2864 = vxor.u32 %v2848, 2147483648
    %v2865 = vxor.u32 %v2853, 2147483648
    %v2866 = vxor.u32 %v2856, 2147483648
    %v2867 = vmul.f32 %v2863, 1.442695
    %v2868 = vpow.pop %v2867
    %v2869 = vmul.f32 %v2864, 1.442695
    %v2870 = vpow.pop %v2869
    %v2871 = vmul.f32 %v2865, 1.442695
    %v2872 = vpow.pop %v2871
    %v2873 = vmul.f32 %v2866, 1.442695
    %v2874 = vpow.pop %v2873
    %v2875 = vadd.f32 %v2868, 1.0
    %v2876 = vadd.f32 %v2870, 1.0
    %v2877 = vadd.f32 %v2872, 1.0
    %v2878 = vadd.f32 %v2874, 1.0
    %v2879 = vrcp.pop %v2875
    %v2880 = vmul.f32 1.0, %v2879
    %v2881 = vrcp.pop %v2876
    %v2882 = vmul.f32 1.0, %v2881
    %v2883 = vrcp.pop %v2877
    %v2884 = vmul.f32 1.0, %v2883
    %v2885 = vrcp.pop %v2878
    %v2886 = vmul.f32 1.0, %v2885
    %v2887 = vmul.f32 %v2880, %v2859
    %v2888 = vmul.f32 %v2882, %v2860
    %v2889 = vmul.f32 %v2884, %v2861
    %v2890 = vmul.f32 %v2886, %v2862
    %v2891 = vsub.f32 1.0, %v2880
    %v2892 = vsub.f32 1.0, %v2882
    %v2893 = vsub.f32 1.0, %v2884
    %v2894 = vsub.f32 1.0, %v2886
    %v2895 = vmul.f32 %v2891, %v2700
    %v2896 = vmul.f32 %v2892, %v2701
    %v2897 = vmul.f32 %v2893, %v2702
    %v2898 = vmul.f32 %v2894, %v2703
    %v2899 = vadd.f32 %v2887, %v2895
    %v2900 = vadd.f32 %v2888, %v2896
    %v2901 = vadd.f32 %v2889, %v2897
    %v2902 = vadd.f32 %v2890, %v2898
    %2903 = vst [vmem:[#allocation2] sm:$0xff] %v2899
    %2904 = vst [vmem:[#allocation2 + $0x8] sm:$0xff] %v2900
    %2905 = vst [vmem:[#allocation2 + $0x10] sm:$0xff] %v2901
    %2906 = vst [vmem:[#allocation2 + $0x18] sm:$0xff] %v2902
    // Predicated region
    $region42: #{tpu_custom_call.1} parent=1 // pred_check
      _
    $region43: #{tpu_custom_call.1} parent=1 // pred_check_branch
      %2908 = sbr.rel (0) target = $region45
    $region44: #{tpu_custom_call.1} parent=1 // pred_region
      %s2910 = ssub.s32 512, 512
      %2911 = vsyncadd [#allocation3], %s2910
      %s2912 = sshll.u32 [#allocation2], 4
      %s2913 = int_to_ptr.vmem [resolvable:$true] %s2912
      %2918 = dma.vmem_to_hbm [thread:$0]  %s2913, 512, %s10, [#allocation3], 128, 128, 8
    $region45: #{tpu_custom_call.1} parent=1 // pred_fallthru
      _
    // Predicated region
    $region46: #{tpu_custom_call.1} parent=1 // pred_check
      _
    $region47: #{tpu_custom_call.1} parent=1 // pred_check_branch
      %2920 = sbr.rel (0) target = $region49
    $region48: #{tpu_custom_call.1} parent=1 // pred_region
      %2921 = dma.done [#allocation3], 512
    $region49: #{tpu_custom_call.1} parent=1 // pred_fallthru
      _
    %2922 = vsyncpa [#allocation3], 1

</llo_original>
